<compile_context>
chip_gen: v6e
topology: v6e:2x2x1
jax: 0.10.0
libtpu: 0.0.40
codegen_flags: <defaults>
</compile_context>

<pallas_src>
import functools

import jax
import jax.numpy as jnp
from jax import lax
from jax.experimental import pallas as pl
from jax.experimental.pallas import tpu as pltpu

MID = 128          # fixed bottleneck width from the PyTorch module
BN_EPS = 1e-5


def _round_up(x, m):
    return ((x + m - 1) // m) * m


# ----------------------------- fused Pallas kernel ------------------------- #

def _fused_bottleneck_kernel(x_ref, w1_ref, w2_ref, b2_ref, w3_ref, b3_ref,
                             o_ref, h1_ref, *, qw, cin, m_chunk):
    """B images per grid step; every intermediate stays in VMEM.

    x_ref  : (1, B*qpad, 4*(cin+1)) f32  phase-collapsed, zero-padded input; last channel of
                                         each phase group is a 'mask' carrying the BN1 shift
    w1_ref : (cin+1, MID)           f32  conv1 weights with BN1 scale folded; last row = shift
    w2_ref : (9, MID, MID)          bf16 conv2 taps (ky*3+kx, cin, cout), BN2 scale folded
    b2_ref : (1, MID)               f32  BN2 shift
    w3_ref : (MID, COUTP)           bf16 conv3 weights, BN3 scale folded, zero-padded to 128 lanes
    b3_ref : (1, COUTP)             f32  BN3 shift (zero in padded channels)
    o_ref  : (1, B*qpad, COUTP)     f32  output rows: image b at rows [b*qpad, b*qpad+OH*qw)
    h1_ref : (4, B*qpad+tail, MID)  bf16 VMEM scratch holding the 4 h1 parity phases
    """
    cin_aug = cin + 1
    nmid = w2_ref.shape[1]
    m_total = o_ref.shape[1]
    tail = h1_ref.shape[1] - m_total
    n_chunks = m_total // m_chunk

    w1 = w1_ref[...]                    # (cin_aug, MID) f32 — hoisted out of all loops
    b2 = b2_ref[...]                    # (1, MID)  f32
    b3 = b3_ref[...]                    # (1, COUTP) f32

    # -- stage 1: 1x1 conv (+BN1 folded) + ReLU per phase; VPU broadcast-FMA (K tiny).
    #    Chunked over M so the f32 accumulator never exceeds the vreg budget.
    for ci in range(n_chunks):
        base = ci * m_chunk
        xc = x_ref[0, pl.ds(base, m_chunk), :]            # (m_chunk, 4*cin_aug) f32
        for p in range(4):
            col = p * cin_aug
            # init from the mask channel (carries the BN1 shift; 0 in the padding ring)
            z = xc[:, col + cin:col + cin + 1] * w1[cin:cin + 1, :]
            for c in range(cin):
                z = z + xc[:, col + c:col + c + 1] * w1[c:c + 1, :]
            h1_ref[p, pl.ds(base, m_chunk), :] = jnp.maximum(z, 0.0).astype(jnp.bfloat16)

    # Zero the small tail so junk tap reads past the last image stay finite/defined.
    for p in range(4):
        h1_ref[p, pl.ds(m_total, tail), :] = jnp.zeros((tail, nmid), jnp.bfloat16)

    # -- stage 2: 3x3 stride-2 conv (+BN2 folded) + ReLU as 9 accumulated MXU matmuls,
    #    fused with stage 3: 1x1 conv (+BN3 folded) + ReLU.  Chunked over M.
    #    Tap (ky,kx) reads phase (ky%2,kx%2) shifted by (ky//2,kx//2) quads — a contiguous
    #    row slice of the per-image slab (per-image stride qpad keeps rows independent).
    for ci in range(n_chunks):
        base = ci * m_chunk
        acc = jnp.zeros((m_chunk, nmid), jnp.float32)
        for ky in range(3):
            for kx in range(3):
                p = 2 * (ky % 2) + (kx % 2)
                s = (ky // 2) * qw + (kx // 2)
                a_tap = h1_ref[p, pl.ds(base + s, m_chunk), :]     # (m_chunk, MID) bf16
                acc = acc + jnp.dot(a_tap, w2_ref[3 * ky + kx],
                                    preferred_element_type=jnp.float32)
        h2 = jnp.maximum(acc + b2, 0.0).astype(jnp.bfloat16)
        y = jnp.dot(h2, w3_ref[...], preferred_element_type=jnp.float32)
        o_ref[0, pl.ds(base, m_chunk), :] = jnp.maximum(y + b3, 0.0).astype(o_ref.dtype)


# ------------------------------- wrapper / glue ----------------------------- #

def fold_params(params, eps=BN_EPS):
    """One-time host-side fold of the eval-mode BN affine into the conv weights."""
    def fold(i):
        inv = params[f"bn{i}_gamma"] / jnp.sqrt(params[f"bn{i}_var"] + eps)
        shift = (params[f"b{i}"] - params[f"bn{i}_mean"]) * inv + params[f"bn{i}_beta"]
        return inv, shift

    s1, t1 = fold(1)
    s2, t2 = fold(2)
    s3, t3 = fold(3)
    cout = params["w3"].shape[1]
    coutp = max(128, _round_up(cout, 128))               # lane-dense output channels
    w1aug = jnp.concatenate([params["w1"] * s1[None, :], t1[None, :]], axis=0)
    w2s = (params["w2"] * s2[None, None, None, :]).reshape(9, MID, MID)
    w3s = jnp.zeros((MID, coutp), jnp.float32).at[:, :cout].set(params["w3"] * s3[None, :])
    b3p = jnp.zeros((1, coutp), jnp.float32).at[0, :cout].set(t3)
    return {
        "w1aug": w1aug.astype(jnp.float32),               # (Cin+1, MID)
        "w2s": w2s.astype(jnp.bfloat16),                  # (9, MID, MID)
        "b2": t2.reshape(1, MID).astype(jnp.float32),
        "w3s": w3s.astype(jnp.bfloat16),                  # (MID, COUTP), zero-padded
        "b3": b3p,                                        # (1, COUTP), zero-padded
    }


def _choose_batch(n, max_b=8):
    """Largest divisor of n (<= max_b) that still leaves >= 2 grid steps (v7x megacore)."""
    divs = [b for b in range(1, min(n, max_b) + 1) if n % b == 0]
    two_step = [b for b in divs if n // b >= 2]
    return max(two_step) if two_step else max(divs)


def downsample_bottleneck_forward(x_nchw, fparams, channel_out, stride=2):
    """Fused Pallas implementation of DownSampleBottleneck.forward (NCHW in / NCHW out)."""
    assert stride == 2, "fused kernel specializes the stride-2 downsample path"
    N, cin, H, W = x_nchw.shape
    OH = (H - 1) // 2 + 1
    OW = (W - 1) // 2 + 1
    qh, qw = OH + 1, OW + 1               # quad-grid dims of the zero-padded (pad=1) image
    Q = qh * qw
    qpad = _round_up(Q, 16)               # per-image row stride (bf16-sublane friendly)
    cin_aug = cin + 1
    coutp = fparams["w3s"].shape[1]
    assert channel_out <= coutp

    # Images per grid step and images per M-chunk (bounds vreg pressure inside the kernel).
    B = _choose_batch(N, max_b=8)         # B=8 step: ~2.5 MiB VMEM, far under scoped limits
    steps = N // B
    m_total = B * qpad
    ib = 2 if (B % 2 == 0 and qpad < 192) else 1
    m_chunk = ib * qpad
    tail = _round_up(qw + 1, 16)          # covers the largest tap shift past the last image

    # ---- XLA glue on the tiny Cin-wide input only (no large intermediate hits HBM) ----
    x = jnp.transpose(x_nchw, (0, 2, 3, 1)).astype(jnp.float32)            # NHWC
    xm = jnp.concatenate([x, jnp.ones((N, H, W, 1), jnp.float32)], axis=-1)  # +mask channel
    pad_b, pad_r = 2 * qh - H - 1, 2 * qw - W - 1
    xm = jnp.pad(xm, ((0, 0), (1, pad_b), (1, pad_r), (0, 0)))             # (N, 2qh, 2qw, cin+1)
    # (2x2) parity-phase split, phases collapsed into the minor dim (lane-dense slab).
    xph = (xm.reshape(N, qh, 2, qw, 2, cin_aug)
             .transpose(0, 1, 3, 2, 4, 5)
             .reshape(N, Q, 4 * cin_aug))
    xph = jnp.pad(xph, ((0, 0), (0, qpad - Q), (0, 0)))
    xph = xph.reshape(steps, m_total, 4 * cin_aug)

    kernel = functools.partial(_fused_bottleneck_kernel, qw=qw, cin=cin, m_chunk=m_chunk)

    flops = 2 * N * (H * W * cin * MID + OH * OW * 9 * MID * MID + OH * OW * MID * coutp)
    bytes_accessed = (xph.size * 4 + fparams["w1aug"].size * 4 + fparams["w2s"].size * 2
                      + fparams["w3s"].size * 2 + steps * m_total * coutp * 4)

    out = pl.pallas_call(
        kernel,
        out_shape=jax.ShapeDtypeStruct((steps, m_total, coutp), jnp.float32),
        grid_spec=pltpu.PrefetchScalarGridSpec(
            num_scalar_prefetch=0,
            grid=(steps,),
            in_specs=[
                pl.BlockSpec((1, m_total, 4 * cin_aug), lambda i: (i, 0, 0)),  # input slab
                pl.BlockSpec((cin_aug, MID), lambda i: (0, 0)),                # w1 (+shift row)
                pl.BlockSpec((9, MID, MID), lambda i: (0, 0, 0)),              # w2 taps (resident)
                pl.BlockSpec((1, MID), lambda i: (0, 0)),                      # BN2 shift
                pl.BlockSpec((MID, coutp), lambda i: (0, 0)),                  # w3 (resident)
                pl.BlockSpec((1, coutp), lambda i: (0, 0)),                    # BN3 shift
            ],
            out_specs=pl.BlockSpec((1, m_total, coutp), lambda i: (i, 0, 0)),
            scratch_shapes=[pltpu.VMEM((4, m_total + tail, MID), jnp.bfloat16)],
        ),
        compiler_params=pltpu.CompilerParams(dimension_semantics=("parallel",)),
        cost_estimate=pl.CostEstimate(flops=flops, transcendentals=0,
                                      bytes_accessed=bytes_accessed),
    )(xph, fparams["w1aug"], fparams["w2s"], fparams["b2"],
      fparams["w3s"], fparams["b3"])

    # Drop junk rows (per-image stride padding + unused ox=qw-1 column) and padded channels.
    out = out.reshape(N, qpad, coutp)[:, :OH * qw, :channel_out]
    out = out.reshape(N, OH, qw, channel_out)[:, :, :OW, :]
    return jnp.transpose(out, (0, 3, 1, 2))                                # -> NCHW


# ------------------------- pure-JAX reference (check) ----------------------- #

def _ref_forward(x_nchw, params, stride=2):
    x = jnp.transpose(x_nchw, (0, 2, 3, 1)).astype(jnp.float32)

    def bn_relu(z, bias, g, b, m, v):
        z = z + bias
        z = (z - m) / jnp.sqrt(v + BN_EPS) * g + b
        return jnp.maximum(z, 0.0)

    h = jnp.einsum("nhwc,co->nhwo", x, params["w1"])
    h = bn_relu(h, params["b1"], params["bn1_gamma"], params["bn1_beta"],
                params["bn1_mean"], params["bn1_var"])
    h = lax.conv_general_dilated(h, params["w2"], window_strides=(stride, stride),
                                 padding=((1, 1), (1, 1)),
                                 dimension_numbers=("NHWC", "HWIO", "NHWC"))
    h = bn_relu(h, params["b2"], params["bn2_gamma"], params["bn2_beta"],
                params["bn2_mean"], params["bn2_var"])
    h = jnp.einsum("nhwc,co->nhwo", h, params["w3"])
    h = bn_relu(h, params["b3"], params["bn3_gamma"], params["bn3_beta"],
                params["bn3_mean"], params["bn3_var"])
    return jnp.transpose(h, (0, 3, 1, 2))


def init_params(key, channel_in, channel_out):
    ks = jax.random.split(key, 16)
    p = {}
    # conv1: PyTorch weight (128, Cin, 1, 1) -> (Cin, 128)
    p["w1"] = 0.1 * jax.random.normal(ks[0], (channel_in, MID), jnp.float32)
    p["b1"] = 0.1 * jax.random.normal(ks[1], (MID,), jnp.float32)
    # conv2: PyTorch weight (128, 128, 3, 3) (OIHW) -> HWIO (3, 3, 128, 128)
    p["w2"] = 0.05 * jax.random.normal(ks[2], (3, 3, MID, MID), jnp.float32)
    p["b2"] = 0.1 * jax.random.normal(ks[3], (MID,), jnp.float32)
    # conv3: PyTorch weight (Cout, 128, 1, 1) -> (128, Cout)
    p["w3"] = 0.1 * jax.random.normal(ks[4], (MID, channel_out), jnp.float32)
    p["b3"] = 0.1 * jax.random.normal(ks[5], (channel_out,), jnp.float32)
    # BatchNorm params + running statistics (eval-mode)
    for idx, (i, c) in enumerate([(1, MID), (2, MID), (3, channel_out)]):
        base = 6 + 3 * idx
        p[f"bn{i}_gamma"] = 1.0 + 0.1 * jax.random.normal(ks[base], (c,), jnp.float32)
        p[f"bn{i}_beta"] = 0.05 * jax.random.normal(ks[base + 1], (c,), jnp.float32)
        p[f"bn{i}_mean"] = 0.1 * jax.random.normal(ks[base + 2], (c,), jnp.float32)
        p[f"bn{i}_var"] = jnp.full((c,), 0.9, jnp.float32)
    return p


if __name__ == "__main__":
    key = jax.random.PRNGKey(0)
    k_x, k_p = jax.random.split(key)

    N, C_in, H, W = 2, 4, 16, 16
    C_out, stride = 32, 2

    x = jax.random.normal(k_x, (N, C_in, H, W), jnp.float32)   # NCHW, like PyTorch
    params = init_params(k_p, C_in, C_out)
    fparams = fold_params(params)                              # one-time BN fold

    fwd = jax.jit(downsample_bottleneck_forward, static_argnames=("channel_out", "stride"))
    out = jax.block_until_ready(fwd(x, fparams, channel_out=C_out, stride=stride))

    assert out.shape == (N, C_out, H // stride, W // stride), out.shape

    ref = jax.block_until_ready(_ref_forward(x, params, stride=stride))
    err = float(jnp.max(jnp.abs(out - ref)))
    assert jnp.allclose(out, ref, rtol=5e-2, atol=5e-2), err

    print("KERNEL_OK")
</pallas_src>

<mosaic_0001>
module attributes {stable_mosaic.version = 11 : i64} {
  func.func @_fused_bottleneck_kernel(%arg0: i32, %arg1: memref<1x96x20xf32, #tpu.memory_space<vmem>>, %arg2: memref<5x128xf32, #tpu.memory_space<vmem>>, %arg3: memref<9x128x128xbf16, #tpu.memory_space<vmem>>, %arg4: memref<1x128xf32, #tpu.memory_space<vmem>>, %arg5: memref<128x128xbf16, #tpu.memory_space<vmem>>, %arg6: memref<1x128xf32, #tpu.memory_space<vmem>>, %arg7: memref<1x96x128xf32, #tpu.memory_space<vmem>>, %arg8: memref<4x112x128xbf16, #tpu.memory_space<vmem>>) attributes {dimension_semantics = [#tpu.dimension_semantics<parallel>], iteration_bounds = array<i64: 2>, scalar_prefetch = 0 : i64, scratch_operands = 1 : i64, tpu.core_type = #tpu.core_type<tc>, window_params = [{transform_indices = @transform_0, window_bounds = array<i64: 1, 96, 20>}, {pipeline_mode = #tpu.pipeline_mode<synchronous>, transform_indices = @transform_1, window_bounds = array<i64: 5, 128>}, {pipeline_mode = #tpu.pipeline_mode<synchronous>, transform_indices = @transform_2, window_bounds = array<i64: 9, 128, 128>}, {pipeline_mode = #tpu.pipeline_mode<synchronous>, transform_indices = @transform_3, window_bounds = array<i64: 1, 128>}, {pipeline_mode = #tpu.pipeline_mode<synchronous>, transform_indices = @transform_4, window_bounds = array<i64: 128, 128>}, {pipeline_mode = #tpu.pipeline_mode<synchronous>, transform_indices = @transform_5, window_bounds = array<i64: 1, 128>}, {transform_indices = @transform_6, window_bounds = array<i64: 1, 96, 128>}]} {
    %c0 = arith.constant 0 : index
    %c0_0 = arith.constant 0 : index
    %0 = vector.load %arg2[%c0, %c0_0] : memref<5x128xf32, #tpu.memory_space<vmem>>, vector<5x128xf32>
    %c0_1 = arith.constant 0 : index
    %c0_2 = arith.constant 0 : index
    %1 = vector.load %arg4[%c0_1, %c0_2] : memref<1x128xf32, #tpu.memory_space<vmem>>, vector<1x128xf32>
    %c0_3 = arith.constant 0 : index
    %c0_4 = arith.constant 0 : index
    %2 = vector.load %arg6[%c0_3, %c0_4] : memref<1x128xf32, #tpu.memory_space<vmem>>, vector<1x128xf32>
    %c0_5 = arith.constant 0 : index
    %c0_6 = arith.constant 0 : index
    %c0_7 = arith.constant 0 : index
    %3 = vector.load %arg1[%c0_5, %c0_6, %c0_7] : memref<1x96x20xf32, #tpu.memory_space<vmem>>, vector<1x96x20xf32>
    %4 = vector.shape_cast %3 : vector<1x96x20xf32> to vector<96x20xf32>
    %5 = vector.extract_strided_slice %4 {offsets = [0, 4], sizes = [96, 1], strides = [1, 1]} : vector<96x20xf32> to vector<96x1xf32>
    %6 = vector.extract_strided_slice %0 {offsets = [4, 0], sizes = [1, 128], strides = [1, 1]} : vector<5x128xf32> to vector<1x128xf32>
    %7 = vector.broadcast %5 : vector<96x1xf32> to vector<96x128xf32>
    %8 = vector.broadcast %6 : vector<1x128xf32> to vector<96x128xf32>
    %9 = arith.mulf %7, %8 : vector<96x128xf32>
    %10 = vector.extract_strided_slice %4 {offsets = [0, 0], sizes = [96, 1], strides = [1, 1]} : vector<96x20xf32> to vector<96x1xf32>
    %11 = vector.extract_strided_slice %0 {offsets = [0, 0], sizes = [1, 128], strides = [1, 1]} : vector<5x128xf32> to vector<1x128xf32>
    %12 = vector.broadcast %10 : vector<96x1xf32> to vector<96x128xf32>
    %13 = vector.broadcast %11 : vector<1x128xf32> to vector<96x128xf32>
    %14 = arith.mulf %12, %13 : vector<96x128xf32>
    %15 = arith.addf %9, %14 : vector<96x128xf32>
    %16 = vector.extract_strided_slice %4 {offsets = [0, 1], sizes = [96, 1], strides = [1, 1]} : vector<96x20xf32> to vector<96x1xf32>
    %17 = vector.extract_strided_slice %0 {offsets = [1, 0], sizes = [1, 128], strides = [1, 1]} : vector<5x128xf32> to vector<1x128xf32>
    %18 = vector.broadcast %16 : vector<96x1xf32> to vector<96x128xf32>
    %19 = vector.broadcast %17 : vector<1x128xf32> to vector<96x128xf32>
    %20 = arith.mulf %18, %19 : vector<96x128xf32>
    %21 = arith.addf %15, %20 : vector<96x128xf32>
    %22 = vector.extract_strided_slice %4 {offsets = [0, 2], sizes = [96, 1], strides = [1, 1]} : vector<96x20xf32> to vector<96x1xf32>
    %23 = vector.extract_strided_slice %0 {offsets = [2, 0], sizes = [1, 128], strides = [1, 1]} : vector<5x128xf32> to vector<1x128xf32>
    %24 = vector.broadcast %22 : vector<96x1xf32> to vector<96x128xf32>
    %25 = vector.broadcast %23 : vector<1x128xf32> to vector<96x128xf32>
    %26 = arith.mulf %24, %25 : vector<96x128xf32>
    %27 = arith.addf %21, %26 : vector<96x128xf32>
    %28 = vector.extract_strided_slice %4 {offsets = [0, 3], sizes = [96, 1], strides = [1, 1]} : vector<96x20xf32> to vector<96x1xf32>
    %29 = vector.extract_strided_slice %0 {offsets = [3, 0], sizes = [1, 128], strides = [1, 1]} : vector<5x128xf32> to vector<1x128xf32>
    %30 = vector.broadcast %28 : vector<96x1xf32> to vector<96x128xf32>
    %31 = vector.broadcast %29 : vector<1x128xf32> to vector<96x128xf32>
    %32 = arith.mulf %30, %31 : vector<96x128xf32>
    %33 = arith.addf %27, %32 : vector<96x128xf32>
    %cst = arith.constant 0.000000e+00 : f32
    %34 = vector.broadcast %cst : f32 to vector<96x128xf32>
    %35 = arith.maximumf %33, %34 : vector<96x128xf32>
    %36 = arith.truncf %35 : vector<96x128xf32> to vector<96x128xbf16>
    %c0_8 = arith.constant 0 : index
    %c0_9 = arith.constant 0 : index
    %c0_10 = arith.constant 0 : index
    %37 = vector.load %arg8[%c0_8, %c0_9, %c0_10] : memref<4x112x128xbf16, #tpu.memory_space<vmem>>, vector<1x96x128xbf16>
    %38 = vector.shape_cast %37 : vector<1x96x128xbf16> to vector<96x128xbf16>
    %39 = vector.shape_cast %36 : vector<96x128xbf16> to vector<1x96x128xbf16>
    tpu.vector_store %arg8[%c0_8, %c0_9, %c0_10], %39 {strides = array<i32>} : memref<4x112x128xbf16, #tpu.memory_space<vmem>>, vector<1x96x128xbf16>,
    %40 = vector.extract_strided_slice %4 {offsets = [0, 9], sizes = [96, 1], strides = [1, 1]} : vector<96x20xf32> to vector<96x1xf32>
    %41 = vector.extract_strided_slice %0 {offsets = [4, 0], sizes = [1, 128], strides = [1, 1]} : vector<5x128xf32> to vector<1x128xf32>
    %42 = vector.broadcast %40 : vector<96x1xf32> to vector<96x128xf32>
    %43 = vector.broadcast %41 : vector<1x128xf32> to vector<96x128xf32>
    %44 = arith.mulf %42, %43 : vector<96x128xf32>
    %45 = vector.extract_strided_slice %4 {offsets = [0, 5], sizes = [96, 1], strides = [1, 1]} : vector<96x20xf32> to vector<96x1xf32>
    %46 = vector.extract_strided_slice %0 {offsets = [0, 0], sizes = [1, 128], strides = [1, 1]} : vector<5x128xf32> to vector<1x128xf32>
    %47 = vector.broadcast %45 : vector<96x1xf32> to vector<96x128xf32>
    %48 = vector.broadcast %46 : vector<1x128xf32> to vector<96x128xf32>
    %49 = arith.mulf %47, %48 : vector<96x128xf32>
    %50 = arith.addf %44, %49 : vector<96x128xf32>
    %51 = vector.extract_strided_slice %4 {offsets = [0, 6], sizes = [96, 1], strides = [1, 1]} : vector<96x20xf32> to vector<96x1xf32>
    %52 = vector.extract_strided_slice %0 {offsets = [1, 0], sizes = [1, 128], strides = [1, 1]} : vector<5x128xf32> to vector<1x128xf32>
    %53 = vector.broadcast %51 : vector<96x1xf32> to vector<96x128xf32>
    %54 = vector.broadcast %52 : vector<1x128xf32> to vector<96x128xf32>
    %55 = arith.mulf %53, %54 : vector<96x128xf32>
    %56 = arith.addf %50, %55 : vector<96x128xf32>
    %57 = vector.extract_strided_slice %4 {offsets = [0, 7], sizes = [96, 1], strides = [1, 1]} : vector<96x20xf32> to vector<96x1xf32>
    %58 = vector.extract_strided_slice %0 {offsets = [2, 0], sizes = [1, 128], strides = [1, 1]} : vector<5x128xf32> to vector<1x128xf32>
    %59 = vector.broadcast %57 : vector<96x1xf32> to vector<96x128xf32>
    %60 = vector.broadcast %58 : vector<1x128xf32> to vector<96x128xf32>
    %61 = arith.mulf %59, %60 : vector<96x128xf32>
    %62 = arith.addf %56, %61 : vector<96x128xf32>
    %63 = vector.extract_strided_slice %4 {offsets = [0, 8], sizes = [96, 1], strides = [1, 1]} : vector<96x20xf32> to vector<96x1xf32>
    %64 = vector.extract_strided_slice %0 {offsets = [3, 0], sizes = [1, 128], strides = [1, 1]} : vector<5x128xf32> to vector<1x128xf32>
    %65 = vector.broadcast %63 : vector<96x1xf32> to vector<96x128xf32>
    %66 = vector.broadcast %64 : vector<1x128xf32> to vector<96x128xf32>
    %67 = arith.mulf %65, %66 : vector<96x128xf32>
    %68 = arith.addf %62, %67 : vector<96x128xf32>
    %cst_11 = arith.constant 0.000000e+00 : f32
    %69 = vector.broadcast %cst_11 : f32 to vector<96x128xf32>
    %70 = arith.maximumf %68, %69 : vector<96x128xf32>
    %71 = arith.truncf %70 : vector<96x128xf32> to vector<96x128xbf16>
    %c1 = arith.constant 1 : index
    %c0_12 = arith.constant 0 : index
    %c0_13 = arith.constant 0 : index
    %72 = vector.load %arg8[%c1, %c0_12, %c0_13] : memref<4x112x128xbf16, #tpu.memory_space<vmem>>, vector<1x96x128xbf16>
    %73 = vector.shape_cast %72 : vector<1x96x128xbf16> to vector<96x128xbf16>
    %74 = vector.shape_cast %71 : vector<96x128xbf16> to vector<1x96x128xbf16>
    tpu.vector_store %arg8[%c1, %c0_12, %c0_13], %74 {strides = array<i32>} : memref<4x112x128xbf16, #tpu.memory_space<vmem>>, vector<1x96x128xbf16>,
    %75 = vector.extract_strided_slice %4 {offsets = [0, 14], sizes = [96, 1], strides = [1, 1]} : vector<96x20xf32> to vector<96x1xf32>
    %76 = vector.extract_strided_slice %0 {offsets = [4, 0], sizes = [1, 128], strides = [1, 1]} : vector<5x128xf32> to vector<1x128xf32>
    %77 = vector.broadcast %75 : vector<96x1xf32> to vector<96x128xf32>
    %78 = vector.broadcast %76 : vector<1x128xf32> to vector<96x128xf32>
    %79 = arith.mulf %77, %78 : vector<96x128xf32>
    %80 = vector.extract_strided_slice %4 {offsets = [0, 10], sizes = [96, 1], strides = [1, 1]} : vector<96x20xf32> to vector<96x1xf32>
    %81 = vector.extract_strided_slice %0 {offsets = [0, 0], sizes = [1, 128], strides = [1, 1]} : vector<5x128xf32> to vector<1x128xf32>
    %82 = vector.broadcast %80 : vector<96x1xf32> to vector<96x128xf32>
    %83 = vector.broadcast %81 : vector<1x128xf32> to vector<96x128xf32>
    %84 = arith.mulf %82, %83 : vector<96x128xf32>
    %85 = arith.addf %79, %84 : vector<96x128xf32>
    %86 = vector.extract_strided_slice %4 {offsets = [0, 11], sizes = [96, 1], strides = [1, 1]} : vector<96x20xf32> to vector<96x1xf32>
    %87 = vector.extract_strided_slice %0 {offsets = [1, 0], sizes = [1, 128], strides = [1, 1]} : vector<5x128xf32> to vector<1x128xf32>
    %88 = vector.broadcast %86 : vector<96x1xf32> to vector<96x128xf32>
    %89 = vector.broadcast %87 : vector<1x128xf32> to vector<96x128xf32>
    %90 = arith.mulf %88, %89 : vector<96x128xf32>
    %91 = arith.addf %85, %90 : vector<96x128xf32>
    %92 = vector.extract_strided_slice %4 {offsets = [0, 12], sizes = [96, 1], strides = [1, 1]} : vector<96x20xf32> to vector<96x1xf32>
    %93 = vector.extract_strided_slice %0 {offsets = [2, 0], sizes = [1, 128], strides = [1, 1]} : vector<5x128xf32> to vector<1x128xf32>
    %94 = vector.broadcast %92 : vector<96x1xf32> to vector<96x128xf32>
    %95 = vector.broadcast %93 : vector<1x128xf32> to vector<96x128xf32>
    %96 = arith.mulf %94, %95 : vector<96x128xf32>
    %97 = arith.addf %91, %96 : vector<96x128xf32>
    %98 = vector.extract_strided_slice %4 {offsets = [0, 13], sizes = [96, 1], strides = [1, 1]} : vector<96x20xf32> to vector<96x1xf32>
    %99 = vector.extract_strided_slice %0 {offsets = [3, 0], sizes = [1, 128], strides = [1, 1]} : vector<5x128xf32> to vector<1x128xf32>
    %100 = vector.broadcast %98 : vector<96x1xf32> to vector<96x128xf32>
    %101 = vector.broadcast %99 : vector<1x128xf32> to vector<96x128xf32>
    %102 = arith.mulf %100, %101 : vector<96x128xf32>
    %103 = arith.addf %97, %102 : vector<96x128xf32>
    %cst_14 = arith.constant 0.000000e+00 : f32
    %104 = vector.broadcast %cst_14 : f32 to vector<96x128xf32>
    %105 = arith.maximumf %103, %104 : vector<96x128xf32>
    %106 = arith.truncf %105 : vector<96x128xf32> to vector<96x128xbf16>
    %c2 = arith.constant 2 : index
    %c0_15 = arith.constant 0 : index
    %c0_16 = arith.constant 0 : index
    %107 = vector.load %arg8[%c2, %c0_15, %c0_16] : memref<4x112x128xbf16, #tpu.memory_space<vmem>>, vector<1x96x128xbf16>
    %108 = vector.shape_cast %107 : vector<1x96x128xbf16> to vector<96x128xbf16>
    %109 = vector.shape_cast %106 : vector<96x128xbf16> to vector<1x96x128xbf16>
    tpu.vector_store %arg8[%c2, %c0_15, %c0_16], %109 {strides = array<i32>} : memref<4x112x128xbf16, #tpu.memory_space<vmem>>, vector<1x96x128xbf16>,
    %110 = vector.extract_strided_slice %4 {offsets = [0, 19], sizes = [96, 1], strides = [1, 1]} : vector<96x20xf32> to vector<96x1xf32>
    %111 = vector.extract_strided_slice %0 {offsets = [4, 0], sizes = [1, 128], strides = [1, 1]} : vector<5x128xf32> to vector<1x128xf32>
    %112 = vector.broadcast %110 : vector<96x1xf32> to vector<96x128xf32>
    %113 = vector.broadcast %111 : vector<1x128xf32> to vector<96x128xf32>
    %114 = arith.mulf %112, %113 : vector<96x128xf32>
    %115 = vector.extract_strided_slice %4 {offsets = [0, 15], sizes = [96, 1], strides = [1, 1]} : vector<96x20xf32> to vector<96x1xf32>
    %116 = vector.extract_strided_slice %0 {offsets = [0, 0], sizes = [1, 128], strides = [1, 1]} : vector<5x128xf32> to vector<1x128xf32>
    %117 = vector.broadcast %115 : vector<96x1xf32> to vector<96x128xf32>
    %118 = vector.broadcast %116 : vector<1x128xf32> to vector<96x128xf32>
    %119 = arith.mulf %117, %118 : vector<96x128xf32>
    %120 = arith.addf %114, %119 : vector<96x128xf32>
    %121 = vector.extract_strided_slice %4 {offsets = [0, 16], sizes = [96, 1], strides = [1, 1]} : vector<96x20xf32> to vector<96x1xf32>
    %122 = vector.extract_strided_slice %0 {offsets = [1, 0], sizes = [1, 128], strides = [1, 1]} : vector<5x128xf32> to vector<1x128xf32>
    %123 = vector.broadcast %121 : vector<96x1xf32> to vector<96x128xf32>
    %124 = vector.broadcast %122 : vector<1x128xf32> to vector<96x128xf32>
    %125 = arith.mulf %123, %124 : vector<96x128xf32>
    %126 = arith.addf %120, %125 : vector<96x128xf32>
    %127 = vector.extract_strided_slice %4 {offsets = [0, 17], sizes = [96, 1], strides = [1, 1]} : vector<96x20xf32> to vector<96x1xf32>
    %128 = vector.extract_strided_slice %0 {offsets = [2, 0], sizes = [1, 128], strides = [1, 1]} : vector<5x128xf32> to vector<1x128xf32>
    %129 = vector.broadcast %127 : vector<96x1xf32> to vector<96x128xf32>
    %130 = vector.broadcast %128 : vector<1x128xf32> to vector<96x128xf32>
    %131 = arith.mulf %129, %130 : vector<96x128xf32>
    %132 = arith.addf %126, %131 : vector<96x128xf32>
    %133 = vector.extract_strided_slice %4 {offsets = [0, 18], sizes = [96, 1], strides = [1, 1]} : vector<96x20xf32> to vector<96x1xf32>
    %134 = vector.extract_strided_slice %0 {offsets = [3, 0], sizes = [1, 128], strides = [1, 1]} : vector<5x128xf32> to vector<1x128xf32>
    %135 = vector.broadcast %133 : vector<96x1xf32> to vector<96x128xf32>
    %136 = vector.broadcast %134 : vector<1x128xf32> to vector<96x128xf32>
    %137 = arith.mulf %135, %136 : vector<96x128xf32>
    %138 = arith.addf %132, %137 : vector<96x128xf32>
    %cst_17 = arith.constant 0.000000e+00 : f32
    %139 = vector.broadcast %cst_17 : f32 to vector<96x128xf32>
    %140 = arith.maximumf %138, %139 : vector<96x128xf32>
    %141 = arith.truncf %140 : vector<96x128xf32> to vector<96x128xbf16>
    %c3 = arith.constant 3 : index
    %c0_18 = arith.constant 0 : index
    %c0_19 = arith.constant 0 : index
    %142 = vector.load %arg8[%c3, %c0_18, %c0_19] : memref<4x112x128xbf16, #tpu.memory_space<vmem>>, vector<1x96x128xbf16>
    %143 = vector.shape_cast %142 : vector<1x96x128xbf16> to vector<96x128xbf16>
    %144 = vector.shape_cast %141 : vector<96x128xbf16> to vector<1x96x128xbf16>
    tpu.vector_store %arg8[%c3, %c0_18, %c0_19], %144 {strides = array<i32>} : memref<4x112x128xbf16, #tpu.memory_space<vmem>>, vector<1x96x128xbf16>,
    %cst_20 = arith.constant 0.000000e+00 : bf16
    %145 = vector.broadcast %cst_20 : bf16 to vector<16x128xbf16>
    %c0_21 = arith.constant 0 : index
    %c96 = arith.constant 96 : index
    %c0_22 = arith.constant 0 : index
    %146 = vector.load %arg8[%c0_21, %c96, %c0_22] : memref<4x112x128xbf16, #tpu.memory_space<vmem>>, vector<1x16x128xbf16>
    %147 = vector.shape_cast %146 : vector<1x16x128xbf16> to vector<16x128xbf16>
    %148 = vector.shape_cast %145 : vector<16x128xbf16> to vector<1x16x128xbf16>
    tpu.vector_store %arg8[%c0_21, %c96, %c0_22], %148 {strides = array<i32>} : memref<4x112x128xbf16, #tpu.memory_space<vmem>>, vector<1x16x128xbf16>,
    %cst_23 = arith.constant 0.000000e+00 : bf16
    %149 = vector.broadcast %cst_23 : bf16 to vector<16x128xbf16>
    %c1_24 = arith.constant 1 : index
    %c96_25 = arith.constant 96 : index
    %c0_26 = arith.constant 0 : index
    %150 = vector.load %arg8[%c1_24, %c96_25, %c0_26] : memref<4x112x128xbf16, #tpu.memory_space<vmem>>, vector<1x16x128xbf16>
    %151 = vector.shape_cast %150 : vector<1x16x128xbf16> to vector<16x128xbf16>
    %152 = vector.shape_cast %149 : vector<16x128xbf16> to vector<1x16x128xbf16>
    tpu.vector_store %arg8[%c1_24, %c96_25, %c0_26], %152 {strides = array<i32>} : memref<4x112x128xbf16, #tpu.memory_space<vmem>>, vector<1x16x128xbf16>,
    %cst_27 = arith.constant 0.000000e+00 : bf16
    %153 = vector.broadcast %cst_27 : bf16 to vector<16x128xbf16>
    %c2_28 = arith.constant 2 : index
    %c96_29 = arith.constant 96 : index
    %c0_30 = arith.constant 0 : index
    %154 = vector.load %arg8[%c2_28, %c96_29, %c0_30] : memref<4x112x128xbf16, #tpu.memory_space<vmem>>, vector<1x16x128xbf16>
    %155 = vector.shape_cast %154 : vector<1x16x128xbf16> to vector<16x128xbf16>
    %156 = vector.shape_cast %153 : vector<16x128xbf16> to vector<1x16x128xbf16>
    tpu.vector_store %arg8[%c2_28, %c96_29, %c0_30], %156 {strides = array<i32>} : memref<4x112x128xbf16, #tpu.memory_space<vmem>>, vector<1x16x128xbf16>,
    %cst_31 = arith.constant 0.000000e+00 : bf16
    %157 = vector.broadcast %cst_31 : bf16 to vector<16x128xbf16>
    %c3_32 = arith.constant 3 : index
    %c96_33 = arith.constant 96 : index
    %c0_34 = arith.constant 0 : index
    %158 = vector.load %arg8[%c3_32, %c96_33, %c0_34] : memref<4x112x128xbf16, #tpu.memory_space<vmem>>, vector<1x16x128xbf16>
    %159 = vector.shape_cast %158 : vector<1x16x128xbf16> to vector<16x128xbf16>
    %160 = vector.shape_cast %157 : vector<16x128xbf16> to vector<1x16x128xbf16>
    tpu.vector_store %arg8[%c3_32, %c96_33, %c0_34], %160 {strides = array<i32>} : memref<4x112x128xbf16, #tpu.memory_space<vmem>>, vector<1x16x128xbf16>,
    %cst_35 = arith.constant 0.000000e+00 : f32
    %161 = vector.broadcast %cst_35 : f32 to vector<96x128xf32>
    %c0_36 = arith.constant 0 : index
    %c0_37 = arith.constant 0 : index
    %c0_38 = arith.constant 0 : index
    %162 = vector.load %arg8[%c0_36, %c0_37, %c0_38] : memref<4x112x128xbf16, #tpu.memory_space<vmem>>, vector<1x96x128xbf16>
    %163 = vector.shape_cast %162 : vector<1x96x128xbf16> to vector<96x128xbf16>
    %c0_39 = arith.constant 0 : index
    %c0_40 = arith.constant 0 : index
    %c0_41 = arith.constant 0 : index
    %164 = vector.load %arg3[%c0_39, %c0_40, %c0_41] : memref<9x128x128xbf16, #tpu.memory_space<vmem>>, vector<1x128x128xbf16>
    %165 = vector.shape_cast %164 : vector<1x128x128xbf16> to vector<128x128xbf16>
    %cst_42 = arith.constant dense<0.000000e+00> : vector<96x128xf32>
    %166 = tpu.matmul %163, %165, %cst_42 {dimension_numbers = #tpu.dot_dimension_numbers<[1], [0], [0], [1], [0, 0, 1, 1], [], []>} : vector<96x128xbf16>, vector<128x128xbf16>, vector<96x128xf32> -> vector<96x128xf32>
    %167 = arith.addf %161, %166 : vector<96x128xf32>
    %c1_43 = arith.constant 1 : index
    %c0_44 = arith.constant 0 : index
    %c0_45 = arith.constant 0 : index
    %168 = vector.load %arg8[%c1_43, %c0_44, %c0_45] : memref<4x112x128xbf16, #tpu.memory_space<vmem>>, vector<1x96x128xbf16>
    %169 = vector.shape_cast %168 : vector<1x96x128xbf16> to vector<96x128xbf16>
    %c1_46 = arith.constant 1 : index
    %c0_47 = arith.constant 0 : index
    %c0_48 = arith.constant 0 : index
    %170 = vector.load %arg3[%c1_46, %c0_47, %c0_48] : memref<9x128x128xbf16, #tpu.memory_space<vmem>>, vector<1x128x128xbf16>
    %171 = vector.shape_cast %170 : vector<1x128x128xbf16> to vector<128x128xbf16>
    %cst_49 = arith.constant dense<0.000000e+00> : vector<96x128xf32>
    %172 = tpu.matmul %169, %171, %cst_49 {dimension_numbers = #tpu.dot_dimension_numbers<[1], [0], [0], [1], [0, 0, 1, 1], [], []>} : vector<96x128xbf16>, vector<128x128xbf16>, vector<96x128xf32> -> vector<96x128xf32>
    %173 = arith.addf %167, %172 : vector<96x128xf32>
    %c0_50 = arith.constant 0 : index
    %c1_51 = arith.constant 1 : index
    %c0_52 = arith.constant 0 : index
    %174 = vector.load %arg8[%c0_50, %c1_51, %c0_52] : memref<4x112x128xbf16, #tpu.memory_space<vmem>>, vector<1x96x128xbf16>
    %175 = vector.shape_cast %174 : vector<1x96x128xbf16> to vector<96x128xbf16>
    %c2_53 = arith.constant 2 : index
    %c0_54 = arith.constant 0 : index
    %c0_55 = arith.constant 0 : index
    %176 = vector.load %arg3[%c2_53, %c0_54, %c0_55] : memref<9x128x128xbf16, #tpu.memory_space<vmem>>, vector<1x128x128xbf16>
    %177 = vector.shape_cast %176 : vector<1x128x128xbf16> to vector<128x128xbf16>
    %cst_56 = arith.constant dense<0.000000e+00> : vector<96x128xf32>
    %178 = tpu.matmul %175, %177, %cst_56 {dimension_numbers = #tpu.dot_dimension_numbers<[1], [0], [0], [1], [0, 0, 1, 1], [], []>} : vector<96x128xbf16>, vector<128x128xbf16>, vector<96x128xf32> -> vector<96x128xf32>
    %179 = arith.addf %173, %178 : vector<96x128xf32>
    %c2_57 = arith.constant 2 : index
    %c0_58 = arith.constant 0 : index
    %c0_59 = arith.constant 0 : index
    %180 = vector.load %arg8[%c2_57, %c0_58, %c0_59] : memref<4x112x128xbf16, #tpu.memory_space<vmem>>, vector<1x96x128xbf16>
    %181 = vector.shape_cast %180 : vector<1x96x128xbf16> to vector<96x128xbf16>
    %c3_60 = arith.constant 3 : index
    %c0_61 = arith.constant 0 : index
    %c0_62 = arith.constant 0 : index
    %182 = vector.load %arg3[%c3_60, %c0_61, %c0_62] : memref<9x128x128xbf16, #tpu.memory_space<vmem>>, vector<1x128x128xbf16>
    %183 = vector.shape_cast %182 : vector<1x128x128xbf16> to vector<128x128xbf16>
    %cst_63 = arith.constant dense<0.000000e+00> : vector<96x128xf32>
    %184 = tpu.matmul %181, %183, %cst_63 {dimension_numbers = #tpu.dot_dimension_numbers<[1], [0], [0], [1], [0, 0, 1, 1], [], []>} : vector<96x128xbf16>, vector<128x128xbf16>, vector<96x128xf32> -> vector<96x128xf32>
    %185 = arith.addf %179, %184 : vector<96x128xf32>
    %c3_64 = arith.constant 3 : index
    %c0_65 = arith.constant 0 : index
    %c0_66 = arith.constant 0 : index
    %186 = vector.load %arg8[%c3_64, %c0_65, %c0_66] : memref<4x112x128xbf16, #tpu.memory_space<vmem>>, vector<1x96x128xbf16>
    %187 = vector.shape_cast %186 : vector<1x96x128xbf16> to vector<96x128xbf16>
    %c4 = arith.constant 4 : index
    %c0_67 = arith.constant 0 : index
    %c0_68 = arith.constant 0 : index
    %188 = vector.load %arg3[%c4, %c0_67, %c0_68] : memref<9x128x128xbf16, #tpu.memory_space<vmem>>, vector<1x128x128xbf16>
    %189 = vector.shape_cast %188 : vector<1x128x128xbf16> to vector<128x128xbf16>
    %cst_69 = arith.constant dense<0.000000e+00> : vector<96x128xf32>
    %190 = tpu.matmul %187, %189, %cst_69 {dimension_numbers = #tpu.dot_dimension_numbers<[1], [0], [0], [1], [0, 0, 1, 1], [], []>} : vector<96x128xbf16>, vector<128x128xbf16>, vector<96x128xf32> -> vector<96x128xf32>
    %191 = arith.addf %185, %190 : vector<96x128xf32>
    %c2_70 = arith.constant 2 : index
    %c1_71 = arith.constant 1 : index
    %c0_72 = arith.constant 0 : index
    %192 = vector.load %arg8[%c2_70, %c1_71, %c0_72] : memref<4x112x128xbf16, #tpu.memory_space<vmem>>, vector<1x96x128xbf16>
    %193 = vector.shape_cast %192 : vector<1x96x128xbf16> to vector<96x128xbf16>
    %c5 = arith.constant 5 : index
    %c0_73 = arith.constant 0 : index
    %c0_74 = arith.constant 0 : index
    %194 = vector.load %arg3[%c5, %c0_73, %c0_74] : memref<9x128x128xbf16, #tpu.memory_space<vmem>>, vector<1x128x128xbf16>
    %195 = vector.shape_cast %194 : vector<1x128x128xbf16> to vector<128x128xbf16>
    %cst_75 = arith.constant dense<0.000000e+00> : vector<96x128xf32>
    %196 = tpu.matmul %193, %195, %cst_75 {dimension_numbers = #tpu.dot_dimension_numbers<[1], [0], [0], [1], [0, 0, 1, 1], [], []>} : vector<96x128xbf16>, vector<128x128xbf16>, vector<96x128xf32> -> vector<96x128xf32>
    %197 = arith.addf %191, %196 : vector<96x128xf32>
    %c0_76 = arith.constant 0 : index
    %c9 = arith.constant 9 : index
    %c0_77 = arith.constant 0 : index
    %198 = vector.load %arg8[%c0_76, %c9, %c0_77] : memref<4x112x128xbf16, #tpu.memory_space<vmem>>, vector<1x96x128xbf16>
    %199 = vector.shape_cast %198 : vector<1x96x128xbf16> to vector<96x128xbf16>
    %c6 = arith.constant 6 : index
    %c0_78 = arith.constant 0 : index
    %c0_79 = arith.constant 0 : index
    %200 = vector.load %arg3[%c6, %c0_78, %c0_79] : memref<9x128x128xbf16, #tpu.memory_space<vmem>>, vector<1x128x128xbf16>
    %201 = vector.shape_cast %200 : vector<1x128x128xbf16> to vector<128x128xbf16>
    %cst_80 = arith.constant dense<0.000000e+00> : vector<96x128xf32>
    %202 = tpu.matmul %199, %201, %cst_80 {dimension_numbers = #tpu.dot_dimension_numbers<[1], [0], [0], [1], [0, 0, 1, 1], [], []>} : vector<96x128xbf16>, vector<128x128xbf16>, vector<96x128xf32> -> vector<96x128xf32>
    %203 = arith.addf %197, %202 : vector<96x128xf32>
    %c1_81 = arith.constant 1 : index
    %c9_82 = arith.constant 9 : index
    %c0_83 = arith.constant 0 : index
    %204 = vector.load %arg8[%c1_81, %c9_82, %c0_83] : memref<4x112x128xbf16, #tpu.memory_space<vmem>>, vector<1x96x128xbf16>
    %205 = vector.shape_cast %204 : vector<1x96x128xbf16> to vector<96x128xbf16>
    %c7 = arith.constant 7 : index
    %c0_84 = arith.constant 0 : index
    %c0_85 = arith.constant 0 : index
    %206 = vector.load %arg3[%c7, %c0_84, %c0_85] : memref<9x128x128xbf16, #tpu.memory_space<vmem>>, vector<1x128x128xbf16>
    %207 = vector.shape_cast %206 : vector<1x128x128xbf16> to vector<128x128xbf16>
    %cst_86 = arith.constant dense<0.000000e+00> : vector<96x128xf32>
    %208 = tpu.matmul %205, %207, %cst_86 {dimension_numbers = #tpu.dot_dimension_numbers<[1], [0], [0], [1], [0, 0, 1, 1], [], []>} : vector<96x128xbf16>, vector<128x128xbf16>, vector<96x128xf32> -> vector<96x128xf32>
    %209 = arith.addf %203, %208 : vector<96x128xf32>
    %c0_87 = arith.constant 0 : index
    %c10 = arith.constant 10 : index
    %c0_88 = arith.constant 0 : index
    %210 = vector.load %arg8[%c0_87, %c10, %c0_88] : memref<4x112x128xbf16, #tpu.memory_space<vmem>>, vector<1x96x128xbf16>
    %211 = vector.shape_cast %210 : vector<1x96x128xbf16> to vector<96x128xbf16>
    %c8 = arith.constant 8 : index
    %c0_89 = arith.constant 0 : index
    %c0_90 = arith.constant 0 : index
    %212 = vector.load %arg3[%c8, %c0_89, %c0_90] : memref<9x128x128xbf16, #tpu.memory_space<vmem>>, vector<1x128x128xbf16>
    %213 = vector.shape_cast %212 : vector<1x128x128xbf16> to vector<128x128xbf16>
    %cst_91 = arith.constant dense<0.000000e+00> : vector<96x128xf32>
    %214 = tpu.matmul %211, %213, %cst_91 {dimension_numbers = #tpu.dot_dimension_numbers<[1], [0], [0], [1], [0, 0, 1, 1], [], []>} : vector<96x128xbf16>, vector<128x128xbf16>, vector<96x128xf32> -> vector<96x128xf32>
    %215 = arith.addf %209, %214 : vector<96x128xf32>
    %216 = vector.broadcast %1 : vector<1x128xf32> to vector<96x128xf32>
    %217 = arith.addf %215, %216 : vector<96x128xf32>
    %cst_92 = arith.constant 0.000000e+00 : f32
    %218 = vector.broadcast %cst_92 : f32 to vector<96x128xf32>
    %219 = arith.maximumf %217, %218 : vector<96x128xf32>
    %220 = arith.truncf %219 : vector<96x128xf32> to vector<96x128xbf16>
    %c0_93 = arith.constant 0 : index
    %c0_94 = arith.constant 0 : index
    %221 = vector.load %arg5[%c0_93, %c0_94] : memref<128x128xbf16, #tpu.memory_space<vmem>>, vector<128x128xbf16>
    %cst_95 = arith.constant dense<0.000000e+00> : vector<96x128xf32>
    %222 = tpu.matmul %220, %221, %cst_95 {dimension_numbers = #tpu.dot_dimension_numbers<[1], [0], [0], [1], [0, 0, 1, 1], [], []>} : vector<96x128xbf16>, vector<128x128xbf16>, vector<96x128xf32> -> vector<96x128xf32>
    %223 = vector.broadcast %2 : vector<1x128xf32> to vector<96x128xf32>
    %224 = arith.addf %222, %223 : vector<96x128xf32>
    %cst_96 = arith.constant 0.000000e+00 : f32
    %225 = vector.broadcast %cst_96 : f32 to vector<96x128xf32>
    %226 = arith.maximumf %224, %225 : vector<96x128xf32>
    %c0_97 = arith.constant 0 : index
    %c0_98 = arith.constant 0 : index
    %c0_99 = arith.constant 0 : index
    %227 = vector.load %arg7[%c0_97, %c0_98, %c0_99] : memref<1x96x128xf32, #tpu.memory_space<vmem>>, vector<1x96x128xf32>
    %228 = vector.shape_cast %227 : vector<1x96x128xf32> to vector<96x128xf32>
    %229 = vector.shape_cast %226 : vector<96x128xf32> to vector<1x96x128xf32>
    tpu.vector_store %arg7[%c0_97, %c0_98, %c0_99], %229 {strides = array<i32>} : memref<1x96x128xf32, #tpu.memory_space<vmem>>, vector<1x96x128xf32>,
    return
  }
  func.func @transform_0(%arg0: i32) -> (i32, i32, i32) {
    %c0_i32 = arith.constant 0 : i32
    %c0_i32_0 = arith.constant 0 : i32
    %c0_i32_1 = arith.constant 0 : i32
    return %arg0, %c0_i32, %c0_i32_0 : i32, i32, i32
  }
  func.func @transform_1(%arg0: i32) -> (i32, i32) {
    %c0_i32 = arith.constant 0 : i32
    %c0_i32_0 = arith.constant 0 : i32
    %c0_i32_1 = arith.constant 0 : i32
    return %c0_i32, %c0_i32_0 : i32, i32
  }
  func.func @transform_2(%arg0: i32) -> (i32, i32, i32) {
    %c0_i32 = arith.constant 0 : i32
    %c0_i32_0 = arith.constant 0 : i32
    %c0_i32_1 = arith.constant 0 : i32
    %c0_i32_2 = arith.constant 0 : i32
    return %c0_i32, %c0_i32_0, %c0_i32_1 : i32, i32, i32
  }
  func.func @transform_3(%arg0: i32) -> (i32, i32) {
    %c0_i32 = arith.constant 0 : i32
    %c0_i32_0 = arith.constant 0 : i32
    %c0_i32_1 = arith.constant 0 : i32
    return %c0_i32, %c0_i32_0 : i32, i32
  }
  func.func @transform_4(%arg0: i32) -> (i32, i32) {
    %c0_i32 = arith.constant 0 : i32
    %c0_i32_0 = arith.constant 0 : i32
    %c0_i32_1 = arith.constant 0 : i32
    return %c0_i32, %c0_i32_0 : i32, i32
  }
  func.func @transform_5(%arg0: i32) -> (i32, i32) {
    %c0_i32 = arith.constant 0 : i32
    %c0_i32_0 = arith.constant 0 : i32
    %c0_i32_1 = arith.constant 0 : i32
    return %c0_i32, %c0_i32_0 : i32, i32
  }
  func.func @transform_6(%arg0: i32) -> (i32, i32, i32) {
    %c0_i32 = arith.constant 0 : i32
    %c0_i32_0 = arith.constant 0 : i32
    %c0_i32_1 = arith.constant 0 : i32
    return %arg0, %c0_i32, %c0_i32_0 : i32, i32, i32
  }
}

</mosaic_0001>

<llo_original>
// kernel: downsample_bottleneck_forward.1
$region0: #{downsample_bottleneck_forward.1}
  #allocation0 [shape = 'u32[]', space=smem, size = 0x4, offset = 0x4, fixed_abs, tag = 'smem constant byte address 0x4 - core index']
  #allocation1 [shape = 'u32[144,128]{1,0:T(1,128)}', space=vmem, size = 0x12000, scoped, tag = 'internal scratch']
  #allocation2 [shape = 'bf16[4,112,128]{2,1,0:T(8,128)(2,1)}', space=vmem, size = 0x1c000, scoped, tag = 'scratch operand']
  %s0 = inlined_call_operand.vmem [shape: f32[2,96,20], index: 0, kind: input, shape index: {}]
  %s1 = inlined_call_operand.vmem [shape: f32[5,128], index: 1, kind: input, shape index: {}]
  %s2 = inlined_call_operand.vmem [shape: bf16[9,128,128], index: 2, kind: input, shape index: {}]
  %s3 = inlined_call_operand.vmem [shape: f32[1,128], index: 3, kind: input, shape index: {}]
  %s4 = inlined_call_operand.vmem [shape: bf16[128,128], index: 4, kind: input, shape index: {}]
  %s5 = inlined_call_operand.vmem [shape: f32[1,128], index: 5, kind: input, shape index: {}]
  %s6 = inlined_call_operand.vmem [shape: f32[2,96,128], index: 6, kind: output, shape index: {}]
  %s7 = sld [smem:[#allocation0]]
  $region57: #{downsample_bottleneck_forward.1} parent=0
    _
  %s9 = ssub.s32 1, %s7
  %s10 = scalar_select 0, %s9, %s7
  loop: start=0, step=1, limit=4
  $region2: #{downsample_bottleneck_forward.1} parent=0 // loop_pre_header
    _
  $region3: #{downsample_bottleneck_forward.1} parent=0 // loop_header
    %s12 = sphi 0, %s16
    %p13 = scmp.ge.s32.totalorder %s12, 4
    %s22 = sphi 0, %s24
    %s25 = sphi 0, %s22
    %s26 = sphi 0, %s25
    %s42 = sphi 0, %s26
    %s46 = sphi 0, %s46
    %s48 = sphi 0, %s46
    %s49 = sphi 0, %s48
    %s63 = sphi 0, %s49
    %s67 = sphi 0, %s67
    %s69 = sphi 0, %s67
    %s70 = sphi 0, %s69
    %s84 = sphi 0, %s70
    %s88 = sphi 0, %s88
    %s90 = sphi 0, %s88
    %s91 = sphi 0, %s90
    %s105 = sphi 0, %s91
    %s109 = sphi 0, %s109
    %s111 = sphi 0, %s109
    %s112 = sphi 0, %s111
    %s126 = sphi 0, %s112
    %s130 = sphi 0, %s130
    %s132 = sphi 0, %s130
    %s133 = sphi 0, %s132
    %s147 = sphi 0, %s133
    %s153 = sphi 0, %s155
    %s156 = sphi 0, %s153
    %s157 = sphi 0, %s156
    %s173 = sphi 0, %s157
  $region4: #{downsample_bottleneck_forward.1} parent=0 // loop_header_branch
    %15 = sbr.rel (%p13) target = $region8
  $region5: #{downsample_bottleneck_forward.1} parent=0 // loop_body
    %s17 = ssub.s32 %s12, 1
    %s18 = ssub.s32 %s12, 2
    %s19 = sadd.s32 %s12, 1
    %s20 = ssub.s32 %s12, %s19
    %p21 = scmp.eq.s32.totalorder %s20, 0
    %s23 = sadd.s32 %s22, 1
    %s24 = scalar_select %p21, %s22, %s23
    %p27 = pneg %p21
    %p28 = scmp.eq.s32.totalorder %s12, 1
    %p29 = por %p27, %p28
    %p30 = scmp.ne.s32.totalorder %s22, %s25
    %p31 = scmp.eq.s32.totalorder %s12, 0
    %p32 = por %p30, %p31
    %p33 = scmp.ne.s32.totalorder %s22, %s25
    %p34 = scmp.eq.s32.totalorder %s17, 1
    %p35 = por %p33, %p34
    %p36 = scmp.ne.s32.totalorder %s25, %s26
    %p37 = scmp.eq.s32.totalorder %s17, 0
    %p38 = por %p36, %p37
    %p39 = scmp.ne.s32.totalorder %s25, %s26
    %p40 = scmp.eq.s32.totalorder %s18, 1
    %p41 = por %p39, %p40
    %p43 = scmp.ne.s32.totalorder %s26, %s42
    %p44 = scmp.eq.s32.totalorder %s18, 0
    %p45 = por %p43, %p44
    %s47 = sadd.s32 %s46, 1
    %p50 = scmp.eq.s32.totalorder %s12, 1
    %p51 = scmp.ne.s32.totalorder %s46, %s48
    %p52 = scmp.eq.s32.totalorder %s12, 0
    %p53 = por %p51, %p52
    %p54 = scmp.ne.s32.totalorder %s46, %s48
    %p55 = scmp.eq.s32.totalorder %s17, 1
    %p56 = por %p54, %p55
    %p57 = scmp.ne.s32.totalorder %s48, %s49
    %p58 = scmp.eq.s32.totalorder %s17, 0
    %p59 = por %p57, %p58
    %p60 = scmp.ne.s32.totalorder %s48, %s49
    %p61 = scmp.eq.s32.totalorder %s18, 1
    %p62 = por %p60, %p61
    %p64 = scmp.ne.s32.totalorder %s49, %s63
    %p65 = scmp.eq.s32.totalorder %s18, 0
    %p66 = por %p64, %p65
    %s68 = sadd.s32 %s67, 1
    %p71 = scmp.eq.s32.totalorder %s12, 1
    %p72 = scmp.ne.s32.totalorder %s67, %s69
    %p73 = scmp.eq.s32.totalorder %s12, 0
    %p74 = por %p72, %p73
    %p75 = scmp.ne.s32.totalorder %s67, %s69
    %p76 = scmp.eq.s32.totalorder %s17, 1
    %p77 = por %p75, %p76
    %p78 = scmp.ne.s32.totalorder %s69, %s70
    %p79 = scmp.eq.s32.totalorder %s17, 0
    %p80 = por %p78, %p79
    %p81 = scmp.ne.s32.totalorder %s69, %s70
    %p82 = scmp.eq.s32.totalorder %s18, 1
    %p83 = por %p81, %p82
    %p85 = scmp.ne.s32.totalorder %s70, %s84
    %p86 = scmp.eq.s32.totalorder %s18, 0
    %p87 = por %p85, %p86
    %s89 = sadd.s32 %s88, 1
    %p92 = scmp.eq.s32.totalorder %s12, 1
    %p93 = scmp.ne.s32.totalorder %s88, %s90
    %p94 = scmp.eq.s32.totalorder %s12, 0
    %p95 = por %p93, %p94
    %p96 = scmp.ne.s32.totalorder %s88, %s90
    %p97 = scmp.eq.s32.totalorder %s17, 1
    %p98 = por %p96, %p97
    %p99 = scmp.ne.s32.totalorder %s90, %s91
    %p100 = scmp.eq.s32.totalorder %s17, 0
    %p101 = por %p99, %p100
    %p102 = scmp.ne.s32.totalorder %s90, %s91
    %p103 = scmp.eq.s32.totalorder %s18, 1
    %p104 = por %p102, %p103
    %p106 = scmp.ne.s32.totalorder %s91, %s105
    %p107 = scmp.eq.s32.totalorder %s18, 0
    %p108 = por %p106, %p107
    %s110 = sadd.s32 %s109, 1
    %p113 = scmp.eq.s32.totalorder %s12, 1
    %p114 = scmp.ne.s32.totalorder %s109, %s111
    %p115 = scmp.eq.s32.totalorder %s12, 0
    %p116 = por %p114, %p115
    %p117 = scmp.ne.s32.totalorder %s109, %s111
    %p118 = scmp.eq.s32.totalorder %s17, 1
    %p119 = por %p117, %p118
    %p120 = scmp.ne.s32.totalorder %s111, %s112
    %p121 = scmp.eq.s32.totalorder %s17, 0
    %p122 = por %p120, %p121
    %p123 = scmp.ne.s32.totalorder %s111, %s112
    %p124 = scmp.eq.s32.totalorder %s18, 1
    %p125 = por %p123, %p124
    %p127 = scmp.ne.s32.totalorder %s112, %s126
    %p128 = scmp.eq.s32.totalorder %s18, 0
    %p129 = por %p127, %p128
    %s131 = sadd.s32 %s130, 1
    %p134 = scmp.eq.s32.totalorder %s12, 1
    %p135 = scmp.ne.s32.totalorder %s130, %s132
    %p136 = scmp.eq.s32.totalorder %s12, 0
    %p137 = por %p135, %p136
    %p138 = scmp.ne.s32.totalorder %s130, %s132
    %p139 = scmp.eq.s32.totalorder %s17, 1
    %p140 = por %p138, %p139
    %p141 = scmp.ne.s32.totalorder %s132, %s133
    %p142 = scmp.eq.s32.totalorder %s17, 0
    %p143 = por %p141, %p142
    %p144 = scmp.ne.s32.totalorder %s132, %s133
    %p145 = scmp.eq.s32.totalorder %s18, 1
    %p146 = por %p144, %p145
    %p148 = scmp.ne.s32.totalorder %s133, %s147
    %p149 = scmp.eq.s32.totalorder %s18, 0
    %p150 = por %p148, %p149
    %s151 = ssub.s32 %s12, %s19
    %p152 = scmp.eq.s32.totalorder %s151, 0
    %s154 = sadd.s32 %s153, 1
    %s155 = scalar_select %p152, %s153, %s154
    %p158 = pneg %p152
    %p159 = scmp.eq.s32.totalorder %s12, 1
    %p160 = por %p158, %p159
    %p161 = scmp.ne.s32.totalorder %s153, %s156
    %p162 = scmp.eq.s32.totalorder %s12, 0
    %p163 = por %p161, %p162
    %p164 = scmp.ne.s32.totalorder %s153, %s156
    %p165 = scmp.eq.s32.totalorder %s17, 1
    %p166 = por %p164, %p165
    %p167 = scmp.ne.s32.totalorder %s156, %s157
    %p168 = scmp.eq.s32.totalorder %s17, 0
    %p169 = por %p167, %p168
    %p170 = scmp.ne.s32.totalorder %s156, %s157
    %p171 = scmp.eq.s32.totalorder %s18, 1
    %p172 = por %p170, %p171
    %p174 = scmp.ne.s32.totalorder %s157, %s173
    %p175 = scmp.eq.s32.totalorder %s18, 0
    %p176 = por %p174, %p175
    %p177 = scmp.le.s32.totalorder 1, %s12
    %p178 = scmp.lt.s32.totalorder %s12, 3
    %p179 = pnand %p177, %p178
    %p180 = pneg %p179
    // Predicated region
    $region9: #{downsample_bottleneck_forward.1} parent=5 // pred_check
      _
    $region10: #{downsample_bottleneck_forward.1} parent=5 // pred_check_branch
      %182 = sbr.rel (%p179) target = $region12
    $region11: #{downsample_bottleneck_forward.1} parent=5 // pred_region
      %s183 = ssub.s32 %s12, 1
      // Predicated region
      $region13: #{downsample_bottleneck_forward.1} parent=11 // pred_check
        %p184 = pneg %p59
      $region14: #{downsample_bottleneck_forward.1} parent=11 // pred_check_branch
        %186 = sbr.rel (%p184) target = $region16
      $region15: #{downsample_bottleneck_forward.1} parent=11 // pred_region
        _
      $region16: #{downsample_bottleneck_forward.1} parent=11 // pred_fallthru
        _
      // Predicated region
      $region17: #{downsample_bottleneck_forward.1} parent=11 // pred_check
        %p187 = pneg %p80
      $region18: #{downsample_bottleneck_forward.1} parent=11 // pred_check_branch
        %189 = sbr.rel (%p187) target = $region20
      $region19: #{downsample_bottleneck_forward.1} parent=11 // pred_region
        _
      $region20: #{downsample_bottleneck_forward.1} parent=11 // pred_fallthru
        _
      // Predicated region
      $region21: #{downsample_bottleneck_forward.1} parent=11 // pred_check
        %p190 = pneg %p101
      $region22: #{downsample_bottleneck_forward.1} parent=11 // pred_check_branch
        %192 = sbr.rel (%p190) target = $region24
      $region23: #{downsample_bottleneck_forward.1} parent=11 // pred_region
        _
      $region24: #{downsample_bottleneck_forward.1} parent=11 // pred_fallthru
        _
      // Predicated region
      $region25: #{downsample_bottleneck_forward.1} parent=11 // pred_check
        %p193 = pneg %p122
      $region26: #{downsample_bottleneck_forward.1} parent=11 // pred_check_branch
        %195 = sbr.rel (%p193) target = $region28
      $region27: #{downsample_bottleneck_forward.1} parent=11 // pred_region
        _
      $region28: #{downsample_bottleneck_forward.1} parent=11 // pred_fallthru
        _
      // Predicated region
      $region29: #{downsample_bottleneck_forward.1} parent=11 // pred_check
        %p196 = pneg %p143
      $region30: #{downsample_bottleneck_forward.1} parent=11 // pred_check_branch
        %198 = sbr.rel (%p196) target = $region32
      $region31: #{downsample_bottleneck_forward.1} parent=11 // pred_region
        _
      $region32: #{downsample_bottleneck_forward.1} parent=11 // pred_fallthru
        _
    $region12: #{downsample_bottleneck_forward.1} parent=5 // pred_fallthru
      _
    %p199 = scmp.lt.s32.totalorder %s12, 2
    // Predicated region
    $region33: #{downsample_bottleneck_forward.1} parent=5 // pred_check
      %p200 = pneg %p199
    $region34: #{downsample_bottleneck_forward.1} parent=5 // pred_check_branch
      %202 = sbr.rel (%p200) target = $region36
    $region35: #{downsample_bottleneck_forward.1} parent=5 // pred_region
      // Predicated region
      $region37: #{downsample_bottleneck_forward.1} parent=35 // pred_check
        %p203 = pneg %p32
      $region38: #{downsample_bottleneck_forward.1} parent=35 // pred_check_branch
        %205 = sbr.rel (%p203) target = $region40
      $region39: #{downsample_bottleneck_forward.1} parent=35 // pred_region
        %p206 = scmp.lt.s32.totalorder %s12, 1
        %s207 = scalar_select %p206, %s12, 1
        %s208 = smul.addr %s207, 12
        %s209 = smul.addr %s208, 8
        %s210 = scalar_lea.vmem %s0, %s209
      $region40: #{downsample_bottleneck_forward.1} parent=35 // pred_fallthru
        _
    $region36: #{downsample_bottleneck_forward.1} parent=5 // pred_fallthru
      _
    %p211 = scmp.le.s32.totalorder 1, %s12
    %p212 = scmp.lt.s32.totalorder %s12, 3
    %p213 = pnand %p211, %p212
    %p214 = pneg %p213
    // Predicated region
    $region41: #{downsample_bottleneck_forward.1} parent=5 // pred_check
      _
    $region42: #{downsample_bottleneck_forward.1} parent=5 // pred_check_branch
      %216 = sbr.rel (%p213) target = $region44
    $region43: #{downsample_bottleneck_forward.1} parent=5 // pred_region
      %s217 = ssub.s32 %s12, 1
      %p218 = scmp.lt.s32.totalorder %s17, 1
      %s219 = scalar_select %p218, %s17, 1
      %s220 = smul.addr %s219, 12
      %s221 = smul.addr %s220, 8
      %s222 = scalar_lea.vmem %s0, %s221
      %p223 = pneg %p38
      %p224 = pneg %p35
      %p225 = pneg %p59
      %p226 = pneg %p56
      %p227 = pneg %p80
      %p228 = pneg %p77
      %p229 = pneg %p101
      %p230 = pneg %p98
      %p231 = pneg %p122
      %p232 = pneg %p119
      %p233 = pneg %p143
      %p234 = pneg %p140
      %p235 = pneg %p169
      %p236 = pneg %p166
      %p237 = scmp.lt.s32.totalorder %s17, 1
      %s238 = scalar_select %p237, %s17, 1
      %s239 = smul.addr %s238, 12
      %s240 = smul.addr %s239, 8
      %s241 = scalar_lea.vmem %s6, %s240
      %p242 = scmp.lt.s32.totalorder %s17, 1
      %s243 = scalar_select %p242, %s17, 1
      %s244 = smul.addr %s243, 12
      %s245 = smul.addr %s244, 8
      %s246 = scalar_lea.vmem %s0, %s245
      %p247 = scmp.lt.s32.totalorder %s17, 1
      %s248 = scalar_select %p247, %s17, 1
      %s249 = smul.addr %s248, 12
      %s250 = smul.addr %s249, 8
      %s251 = scalar_lea.vmem %s6, %s250
      %v253 = vld [vmem:[%s1] sm:$0x1f]
      %v254 = vld [vmem:[%s3] sm:$0x1]
      %v255 = vld [vmem:[%s5] sm:$0x1]
      %v256 = vld [vmem:[%s246] sm:$0xff]
      %v257 = vld [vmem:[%s246 + $0x8] sm:$0xff]
      %v258 = vld [vmem:[%s246 + $0x10] sm:$0xff]
      %v259 = vld [vmem:[%s246 + $0x18] sm:$0xff]
      %v260 = vld [vmem:[%s246 + $0x20] sm:$0xff]
      %v261 = vld [vmem:[%s246 + $0x28] sm:$0xff]
      %v262 = vld [vmem:[%s246 + $0x30] sm:$0xff]
      %v263 = vld [vmem:[%s246 + $0x38] sm:$0xff]
      %v264 = vld [vmem:[%s246 + $0x40] sm:$0xff]
      %v265 = vld [vmem:[%s246 + $0x48] sm:$0xff]
      %v266 = vld [vmem:[%s246 + $0x50] sm:$0xff]
      %v267 = vld [vmem:[%s246 + $0x58] sm:$0xff]
      %269 = vset.pattern.permute.xlu0 4
      %270 = vperm.xlu0 %269, %v256
      %v271 = vpop.permute.xlu0 %270
      %274 = vset.pattern.permute.xlu0 4
      %275 = vperm.xlu0 %274, %v257
      %v276 = vpop.permute.xlu0 %275
      %279 = vset.pattern.permute.xlu0 4
      %280 = vperm.xlu0 %279, %v258
      %v281 = vpop.permute.xlu0 %280
      %284 = vset.pattern.permute.xlu0 4
      %285 = vperm.xlu0 %284, %v259
      %v286 = vpop.permute.xlu0 %285
      %289 = vset.pattern.permute.xlu0 4
      %290 = vperm.xlu0 %289, %v260
      %v291 = vpop.permute.xlu0 %290
      %294 = vset.pattern.permute.xlu0 4
      %295 = vperm.xlu0 %294, %v261
      %v296 = vpop.permute.xlu0 %295
      %299 = vset.pattern.permute.xlu0 4
      %300 = vperm.xlu0 %299, %v262
      %v301 = vpop.permute.xlu0 %300
      %304 = vset.pattern.permute.xlu0 4
      %305 = vperm.xlu0 %304, %v263
      %v306 = vpop.permute.xlu0 %305
      %309 = vset.pattern.permute.xlu0 4
      %310 = vperm.xlu0 %309, %v264
      %v311 = vpop.permute.xlu0 %310
      %314 = vset.pattern.permute.xlu0 4
      %315 = vperm.xlu0 %314, %v265
      %v316 = vpop.permute.xlu0 %315
      %319 = vset.pattern.permute.xlu0 4
      %320 = vperm.xlu0 %319, %v266
      %v321 = vpop.permute.xlu0 %320
      %324 = vset.pattern.permute.xlu0 4
      %325 = vperm.xlu0 %324, %v267
      %v326 = vpop.permute.xlu0 %325
      %v328 = vlaneseq
      %v329 = vshrl.u32 %v328, 7
      %v330 = vsub.s32 4, %v329
      %v331 = vrot.slane %v253, %v330
      %v332 = vmul.f32 %v271, %v331
      %v333 = vmul.f32 %v276, %v331
      %v334 = vmul.f32 %v281, %v331
      %v335 = vmul.f32 %v286, %v331
      %v336 = vmul.f32 %v291, %v331
      %v337 = vmul.f32 %v296, %v331
      %v338 = vmul.f32 %v301, %v331
      %v339 = vmul.f32 %v306, %v331
      %v340 = vmul.f32 %v311, %v331
      %v341 = vmul.f32 %v316, %v331
      %v342 = vmul.f32 %v321, %v331
      %v343 = vmul.f32 %v326, %v331
      %344 = vset.pattern.permute.xlu0 0
      %345 = vperm.xlu0 %344, %v256
      %v346 = vpop.permute.xlu0 %345
      %348 = vset.pattern.permute.xlu0 0
      %349 = vperm.xlu0 %348, %v257
      %v350 = vpop.permute.xlu0 %349
      %352 = vset.pattern.permute.xlu0 0
      %353 = vperm.xlu0 %352, %v258
      %v354 = vpop.permute.xlu0 %353
      %356 = vset.pattern.permute.xlu0 0
      %357 = vperm.xlu0 %356, %v259
      %v358 = vpop.permute.xlu0 %357
      %360 = vset.pattern.permute.xlu0 0
      %361 = vperm.xlu0 %360, %v260
      %v362 = vpop.permute.xlu0 %361
      %364 = vset.pattern.permute.xlu0 0
      %365 = vperm.xlu0 %364, %v261
      %v366 = vpop.permute.xlu0 %365
      %368 = vset.pattern.permute.xlu0 0
      %369 = vperm.xlu0 %368, %v262
      %v370 = vpop.permute.xlu0 %369
      %372 = vset.pattern.permute.xlu0 0
      %373 = vperm.xlu0 %372, %v263
      %v374 = vpop.permute.xlu0 %373
      %376 = vset.pattern.permute.xlu0 0
      %377 = vperm.xlu0 %376, %v264
      %v378 = vpop.permute.xlu0 %377
      %380 = vset.pattern.permute.xlu0 0
      %381 = vperm.xlu0 %380, %v265
      %v382 = vpop.permute.xlu0 %381
      %384 = vset.pattern.permute.xlu0 0
      %385 = vperm.xlu0 %384, %v266
      %v386 = vpop.permute.xlu0 %385
      %388 = vset.pattern.permute.xlu0 0
      %389 = vperm.xlu0 %388, %v267
      %v390 = vpop.permute.xlu0 %389
      %v392 = vlaneseq
      %v393 = vshrl.u32 %v392, 7
      %v394 = vsub.s32 0, %v393
      %v395 = vrot.slane %v253, %v394
      %v396 = vmul.f32 %v346, %v395
      %v397 = vmul.f32 %v350, %v395
      %v398 = vmul.f32 %v354, %v395
      %v399 = vmul.f32 %v358, %v395
      %v400 = vmul.f32 %v362, %v395
      %v401 = vmul.f32 %v366, %v395
      %v402 = vmul.f32 %v370, %v395
      %v403 = vmul.f32 %v374, %v395
      %v404 = vmul.f32 %v378, %v395
      %v405 = vmul.f32 %v382, %v395
      %v406 = vmul.f32 %v386, %v395
      %v407 = vmul.f32 %v390, %v395
      %v408 = vadd.f32 %v332, %v396
      %v409 = vadd.f32 %v333, %v397
      %v410 = vadd.f32 %v334, %v398
      %v411 = vadd.f32 %v335, %v399
      %v412 = vadd.f32 %v336, %v400
      %v413 = vadd.f32 %v337, %v401
      %v414 = vadd.f32 %v338, %v402
      %v415 = vadd.f32 %v339, %v403
      %v416 = vadd.f32 %v340, %v404
      %v417 = vadd.f32 %v341, %v405
      %v418 = vadd.f32 %v342, %v406
      %v419 = vadd.f32 %v343, %v407
      %420 = vset.pattern.permute.xlu0 1
      %421 = vperm.xlu0 %420, %v256
      %v422 = vpop.permute.xlu0 %421
      %424 = vset.pattern.permute.xlu0 1
      %425 = vperm.xlu0 %424, %v257
      %v426 = vpop.permute.xlu0 %425
      %428 = vset.pattern.permute.xlu0 1
      %429 = vperm.xlu0 %428, %v258
      %v430 = vpop.permute.xlu0 %429
      %432 = vset.pattern.permute.xlu0 1
      %433 = vperm.xlu0 %432, %v259
      %v434 = vpop.permute.xlu0 %433
      %436 = vset.pattern.permute.xlu0 1
      %437 = vperm.xlu0 %436, %v260
      %v438 = vpop.permute.xlu0 %437
      %440 = vset.pattern.permute.xlu0 1
      %441 = vperm.xlu0 %440, %v261
      %v442 = vpop.permute.xlu0 %441
      %444 = vset.pattern.permute.xlu0 1
      %445 = vperm.xlu0 %444, %v262
      %v446 = vpop.permute.xlu0 %445
      %448 = vset.pattern.permute.xlu0 1
      %449 = vperm.xlu0 %448, %v263
      %v450 = vpop.permute.xlu0 %449
      %452 = vset.pattern.permute.xlu0 1
      %453 = vperm.xlu0 %452, %v264
      %v454 = vpop.permute.xlu0 %453
      %456 = vset.pattern.permute.xlu0 1
      %457 = vperm.xlu0 %456, %v265
      %v458 = vpop.permute.xlu0 %457
      %460 = vset.pattern.permute.xlu0 1
      %461 = vperm.xlu0 %460, %v266
      %v462 = vpop.permute.xlu0 %461
      %464 = vset.pattern.permute.xlu0 1
      %465 = vperm.xlu0 %464, %v267
      %v466 = vpop.permute.xlu0 %465
      %v468 = vlaneseq
      %v469 = vshrl.u32 %v468, 7
      %v470 = vsub.s32 1, %v469
      %v471 = vrot.slane %v253, %v470
      %v472 = vmul.f32 %v422, %v471
      %v473 = vmul.f32 %v426, %v471
      %v474 = vmul.f32 %v430, %v471
      %v475 = vmul.f32 %v434, %v471
      %v476 = vmul.f32 %v438, %v471
      %v477 = vmul.f32 %v442, %v471
      %v478 = vmul.f32 %v446, %v471
      %v479 = vmul.f32 %v450, %v471
      %v480 = vmul.f32 %v454, %v471
      %v481 = vmul.f32 %v458, %v471
      %v482 = vmul.f32 %v462, %v471
      %v483 = vmul.f32 %v466, %v471
      %v484 = vadd.f32 %v408, %v472
      %v485 = vadd.f32 %v409, %v473
      %v486 = vadd.f32 %v410, %v474
      %v487 = vadd.f32 %v411, %v475
      %v488 = vadd.f32 %v412, %v476
      %v489 = vadd.f32 %v413, %v477
      %v490 = vadd.f32 %v414, %v478
      %v491 = vadd.f32 %v415, %v479
      %v492 = vadd.f32 %v416, %v480
      %v493 = vadd.f32 %v417, %v481
      %v494 = vadd.f32 %v418, %v482
      %v495 = vadd.f32 %v419, %v483
      %496 = vset.pattern.permute.xlu0 2
      %497 = vperm.xlu0 %496, %v256
      %v498 = vpop.permute.xlu0 %497
      %500 = vset.pattern.permute.xlu0 2
      %501 = vperm.xlu0 %500, %v257
      %v502 = vpop.permute.xlu0 %501
      %504 = vset.pattern.permute.xlu0 2
      %505 = vperm.xlu0 %504, %v258
      %v506 = vpop.permute.xlu0 %505
      %508 = vset.pattern.permute.xlu0 2
      %509 = vperm.xlu0 %508, %v259
      %v510 = vpop.permute.xlu0 %509
      %512 = vset.pattern.permute.xlu0 2
      %513 = vperm.xlu0 %512, %v260
      %v514 = vpop.permute.xlu0 %513
      %516 = vset.pattern.permute.xlu0 2
      %517 = vperm.xlu0 %516, %v261
      %v518 = vpop.permute.xlu0 %517
      %520 = vset.pattern.permute.xlu0 2
      %521 = vperm.xlu0 %520, %v262
      %v522 = vpop.permute.xlu0 %521
      %524 = vset.pattern.permute.xlu0 2
      %525 = vperm.xlu0 %524, %v263
      %v526 = vpop.permute.xlu0 %525
      %528 = vset.pattern.permute.xlu0 2
      %529 = vperm.xlu0 %528, %v264
      %v530 = vpop.permute.xlu0 %529
      %532 = vset.pattern.permute.xlu0 2
      %533 = vperm.xlu0 %532, %v265
      %v534 = vpop.permute.xlu0 %533
      %536 = vset.pattern.permute.xlu0 2
      %537 = vperm.xlu0 %536, %v266
      %v538 = vpop.permute.xlu0 %537
      %540 = vset.pattern.permute.xlu0 2
      %541 = vperm.xlu0 %540, %v267
      %v542 = vpop.permute.xlu0 %541
      %v544 = vlaneseq
      %v545 = vshrl.u32 %v544, 7
      %v546 = vsub.s32 2, %v545
      %v547 = vrot.slane %v253, %v546
      %v548 = vmul.f32 %v498, %v547
      %v549 = vmul.f32 %v502, %v547
      %v550 = vmul.f32 %v506, %v547
      %v551 = vmul.f32 %v510, %v547
      %v552 = vmul.f32 %v514, %v547
      %v553 = vmul.f32 %v518, %v547
      %v554 = vmul.f32 %v522, %v547
      %v555 = vmul.f32 %v526, %v547
      %v556 = vmul.f32 %v530, %v547
      %v557 = vmul.f32 %v534, %v547
      %v558 = vmul.f32 %v538, %v547
      %v559 = vmul.f32 %v542, %v547
      %v560 = vadd.f32 %v484, %v548
      %v561 = vadd.f32 %v485, %v549
      %v562 = vadd.f32 %v486, %v550
      %v563 = vadd.f32 %v487, %v551
      %v564 = vadd.f32 %v488, %v552
      %v565 = vadd.f32 %v489, %v553
      %v566 = vadd.f32 %v490, %v554
      %v567 = vadd.f32 %v491, %v555
      %v568 = vadd.f32 %v492, %v556
      %v569 = vadd.f32 %v493, %v557
      %v570 = vadd.f32 %v494, %v558
      %v571 = vadd.f32 %v495, %v559
      %572 = vset.pattern.permute.xlu0 3
      %573 = vperm.xlu0 %572, %v256
      %v574 = vpop.permute.xlu0 %573
      %576 = vset.pattern.permute.xlu0 3
      %577 = vperm.xlu0 %576, %v257
      %v578 = vpop.permute.xlu0 %577
      %580 = vset.pattern.permute.xlu0 3
      %581 = vperm.xlu0 %580, %v258
      %v582 = vpop.permute.xlu0 %581
      %584 = vset.pattern.permute.xlu0 3
      %585 = vperm.xlu0 %584, %v259
      %v586 = vpop.permute.xlu0 %585
      %588 = vset.pattern.permute.xlu0 3
      %589 = vperm.xlu0 %588, %v260
      %v590 = vpop.permute.xlu0 %589
      %592 = vset.pattern.permute.xlu0 3
      %593 = vperm.xlu0 %592, %v261
      %v594 = vpop.permute.xlu0 %593
      %596 = vset.pattern.permute.xlu0 3
      %597 = vperm.xlu0 %596, %v262
      %v598 = vpop.permute.xlu0 %597
      %600 = vset.pattern.permute.xlu0 3
      %601 = vperm.xlu0 %600, %v263
      %v602 = vpop.permute.xlu0 %601
      %604 = vset.pattern.permute.xlu0 3
      %605 = vperm.xlu0 %604, %v264
      %v606 = vpop.permute.xlu0 %605
      %608 = vset.pattern.permute.xlu0 3
      %609 = vperm.xlu0 %608, %v265
      %v610 = vpop.permute.xlu0 %609
      %612 = vset.pattern.permute.xlu0 3
      %613 = vperm.xlu0 %612, %v266
      %v614 = vpop.permute.xlu0 %613
      %616 = vset.pattern.permute.xlu0 3
      %617 = vperm.xlu0 %616, %v267
      %v618 = vpop.permute.xlu0 %617
      %v620 = vlaneseq
      %v621 = vshrl.u32 %v620, 7
      %v622 = vsub.s32 3, %v621
      %v623 = vrot.slane %v253, %v622
      %v624 = vmul.f32 %v574, %v623
      %v625 = vmul.f32 %v578, %v623
      %v626 = vmul.f32 %v582, %v623
      %v627 = vmul.f32 %v586, %v623
      %v628 = vmul.f32 %v590, %v623
      %v629 = vmul.f32 %v594, %v623
      %v630 = vmul.f32 %v598, %v623
      %v631 = vmul.f32 %v602, %v623
      %v632 = vmul.f32 %v606, %v623
      %v633 = vmul.f32 %v610, %v623
      %v634 = vmul.f32 %v614, %v623
      %v635 = vmul.f32 %v618, %v623
      %v636 = vadd.f32 %v560, %v624
      %v637 = vadd.f32 %v561, %v625
      %v638 = vadd.f32 %v562, %v626
      %v639 = vadd.f32 %v563, %v627
      %v640 = vadd.f32 %v564, %v628
      %v641 = vadd.f32 %v565, %v629
      %v642 = vadd.f32 %v566, %v630
      %v643 = vadd.f32 %v567, %v631
      %v644 = vadd.f32 %v568, %v632
      %v645 = vadd.f32 %v569, %v633
      %v646 = vadd.f32 %v570, %v634
      %v647 = vadd.f32 %v571, %v635
      %v648 = vmax.f32 %v636, 0.0
      %v649 = vmax.f32 %v637, 0.0
      %v650 = vmax.f32 %v638, 0.0
      %v651 = vmax.f32 %v639, 0.0
      %v652 = vmax.f32 %v640, 0.0
      %v653 = vmax.f32 %v641, 0.0
      %v654 = vmax.f32 %v642, 0.0
      %v655 = vmax.f32 %v643, 0.0
      %v656 = vmax.f32 %v644, 0.0
      %v657 = vmax.f32 %v645, 0.0
      %v658 = vmax.f32 %v646, 0.0
      %v659 = vmax.f32 %v647, 0.0
      %v660 = vpack.c.bf16 %v649, %v648
      %v661 = vpack.c.bf16 %v651, %v650
      %v662 = vpack.c.bf16 %v653, %v652
      %v663 = vpack.c.bf16 %v655, %v654
      %v664 = vpack.c.bf16 %v657, %v656
      %v665 = vpack.c.bf16 %v659, %v658
      %v672 = vunpack.c.l.b16 %v660
      %v673 = vunpack.c.h.b16 %v660
      %v674 = vunpack.c.l.b16 %v661
      %v675 = vunpack.c.h.b16 %v661
      %v676 = vunpack.c.l.b16 %v662
      %v677 = vunpack.c.h.b16 %v662
      %v678 = vunpack.c.l.b16 %v663
      %v679 = vunpack.c.h.b16 %v663
      %v680 = vunpack.c.l.b16 %v664
      %v681 = vunpack.c.h.b16 %v664
      %v682 = vunpack.c.l.b16 %v665
      %v683 = vunpack.c.h.b16 %v665
      %v684 = vpack.c.b16 %v672, %v672
      %v685 = vpack.c.b16 %v673, %v673
      %v686 = vpack.c.b16 %v674, %v674
      %v687 = vpack.c.b16 %v675, %v675
      %v688 = vpack.c.b16 %v676, %v676
      %v689 = vpack.c.b16 %v677, %v677
      %v690 = vpack.c.b16 %v678, %v678
      %v691 = vpack.c.b16 %v679, %v679
      %v692 = vpack.c.b16 %v680, %v680
      %v693 = vpack.c.b16 %v681, %v681
      %v694 = vpack.c.b16 %v682, %v682
      %v695 = vpack.c.b16 %v683, %v683
      %708 = vst [vmem:[#allocation2] sm:$0xf] %v684
      %709 = vst [vmem:[#allocation2 + $0x4] sm:$0xf] %v685
      %710 = vst [vmem:[#allocation2 + $0x8] sm:$0xf] %v686
      %711 = vst [vmem:[#allocation2 + $0xc] sm:$0xf] %v687
      %712 = vst [vmem:[#allocation2 + $0x10] sm:$0xf] %v688
      %713 = vst [vmem:[#allocation2 + $0x14] sm:$0xf] %v689
      %714 = vst [vmem:[#allocation2 + $0x18] sm:$0xf] %v690
      %715 = vst [vmem:[#allocation2 + $0x1c] sm:$0xf] %v691
      %716 = vst [vmem:[#allocation2 + $0x20] sm:$0xf] %v692
      %717 = vst [vmem:[#allocation2 + $0x24] sm:$0xf] %v693
      %718 = vst [vmem:[#allocation2 + $0x28] sm:$0xf] %v694
      %719 = vst [vmem:[#allocation2 + $0x2c] sm:$0xf] %v695
      %720 = vset.pattern.permute.xlu0 9
      %721 = vperm.xlu0 %720, %v256
      %v722 = vpop.permute.xlu0 %721
      %724 = vset.pattern.permute.xlu0 9
      %725 = vperm.xlu0 %724, %v257
      %v726 = vpop.permute.xlu0 %725
      %728 = vset.pattern.permute.xlu0 9
      %729 = vperm.xlu0 %728, %v258
      %v730 = vpop.permute.xlu0 %729
      %732 = vset.pattern.permute.xlu0 9
      %733 = vperm.xlu0 %732, %v259
      %v734 = vpop.permute.xlu0 %733
      %736 = vset.pattern.permute.xlu0 9
      %737 = vperm.xlu0 %736, %v260
      %v738 = vpop.permute.xlu0 %737
      %740 = vset.pattern.permute.xlu0 9
      %741 = vperm.xlu0 %740, %v261
      %v742 = vpop.permute.xlu0 %741
      %744 = vset.pattern.permute.xlu0 9
      %745 = vperm.xlu0 %744, %v262
      %v746 = vpop.permute.xlu0 %745
      %748 = vset.pattern.permute.xlu0 9
      %749 = vperm.xlu0 %748, %v263
      %v750 = vpop.permute.xlu0 %749
      %752 = vset.pattern.permute.xlu0 9
      %753 = vperm.xlu0 %752, %v264
      %v754 = vpop.permute.xlu0 %753
      %756 = vset.pattern.permute.xlu0 9
      %757 = vperm.xlu0 %756, %v265
      %v758 = vpop.permute.xlu0 %757
      %760 = vset.pattern.permute.xlu0 9
      %761 = vperm.xlu0 %760, %v266
      %v762 = vpop.permute.xlu0 %761
      %764 = vset.pattern.permute.xlu0 9
      %765 = vperm.xlu0 %764, %v267
      %v766 = vpop.permute.xlu0 %765
      %v768 = vmul.f32 %v722, %v331
      %v769 = vmul.f32 %v726, %v331
      %v770 = vmul.f32 %v730, %v331
      %v771 = vmul.f32 %v734, %v331
      %v772 = vmul.f32 %v738, %v331
      %v773 = vmul.f32 %v742, %v331
      %v774 = vmul.f32 %v746, %v331
      %v775 = vmul.f32 %v750, %v331
      %v776 = vmul.f32 %v754, %v331
      %v777 = vmul.f32 %v758, %v331
      %v778 = vmul.f32 %v762, %v331
      %v779 = vmul.f32 %v766, %v331
      %780 = vset.pattern.permute.xlu0 5
      %781 = vperm.xlu0 %780, %v256
      %v782 = vpop.permute.xlu0 %781
      %784 = vset.pattern.permute.xlu0 5
      %785 = vperm.xlu0 %784, %v257
      %v786 = vpop.permute.xlu0 %785
      %788 = vset.pattern.permute.xlu0 5
      %789 = vperm.xlu0 %788, %v258
      %v790 = vpop.permute.xlu0 %789
      %792 = vset.pattern.permute.xlu0 5
      %793 = vperm.xlu0 %792, %v259
      %v794 = vpop.permute.xlu0 %793
      %796 = vset.pattern.permute.xlu0 5
      %797 = vperm.xlu0 %796, %v260
      %v798 = vpop.permute.xlu0 %797
      %800 = vset.pattern.permute.xlu0 5
      %801 = vperm.xlu0 %800, %v261
      %v802 = vpop.permute.xlu0 %801
      %804 = vset.pattern.permute.xlu0 5
      %805 = vperm.xlu0 %804, %v262
      %v806 = vpop.permute.xlu0 %805
      %808 = vset.pattern.permute.xlu0 5
      %809 = vperm.xlu0 %808, %v263
      %v810 = vpop.permute.xlu0 %809
      %812 = vset.pattern.permute.xlu0 5
      %813 = vperm.xlu0 %812, %v264
      %v814 = vpop.permute.xlu0 %813
      %816 = vset.pattern.permute.xlu0 5
      %817 = vperm.xlu0 %816, %v265
      %v818 = vpop.permute.xlu0 %817
      %820 = vset.pattern.permute.xlu0 5
      %821 = vperm.xlu0 %820, %v266
      %v822 = vpop.permute.xlu0 %821
      %824 = vset.pattern.permute.xlu0 5
      %825 = vperm.xlu0 %824, %v267
      %v826 = vpop.permute.xlu0 %825
      %v828 = vmul.f32 %v782, %v395
      %v829 = vmul.f32 %v786, %v395
      %v830 = vmul.f32 %v790, %v395
      %v831 = vmul.f32 %v794, %v395
      %v832 = vmul.f32 %v798, %v395
      %v833 = vmul.f32 %v802, %v395
      %v834 = vmul.f32 %v806, %v395
      %v835 = vmul.f32 %v810, %v395
      %v836 = vmul.f32 %v814, %v395
      %v837 = vmul.f32 %v818, %v395
      %v838 = vmul.f32 %v822, %v395
      %v839 = vmul.f32 %v826, %v395
      %v840 = vadd.f32 %v768, %v828
      %v841 = vadd.f32 %v769, %v829
      %v842 = vadd.f32 %v770, %v830
      %v843 = vadd.f32 %v771, %v831
      %v844 = vadd.f32 %v772, %v832
      %v845 = vadd.f32 %v773, %v833
      %v846 = vadd.f32 %v774, %v834
      %v847 = vadd.f32 %v775, %v835
      %v848 = vadd.f32 %v776, %v836
      %v849 = vadd.f32 %v777, %v837
      %v850 = vadd.f32 %v778, %v838
      %v851 = vadd.f32 %v779, %v839
      %852 = vset.pattern.permute.xlu0 6
      %853 = vperm.xlu0 %852, %v256
      %v854 = vpop.permute.xlu0 %853
      %856 = vset.pattern.permute.xlu0 6
      %857 = vperm.xlu0 %856, %v257
      %v858 = vpop.permute.xlu0 %857
      %860 = vset.pattern.permute.xlu0 6
      %861 = vperm.xlu0 %860, %v258
      %v862 = vpop.permute.xlu0 %861
      %864 = vset.pattern.permute.xlu0 6
      %865 = vperm.xlu0 %864, %v259
      %v866 = vpop.permute.xlu0 %865
      %868 = vset.pattern.permute.xlu0 6
      %869 = vperm.xlu0 %868, %v260
      %v870 = vpop.permute.xlu0 %869
      %872 = vset.pattern.permute.xlu0 6
      %873 = vperm.xlu0 %872, %v261
      %v874 = vpop.permute.xlu0 %873
      %876 = vset.pattern.permute.xlu0 6
      %877 = vperm.xlu0 %876, %v262
      %v878 = vpop.permute.xlu0 %877
      %880 = vset.pattern.permute.xlu0 6
      %881 = vperm.xlu0 %880, %v263
      %v882 = vpop.permute.xlu0 %881
      %884 = vset.pattern.permute.xlu0 6
      %885 = vperm.xlu0 %884, %v264
      %v886 = vpop.permute.xlu0 %885
      %888 = vset.pattern.permute.xlu0 6
      %889 = vperm.xlu0 %888, %v265
      %v890 = vpop.permute.xlu0 %889
      %892 = vset.pattern.permute.xlu0 6
      %893 = vperm.xlu0 %892, %v266
      %v894 = vpop.permute.xlu0 %893
      %896 = vset.pattern.permute.xlu0 6
      %897 = vperm.xlu0 %896, %v267
      %v898 = vpop.permute.xlu0 %897
      %v900 = vmul.f32 %v854, %v471
      %v901 = vmul.f32 %v858, %v471
      %v902 = vmul.f32 %v862, %v471
      %v903 = vmul.f32 %v866, %v471
      %v904 = vmul.f32 %v870, %v471
      %v905 = vmul.f32 %v874, %v471
      %v906 = vmul.f32 %v878, %v471
      %v907 = vmul.f32 %v882, %v471
      %v908 = vmul.f32 %v886, %v471
      %v909 = vmul.f32 %v890, %v471
      %v910 = vmul.f32 %v894, %v471
      %v911 = vmul.f32 %v898, %v471
      %v912 = vadd.f32 %v840, %v900
      %v913 = vadd.f32 %v841, %v901
      %v914 = vadd.f32 %v842, %v902
      %v915 = vadd.f32 %v843, %v903
      %v916 = vadd.f32 %v844, %v904
      %v917 = vadd.f32 %v845, %v905
      %v918 = vadd.f32 %v846, %v906
      %v919 = vadd.f32 %v847, %v907
      %v920 = vadd.f32 %v848, %v908
      %v921 = vadd.f32 %v849, %v909
      %v922 = vadd.f32 %v850, %v910
      %v923 = vadd.f32 %v851, %v911
      %924 = vset.pattern.permute.xlu0 7
      %925 = vperm.xlu0 %924, %v256
      %v926 = vpop.permute.xlu0 %925
      %928 = vset.pattern.permute.xlu0 7
      %929 = vperm.xlu0 %928, %v257
      %v930 = vpop.permute.xlu0 %929
      %932 = vset.pattern.permute.xlu0 7
      %933 = vperm.xlu0 %932, %v258
      %v934 = vpop.permute.xlu0 %933
      %936 = vset.pattern.permute.xlu0 7
      %937 = vperm.xlu0 %936, %v259
      %v938 = vpop.permute.xlu0 %937
      %940 = vset.pattern.permute.xlu0 7
      %941 = vperm.xlu0 %940, %v260
      %v942 = vpop.permute.xlu0 %941
      %944 = vset.pattern.permute.xlu0 7
      %945 = vperm.xlu0 %944, %v261
      %v946 = vpop.permute.xlu0 %945
      %948 = vset.pattern.permute.xlu0 7
      %949 = vperm.xlu0 %948, %v262
      %v950 = vpop.permute.xlu0 %949
      %952 = vset.pattern.permute.xlu0 7
      %953 = vperm.xlu0 %952, %v263
      %v954 = vpop.permute.xlu0 %953
      %956 = vset.pattern.permute.xlu0 7
      %957 = vperm.xlu0 %956, %v264
      %v958 = vpop.permute.xlu0 %957
      %960 = vset.pattern.permute.xlu0 7
      %961 = vperm.xlu0 %960, %v265
      %v962 = vpop.permute.xlu0 %961
      %964 = vset.pattern.permute.xlu0 7
      %965 = vperm.xlu0 %964, %v266
      %v966 = vpop.permute.xlu0 %965
      %968 = vset.pattern.permute.xlu0 7
      %969 = vperm.xlu0 %968, %v267
      %v970 = vpop.permute.xlu0 %969
      %v972 = vmul.f32 %v926, %v547
      %v973 = vmul.f32 %v930, %v547
      %v974 = vmul.f32 %v934, %v547
      %v975 = vmul.f32 %v938, %v547
      %v976 = vmul.f32 %v942, %v547
      %v977 = vmul.f32 %v946, %v547
      %v978 = vmul.f32 %v950, %v547
      %v979 = vmul.f32 %v954, %v547
      %v980 = vmul.f32 %v958, %v547
      %v981 = vmul.f32 %v962, %v547
      %v982 = vmul.f32 %v966, %v547
      %v983 = vmul.f32 %v970, %v547
      %v984 = vadd.f32 %v912, %v972
      %v985 = vadd.f32 %v913, %v973
      %v986 = vadd.f32 %v914, %v974
      %v987 = vadd.f32 %v915, %v975
      %v988 = vadd.f32 %v916, %v976
      %v989 = vadd.f32 %v917, %v977
      %v990 = vadd.f32 %v918, %v978
      %v991 = vadd.f32 %v919, %v979
      %v992 = vadd.f32 %v920, %v980
      %v993 = vadd.f32 %v921, %v981
      %v994 = vadd.f32 %v922, %v982
      %v995 = vadd.f32 %v923, %v983
      %996 = vset.pattern.permute.xlu0 8
      %997 = vperm.xlu0 %996, %v256
      %v998 = vpop.permute.xlu0 %997
      %1000 = vset.pattern.permute.xlu0 8
      %1001 = vperm.xlu0 %1000, %v257
      %v1002 = vpop.permute.xlu0 %1001
      %1004 = vset.pattern.permute.xlu0 8
      %1005 = vperm.xlu0 %1004, %v258
      %v1006 = vpop.permute.xlu0 %1005
      %1008 = vset.pattern.permute.xlu0 8
      %1009 = vperm.xlu0 %1008, %v259
      %v1010 = vpop.permute.xlu0 %1009
      %1012 = vset.pattern.permute.xlu0 8
      %1013 = vperm.xlu0 %1012, %v260
      %v1014 = vpop.permute.xlu0 %1013
      %1016 = vset.pattern.permute.xlu0 8
      %1017 = vperm.xlu0 %1016, %v261
      %v1018 = vpop.permute.xlu0 %1017
      %1020 = vset.pattern.permute.xlu0 8
      %1021 = vperm.xlu0 %1020, %v262
      %v1022 = vpop.permute.xlu0 %1021
      %1024 = vset.pattern.permute.xlu0 8
      %1025 = vperm.xlu0 %1024, %v263
      %v1026 = vpop.permute.xlu0 %1025
      %1028 = vset.pattern.permute.xlu0 8
      %1029 = vperm.xlu0 %1028, %v264
      %v1030 = vpop.permute.xlu0 %1029
      %1032 = vset.pattern.permute.xlu0 8
      %1033 = vperm.xlu0 %1032, %v265
      %v1034 = vpop.permute.xlu0 %1033
      %1036 = vset.pattern.permute.xlu0 8
      %1037 = vperm.xlu0 %1036, %v266
      %v1038 = vpop.permute.xlu0 %1037
      %1040 = vset.pattern.permute.xlu0 8
      %1041 = vperm.xlu0 %1040, %v267
      %v1042 = vpop.permute.xlu0 %1041
      %v1044 = vmul.f32 %v998, %v623
      %v1045 = vmul.f32 %v1002, %v623
      %v1046 = vmul.f32 %v1006, %v623
      %v1047 = vmul.f32 %v1010, %v623
      %v1048 = vmul.f32 %v1014, %v623
      %v1049 = vmul.f32 %v1018, %v623
      %v1050 = vmul.f32 %v1022, %v623
      %v1051 = vmul.f32 %v1026, %v623
      %v1052 = vmul.f32 %v1030, %v623
      %v1053 = vmul.f32 %v1034, %v623
      %v1054 = vmul.f32 %v1038, %v623
      %v1055 = vmul.f32 %v1042, %v623
      %v1056 = vadd.f32 %v984, %v1044
      %v1057 = vadd.f32 %v985, %v1045
      %v1058 = vadd.f32 %v986, %v1046
      %v1059 = vadd.f32 %v987, %v1047
      %v1060 = vadd.f32 %v988, %v1048
      %v1061 = vadd.f32 %v989, %v1049
      %v1062 = vadd.f32 %v990, %v1050
      %v1063 = vadd.f32 %v991, %v1051
      %v1064 = vadd.f32 %v992, %v1052
      %v1065 = vadd.f32 %v993, %v1053
      %v1066 = vadd.f32 %v994, %v1054
      %v1067 = vadd.f32 %v995, %v1055
      %v1068 = vmax.f32 %v1056, 0.0
      %v1069 = vmax.f32 %v1057, 0.0
      %v1070 = vmax.f32 %v1058, 0.0
      %v1071 = vmax.f32 %v1059, 0.0
      %v1072 = vmax.f32 %v1060, 0.0
      %v1073 = vmax.f32 %v1061, 0.0
      %v1074 = vmax.f32 %v1062, 0.0
      %v1075 = vmax.f32 %v1063, 0.0
      %v1076 = vmax.f32 %v1064, 0.0
      %v1077 = vmax.f32 %v1065, 0.0
      %v1078 = vmax.f32 %v1066, 0.0
      %v1079 = vmax.f32 %v1067, 0.0
      %v1080 = vpack.c.bf16 %v1069, %v1068
      %v1081 = vpack.c.bf16 %v1071, %v1070
      %v1082 = vpack.c.bf16 %v1073, %v1072
      %v1083 = vpack.c.bf16 %v1075, %v1074
      %v1084 = vpack.c.bf16 %v1077, %v1076
      %v1085 = vpack.c.bf16 %v1079, %v1078
      %v1092 = vunpack.c.l.b16 %v1080
      %v1093 = vunpack.c.h.b16 %v1080
      %v1094 = vunpack.c.l.b16 %v1081
      %v1095 = vunpack.c.h.b16 %v1081
      %v1096 = vunpack.c.l.b16 %v1082
      %v1097 = vunpack.c.h.b16 %v1082
      %v1098 = vunpack.c.l.b16 %v1083
      %v1099 = vunpack.c.h.b16 %v1083
      %v1100 = vunpack.c.l.b16 %v1084
      %v1101 = vunpack.c.h.b16 %v1084
      %v1102 = vunpack.c.l.b16 %v1085
      %v1103 = vunpack.c.h.b16 %v1085
      %v1104 = vpack.c.b16 %v1092, %v1092
      %v1105 = vpack.c.b16 %v1093, %v1093
      %v1106 = vpack.c.b16 %v1094, %v1094
      %v1107 = vpack.c.b16 %v1095, %v1095
      %v1108 = vpack.c.b16 %v1096, %v1096
      %v1109 = vpack.c.b16 %v1097, %v1097
      %v1110 = vpack.c.b16 %v1098, %v1098
      %v1111 = vpack.c.b16 %v1099, %v1099
      %v1112 = vpack.c.b16 %v1100, %v1100
      %v1113 = vpack.c.b16 %v1101, %v1101
      %v1114 = vpack.c.b16 %v1102, %v1102
      %v1115 = vpack.c.b16 %v1103, %v1103
      %s1128 = scalar_lea.vmem [#allocation2], 56
      %1129 = vst [vmem:[%s1128] sm:$0xf] %v1104
      %1130 = vst [vmem:[%s1128 + $0x4] sm:$0xf] %v1105
      %1131 = vst [vmem:[%s1128 + $0x8] sm:$0xf] %v1106
      %1132 = vst [vmem:[%s1128 + $0xc] sm:$0xf] %v1107
      %1133 = vst [vmem:[%s1128 + $0x10] sm:$0xf] %v1108
      %1134 = vst [vmem:[%s1128 + $0x14] sm:$0xf] %v1109
      %1135 = vst [vmem:[%s1128 + $0x18] sm:$0xf] %v1110
      %1136 = vst [vmem:[%s1128 + $0x1c] sm:$0xf] %v1111
      %1137 = vst [vmem:[%s1128 + $0x20] sm:$0xf] %v1112
      %1138 = vst [vmem:[%s1128 + $0x24] sm:$0xf] %v1113
      %1139 = vst [vmem:[%s1128 + $0x28] sm:$0xf] %v1114
      %1140 = vst [vmem:[%s1128 + $0x2c] sm:$0xf] %v1115
      %1141 = vset.pattern.permute.xlu0 14
      %1142 = vperm.xlu0 %1141, %v256
      %v1143 = vpop.permute.xlu0 %1142
      %1145 = vset.pattern.permute.xlu0 14
      %1146 = vperm.xlu0 %1145, %v257
      %v1147 = vpop.permute.xlu0 %1146
      %1149 = vset.pattern.permute.xlu0 14
      %1150 = vperm.xlu0 %1149, %v258
      %v1151 = vpop.permute.xlu0 %1150
      %1153 = vset.pattern.permute.xlu0 14
      %1154 = vperm.xlu0 %1153, %v259
      %v1155 = vpop.permute.xlu0 %1154
      %1157 = vset.pattern.permute.xlu0 14
      %1158 = vperm.xlu0 %1157, %v260
      %v1159 = vpop.permute.xlu0 %1158
      %1161 = vset.pattern.permute.xlu0 14
      %1162 = vperm.xlu0 %1161, %v261
      %v1163 = vpop.permute.xlu0 %1162
      %1165 = vset.pattern.permute.xlu0 14
      %1166 = vperm.xlu0 %1165, %v262
      %v1167 = vpop.permute.xlu0 %1166
      %1169 = vset.pattern.permute.xlu0 14
      %1170 = vperm.xlu0 %1169, %v263
      %v1171 = vpop.permute.xlu0 %1170
      %1173 = vset.pattern.permute.xlu0 14
      %1174 = vperm.xlu0 %1173, %v264
      %v1175 = vpop.permute.xlu0 %1174
      %1177 = vset.pattern.permute.xlu0 14
      %1178 = vperm.xlu0 %1177, %v265
      %v1179 = vpop.permute.xlu0 %1178
      %1181 = vset.pattern.permute.xlu0 14
      %1182 = vperm.xlu0 %1181, %v266
      %v1183 = vpop.permute.xlu0 %1182
      %1185 = vset.pattern.permute.xlu0 14
      %1186 = vperm.xlu0 %1185, %v267
      %v1187 = vpop.permute.xlu0 %1186
      %v1189 = vmul.f32 %v1143, %v331
      %v1190 = vmul.f32 %v1147, %v331
      %v1191 = vmul.f32 %v1151, %v331
      %v1192 = vmul.f32 %v1155, %v331
      %v1193 = vmul.f32 %v1159, %v331
      %v1194 = vmul.f32 %v1163, %v331
      %v1195 = vmul.f32 %v1167, %v331
      %v1196 = vmul.f32 %v1171, %v331
      %v1197 = vmul.f32 %v1175, %v331
      %v1198 = vmul.f32 %v1179, %v331
      %v1199 = vmul.f32 %v1183, %v331
      %v1200 = vmul.f32 %v1187, %v331
      %1201 = vset.pattern.permute.xlu0 10
      %1202 = vperm.xlu0 %1201, %v256
      %v1203 = vpop.permute.xlu0 %1202
      %1205 = vset.pattern.permute.xlu0 10
      %1206 = vperm.xlu0 %1205, %v257
      %v1207 = vpop.permute.xlu0 %1206
      %1209 = vset.pattern.permute.xlu0 10
      %1210 = vperm.xlu0 %1209, %v258
      %v1211 = vpop.permute.xlu0 %1210
      %1213 = vset.pattern.permute.xlu0 10
      %1214 = vperm.xlu0 %1213, %v259
      %v1215 = vpop.permute.xlu0 %1214
      %1217 = vset.pattern.permute.xlu0 10
      %1218 = vperm.xlu0 %1217, %v260
      %v1219 = vpop.permute.xlu0 %1218
      %1221 = vset.pattern.permute.xlu0 10
      %1222 = vperm.xlu0 %1221, %v261
      %v1223 = vpop.permute.xlu0 %1222
      %1225 = vset.pattern.permute.xlu0 10
      %1226 = vperm.xlu0 %1225, %v262
      %v1227 = vpop.permute.xlu0 %1226
      %1229 = vset.pattern.permute.xlu0 10
      %1230 = vperm.xlu0 %1229, %v263
      %v1231 = vpop.permute.xlu0 %1230
      %1233 = vset.pattern.permute.xlu0 10
      %1234 = vperm.xlu0 %1233, %v264
      %v1235 = vpop.permute.xlu0 %1234
      %1237 = vset.pattern.permute.xlu0 10
      %1238 = vperm.xlu0 %1237, %v265
      %v1239 = vpop.permute.xlu0 %1238
      %1241 = vset.pattern.permute.xlu0 10
      %1242 = vperm.xlu0 %1241, %v266
      %v1243 = vpop.permute.xlu0 %1242
      %1245 = vset.pattern.permute.xlu0 10
      %1246 = vperm.xlu0 %1245, %v267
      %v1247 = vpop.permute.xlu0 %1246
      %v1249 = vmul.f32 %v1203, %v395
      %v1250 = vmul.f32 %v1207, %v395
      %v1251 = vmul.f32 %v1211, %v395
      %v1252 = vmul.f32 %v1215, %v395
      %v1253 = vmul.f32 %v1219, %v395
      %v1254 = vmul.f32 %v1223, %v395
      %v1255 = vmul.f32 %v1227, %v395
      %v1256 = vmul.f32 %v1231, %v395
      %v1257 = vmul.f32 %v1235, %v395
      %v1258 = vmul.f32 %v1239, %v395
      %v1259 = vmul.f32 %v1243, %v395
      %v1260 = vmul.f32 %v1247, %v395
      %v1261 = vadd.f32 %v1189, %v1249
      %v1262 = vadd.f32 %v1190, %v1250
      %v1263 = vadd.f32 %v1191, %v1251
      %v1264 = vadd.f32 %v1192, %v1252
      %v1265 = vadd.f32 %v1193, %v1253
      %v1266 = vadd.f32 %v1194, %v1254
      %v1267 = vadd.f32 %v1195, %v1255
      %v1268 = vadd.f32 %v1196, %v1256
      %v1269 = vadd.f32 %v1197, %v1257
      %v1270 = vadd.f32 %v1198, %v1258
      %v1271 = vadd.f32 %v1199, %v1259
      %v1272 = vadd.f32 %v1200, %v1260
      %1273 = vset.pattern.permute.xlu0 11
      %1274 = vperm.xlu0 %1273, %v256
      %v1275 = vpop.permute.xlu0 %1274
      %1277 = vset.pattern.permute.xlu0 11
      %1278 = vperm.xlu0 %1277, %v257
      %v1279 = vpop.permute.xlu0 %1278
      %1281 = vset.pattern.permute.xlu0 11
      %1282 = vperm.xlu0 %1281, %v258
      %v1283 = vpop.permute.xlu0 %1282
      %1285 = vset.pattern.permute.xlu0 11
      %1286 = vperm.xlu0 %1285, %v259
      %v1287 = vpop.permute.xlu0 %1286
      %1289 = vset.pattern.permute.xlu0 11
      %1290 = vperm.xlu0 %1289, %v260
      %v1291 = vpop.permute.xlu0 %1290
      %1293 = vset.pattern.permute.xlu0 11
      %1294 = vperm.xlu0 %1293, %v261
      %v1295 = vpop.permute.xlu0 %1294
      %1297 = vset.pattern.permute.xlu0 11
      %1298 = vperm.xlu0 %1297, %v262
      %v1299 = vpop.permute.xlu0 %1298
      %1301 = vset.pattern.permute.xlu0 11
      %1302 = vperm.xlu0 %1301, %v263
      %v1303 = vpop.permute.xlu0 %1302
      %1305 = vset.pattern.permute.xlu0 11
      %1306 = vperm.xlu0 %1305, %v264
      %v1307 = vpop.permute.xlu0 %1306
      %1309 = vset.pattern.permute.xlu0 11
      %1310 = vperm.xlu0 %1309, %v265
      %v1311 = vpop.permute.xlu0 %1310
      %1313 = vset.pattern.permute.xlu0 11
      %1314 = vperm.xlu0 %1313, %v266
      %v1315 = vpop.permute.xlu0 %1314
      %1317 = vset.pattern.permute.xlu0 11
      %1318 = vperm.xlu0 %1317, %v267
      %v1319 = vpop.permute.xlu0 %1318
      %v1321 = vmul.f32 %v1275, %v471
      %v1322 = vmul.f32 %v1279, %v471
      %v1323 = vmul.f32 %v1283, %v471
      %v1324 = vmul.f32 %v1287, %v471
      %v1325 = vmul.f32 %v1291, %v471
      %v1326 = vmul.f32 %v1295, %v471
      %v1327 = vmul.f32 %v1299, %v471
      %v1328 = vmul.f32 %v1303, %v471
      %v1329 = vmul.f32 %v1307, %v471
      %v1330 = vmul.f32 %v1311, %v471
      %v1331 = vmul.f32 %v1315, %v471
      %v1332 = vmul.f32 %v1319, %v471
      %v1333 = vadd.f32 %v1261, %v1321
      %v1334 = vadd.f32 %v1262, %v1322
      %v1335 = vadd.f32 %v1263, %v1323
      %v1336 = vadd.f32 %v1264, %v1324
      %v1337 = vadd.f32 %v1265, %v1325
      %v1338 = vadd.f32 %v1266, %v1326
      %v1339 = vadd.f32 %v1267, %v1327
      %v1340 = vadd.f32 %v1268, %v1328
      %v1341 = vadd.f32 %v1269, %v1329
      %v1342 = vadd.f32 %v1270, %v1330
      %v1343 = vadd.f32 %v1271, %v1331
      %v1344 = vadd.f32 %v1272, %v1332
      %1345 = vset.pattern.permute.xlu0 12
      %1346 = vperm.xlu0 %1345, %v256
      %v1347 = vpop.permute.xlu0 %1346
      %1349 = vset.pattern.permute.xlu0 12
      %1350 = vperm.xlu0 %1349, %v257
      %v1351 = vpop.permute.xlu0 %1350
      %1353 = vset.pattern.permute.xlu0 12
      %1354 = vperm.xlu0 %1353, %v258
      %v1355 = vpop.permute.xlu0 %1354
      %1357 = vset.pattern.permute.xlu0 12
      %1358 = vperm.xlu0 %1357, %v259
      %v1359 = vpop.permute.xlu0 %1358
      %1361 = vset.pattern.permute.xlu0 12
      %1362 = vperm.xlu0 %1361, %v260
      %v1363 = vpop.permute.xlu0 %1362
      %1365 = vset.pattern.permute.xlu0 12
      %1366 = vperm.xlu0 %1365, %v261
      %v1367 = vpop.permute.xlu0 %1366
      %1369 = vset.pattern.permute.xlu0 12
      %1370 = vperm.xlu0 %1369, %v262
      %v1371 = vpop.permute.xlu0 %1370
      %1373 = vset.pattern.permute.xlu0 12
      %1374 = vperm.xlu0 %1373, %v263
      %v1375 = vpop.permute.xlu0 %1374
      %1377 = vset.pattern.permute.xlu0 12
      %1378 = vperm.xlu0 %1377, %v264
      %v1379 = vpop.permute.xlu0 %1378
      %1381 = vset.pattern.permute.xlu0 12
      %1382 = vperm.xlu0 %1381, %v265
      %v1383 = vpop.permute.xlu0 %1382
      %1385 = vset.pattern.permute.xlu0 12
      %1386 = vperm.xlu0 %1385, %v266
      %v1387 = vpop.permute.xlu0 %1386
      %1389 = vset.pattern.permute.xlu0 12
      %1390 = vperm.xlu0 %1389, %v267
      %v1391 = vpop.permute.xlu0 %1390
      %v1393 = vmul.f32 %v1347, %v547
      %v1394 = vmul.f32 %v1351, %v547
      %v1395 = vmul.f32 %v1355, %v547
      %v1396 = vmul.f32 %v1359, %v547
      %v1397 = vmul.f32 %v1363, %v547
      %v1398 = vmul.f32 %v1367, %v547
      %v1399 = vmul.f32 %v1371, %v547
      %v1400 = vmul.f32 %v1375, %v547
      %v1401 = vmul.f32 %v1379, %v547
      %v1402 = vmul.f32 %v1383, %v547
      %v1403 = vmul.f32 %v1387, %v547
      %v1404 = vmul.f32 %v1391, %v547
      %v1405 = vadd.f32 %v1333, %v1393
      %v1406 = vadd.f32 %v1334, %v1394
      %v1407 = vadd.f32 %v1335, %v1395
      %v1408 = vadd.f32 %v1336, %v1396
      %v1409 = vadd.f32 %v1337, %v1397
      %v1410 = vadd.f32 %v1338, %v1398
      %v1411 = vadd.f32 %v1339, %v1399
      %v1412 = vadd.f32 %v1340, %v1400
      %v1413 = vadd.f32 %v1341, %v1401
      %v1414 = vadd.f32 %v1342, %v1402
      %v1415 = vadd.f32 %v1343, %v1403
      %v1416 = vadd.f32 %v1344, %v1404
      %1417 = vset.pattern.permute.xlu0 13
      %1418 = vperm.xlu0 %1417, %v256
      %v1419 = vpop.permute.xlu0 %1418
      %1421 = vset.pattern.permute.xlu0 13
      %1422 = vperm.xlu0 %1421, %v257
      %v1423 = vpop.permute.xlu0 %1422
      %1425 = vset.pattern.permute.xlu0 13
      %1426 = vperm.xlu0 %1425, %v258
      %v1427 = vpop.permute.xlu0 %1426
      %1429 = vset.pattern.permute.xlu0 13
      %1430 = vperm.xlu0 %1429, %v259
      %v1431 = vpop.permute.xlu0 %1430
      %1433 = vset.pattern.permute.xlu0 13
      %1434 = vperm.xlu0 %1433, %v260
      %v1435 = vpop.permute.xlu0 %1434
      %1437 = vset.pattern.permute.xlu0 13
      %1438 = vperm.xlu0 %1437, %v261
      %v1439 = vpop.permute.xlu0 %1438
      %1441 = vset.pattern.permute.xlu0 13
      %1442 = vperm.xlu0 %1441, %v262
      %v1443 = vpop.permute.xlu0 %1442
      %1445 = vset.pattern.permute.xlu0 13
      %1446 = vperm.xlu0 %1445, %v263
      %v1447 = vpop.permute.xlu0 %1446
      %1449 = vset.pattern.permute.xlu0 13
      %1450 = vperm.xlu0 %1449, %v264
      %v1451 = vpop.permute.xlu0 %1450
      %1453 = vset.pattern.permute.xlu0 13
      %1454 = vperm.xlu0 %1453, %v265
      %v1455 = vpop.permute.xlu0 %1454
      %1457 = vset.pattern.permute.xlu0 13
      %1458 = vperm.xlu0 %1457, %v266
      %v1459 = vpop.permute.xlu0 %1458
      %1461 = vset.pattern.permute.xlu0 13
      %1462 = vperm.xlu0 %1461, %v267
      %v1463 = vpop.permute.xlu0 %1462
      %v1465 = vmul.f32 %v1419, %v623
      %v1466 = vmul.f32 %v1423, %v623
      %v1467 = vmul.f32 %v1427, %v623
      %v1468 = vmul.f32 %v1431, %v623
      %v1469 = vmul.f32 %v1435, %v623
      %v1470 = vmul.f32 %v1439, %v623
      %v1471 = vmul.f32 %v1443, %v623
      %v1472 = vmul.f32 %v1447, %v623
      %v1473 = vmul.f32 %v1451, %v623
      %v1474 = vmul.f32 %v1455, %v623
      %v1475 = vmul.f32 %v1459, %v623
      %v1476 = vmul.f32 %v1463, %v623
      %v1477 = vadd.f32 %v1405, %v1465
      %v1478 = vadd.f32 %v1406, %v1466
      %v1479 = vadd.f32 %v1407, %v1467
      %v1480 = vadd.f32 %v1408, %v1468
      %v1481 = vadd.f32 %v1409, %v1469
      %v1482 = vadd.f32 %v1410, %v1470
      %v1483 = vadd.f32 %v1411, %v1471
      %v1484 = vadd.f32 %v1412, %v1472
      %v1485 = vadd.f32 %v1413, %v1473
      %v1486 = vadd.f32 %v1414, %v1474
      %v1487 = vadd.f32 %v1415, %v1475
      %v1488 = vadd.f32 %v1416, %v1476
      %v1489 = vmax.f32 %v1477, 0.0
      %v1490 = vmax.f32 %v1478, 0.0
      %v1491 = vmax.f32 %v1479, 0.0
      %v1492 = vmax.f32 %v1480, 0.0
      %v1493 = vmax.f32 %v1481, 0.0
      %v1494 = vmax.f32 %v1482, 0.0
      %v1495 = vmax.f32 %v1483, 0.0
      %v1496 = vmax.f32 %v1484, 0.0
      %v1497 = vmax.f32 %v1485, 0.0
      %v1498 = vmax.f32 %v1486, 0.0
      %v1499 = vmax.f32 %v1487, 0.0
      %v1500 = vmax.f32 %v1488, 0.0
      %v1501 = vpack.c.bf16 %v1490, %v1489
      %v1502 = vpack.c.bf16 %v1492, %v1491
      %v1503 = vpack.c.bf16 %v1494, %v1493
      %v1504 = vpack.c.bf16 %v1496, %v1495
      %v1505 = vpack.c.bf16 %v1498, %v1497
      %v1506 = vpack.c.bf16 %v1500, %v1499
      %v1513 = vunpack.c.l.b16 %v1501
      %v1514 = vunpack.c.h.b16 %v1501
      %v1515 = vunpack.c.l.b16 %v1502
      %v1516 = vunpack.c.h.b16 %v1502
      %v1517 = vunpack.c.l.b16 %v1503
      %v1518 = vunpack.c.h.b16 %v1503
      %v1519 = vunpack.c.l.b16 %v1504
      %v1520 = vunpack.c.h.b16 %v1504
      %v1521 = vunpack.c.l.b16 %v1505
      %v1522 = vunpack.c.h.b16 %v1505
      %v1523 = vunpack.c.l.b16 %v1506
      %v1524 = vunpack.c.h.b16 %v1506
      %v1525 = vpack.c.b16 %v1513, %v1513
      %v1526 = vpack.c.b16 %v1514, %v1514
      %v1527 = vpack.c.b16 %v1515, %v1515
      %v1528 = vpack.c.b16 %v1516, %v1516
      %v1529 = vpack.c.b16 %v1517, %v1517
      %v1530 = vpack.c.b16 %v1518, %v1518
      %v1531 = vpack.c.b16 %v1519, %v1519
      %v1532 = vpack.c.b16 %v1520, %v1520
      %v1533 = vpack.c.b16 %v1521, %v1521
      %v1534 = vpack.c.b16 %v1522, %v1522
      %v1535 = vpack.c.b16 %v1523, %v1523
      %v1536 = vpack.c.b16 %v1524, %v1524
      %s1549 = scalar_lea.vmem [#allocation2], 112
      %1550 = vst [vmem:[%s1549] sm:$0xf] %v1525
      %1551 = vst [vmem:[%s1549 + $0x4] sm:$0xf] %v1526
      %1552 = vst [vmem:[%s1549 + $0x8] sm:$0xf] %v1527
      %1553 = vst [vmem:[%s1549 + $0xc] sm:$0xf] %v1528
      %1554 = vst [vmem:[%s1549 + $0x10] sm:$0xf] %v1529
      %1555 = vst [vmem:[%s1549 + $0x14] sm:$0xf] %v1530
      %1556 = vst [vmem:[%s1549 + $0x18] sm:$0xf] %v1531
      %1557 = vst [vmem:[%s1549 + $0x1c] sm:$0xf] %v1532
      %1558 = vst [vmem:[%s1549 + $0x20] sm:$0xf] %v1533
      %1559 = vst [vmem:[%s1549 + $0x24] sm:$0xf] %v1534
      %1560 = vst [vmem:[%s1549 + $0x28] sm:$0xf] %v1535
      %1561 = vst [vmem:[%s1549 + $0x2c] sm:$0xf] %v1536
      %1562 = vset.pattern.permute.xlu0 19
      %1563 = vperm.xlu0 %1562, %v256
      %v1564 = vpop.permute.xlu0 %1563
      %1566 = vset.pattern.permute.xlu0 19
      %1567 = vperm.xlu0 %1566, %v257
      %v1568 = vpop.permute.xlu0 %1567
      %1570 = vset.pattern.permute.xlu0 19
      %1571 = vperm.xlu0 %1570, %v258
      %v1572 = vpop.permute.xlu0 %1571
      %1574 = vset.pattern.permute.xlu0 19
      %1575 = vperm.xlu0 %1574, %v259
      %v1576 = vpop.permute.xlu0 %1575
      %1578 = vset.pattern.permute.xlu0 19
      %1579 = vperm.xlu0 %1578, %v260
      %v1580 = vpop.permute.xlu0 %1579
      %1582 = vset.pattern.permute.xlu0 19
      %1583 = vperm.xlu0 %1582, %v261
      %v1584 = vpop.permute.xlu0 %1583
      %1586 = vset.pattern.permute.xlu0 19
      %1587 = vperm.xlu0 %1586, %v262
      %v1588 = vpop.permute.xlu0 %1587
      %1590 = vset.pattern.permute.xlu0 19
      %1591 = vperm.xlu0 %1590, %v263
      %v1592 = vpop.permute.xlu0 %1591
      %1594 = vset.pattern.permute.xlu0 19
      %1595 = vperm.xlu0 %1594, %v264
      %v1596 = vpop.permute.xlu0 %1595
      %1598 = vset.pattern.permute.xlu0 19
      %1599 = vperm.xlu0 %1598, %v265
      %v1600 = vpop.permute.xlu0 %1599
      %1602 = vset.pattern.permute.xlu0 19
      %1603 = vperm.xlu0 %1602, %v266
      %v1604 = vpop.permute.xlu0 %1603
      %1606 = vset.pattern.permute.xlu0 19
      %1607 = vperm.xlu0 %1606, %v267
      %v1608 = vpop.permute.xlu0 %1607
      %v1610 = vmul.f32 %v1564, %v331
      %v1611 = vmul.f32 %v1568, %v331
      %v1612 = vmul.f32 %v1572, %v331
      %v1613 = vmul.f32 %v1576, %v331
      %v1614 = vmul.f32 %v1580, %v331
      %v1615 = vmul.f32 %v1584, %v331
      %v1616 = vmul.f32 %v1588, %v331
      %v1617 = vmul.f32 %v1592, %v331
      %v1618 = vmul.f32 %v1596, %v331
      %v1619 = vmul.f32 %v1600, %v331
      %v1620 = vmul.f32 %v1604, %v331
      %v1621 = vmul.f32 %v1608, %v331
      %1622 = vset.pattern.permute.xlu0 15
      %1623 = vperm.xlu0 %1622, %v256
      %v1624 = vpop.permute.xlu0 %1623
      %1626 = vset.pattern.permute.xlu0 15
      %1627 = vperm.xlu0 %1626, %v257
      %v1628 = vpop.permute.xlu0 %1627
      %1630 = vset.pattern.permute.xlu0 15
      %1631 = vperm.xlu0 %1630, %v258
      %v1632 = vpop.permute.xlu0 %1631
      %1634 = vset.pattern.permute.xlu0 15
      %1635 = vperm.xlu0 %1634, %v259
      %v1636 = vpop.permute.xlu0 %1635
      %1638 = vset.pattern.permute.xlu0 15
      %1639 = vperm.xlu0 %1638, %v260
      %v1640 = vpop.permute.xlu0 %1639
      %1642 = vset.pattern.permute.xlu0 15
      %1643 = vperm.xlu0 %1642, %v261
      %v1644 = vpop.permute.xlu0 %1643
      %1646 = vset.pattern.permute.xlu0 15
      %1647 = vperm.xlu0 %1646, %v262
      %v1648 = vpop.permute.xlu0 %1647
      %1650 = vset.pattern.permute.xlu0 15
      %1651 = vperm.xlu0 %1650, %v263
      %v1652 = vpop.permute.xlu0 %1651
      %1654 = vset.pattern.permute.xlu0 15
      %1655 = vperm.xlu0 %1654, %v264
      %v1656 = vpop.permute.xlu0 %1655
      %1658 = vset.pattern.permute.xlu0 15
      %1659 = vperm.xlu0 %1658, %v265
      %v1660 = vpop.permute.xlu0 %1659
      %1662 = vset.pattern.permute.xlu0 15
      %1663 = vperm.xlu0 %1662, %v266
      %v1664 = vpop.permute.xlu0 %1663
      %1666 = vset.pattern.permute.xlu0 15
      %1667 = vperm.xlu0 %1666, %v267
      %v1668 = vpop.permute.xlu0 %1667
      %v1670 = vmul.f32 %v1624, %v395
      %v1671 = vmul.f32 %v1628, %v395
      %v1672 = vmul.f32 %v1632, %v395
      %v1673 = vmul.f32 %v1636, %v395
      %v1674 = vmul.f32 %v1640, %v395
      %v1675 = vmul.f32 %v1644, %v395
      %v1676 = vmul.f32 %v1648, %v395
      %v1677 = vmul.f32 %v1652, %v395
      %v1678 = vmul.f32 %v1656, %v395
      %v1679 = vmul.f32 %v1660, %v395
      %v1680 = vmul.f32 %v1664, %v395
      %v1681 = vmul.f32 %v1668, %v395
      %v1682 = vadd.f32 %v1610, %v1670
      %v1683 = vadd.f32 %v1611, %v1671
      %v1684 = vadd.f32 %v1612, %v1672
      %v1685 = vadd.f32 %v1613, %v1673
      %v1686 = vadd.f32 %v1614, %v1674
      %v1687 = vadd.f32 %v1615, %v1675
      %v1688 = vadd.f32 %v1616, %v1676
      %v1689 = vadd.f32 %v1617, %v1677
      %v1690 = vadd.f32 %v1618, %v1678
      %v1691 = vadd.f32 %v1619, %v1679
      %v1692 = vadd.f32 %v1620, %v1680
      %v1693 = vadd.f32 %v1621, %v1681
      %1694 = vset.pattern.permute.xlu0 16
      %1695 = vperm.xlu0 %1694, %v256
      %v1696 = vpop.permute.xlu0 %1695
      %1698 = vset.pattern.permute.xlu0 16
      %1699 = vperm.xlu0 %1698, %v257
      %v1700 = vpop.permute.xlu0 %1699
      %1702 = vset.pattern.permute.xlu0 16
      %1703 = vperm.xlu0 %1702, %v258
      %v1704 = vpop.permute.xlu0 %1703
      %1706 = vset.pattern.permute.xlu0 16
      %1707 = vperm.xlu0 %1706, %v259
      %v1708 = vpop.permute.xlu0 %1707
      %1710 = vset.pattern.permute.xlu0 16
      %1711 = vperm.xlu0 %1710, %v260
      %v1712 = vpop.permute.xlu0 %1711
      %1714 = vset.pattern.permute.xlu0 16
      %1715 = vperm.xlu0 %1714, %v261
      %v1716 = vpop.permute.xlu0 %1715
      %1718 = vset.pattern.permute.xlu0 16
      %1719 = vperm.xlu0 %1718, %v262
      %v1720 = vpop.permute.xlu0 %1719
      %1722 = vset.pattern.permute.xlu0 16
      %1723 = vperm.xlu0 %1722, %v263
      %v1724 = vpop.permute.xlu0 %1723
      %1726 = vset.pattern.permute.xlu0 16
      %1727 = vperm.xlu0 %1726, %v264
      %v1728 = vpop.permute.xlu0 %1727
      %1730 = vset.pattern.permute.xlu0 16
      %1731 = vperm.xlu0 %1730, %v265
      %v1732 = vpop.permute.xlu0 %1731
      %1734 = vset.pattern.permute.xlu0 16
      %1735 = vperm.xlu0 %1734, %v266
      %v1736 = vpop.permute.xlu0 %1735
      %1738 = vset.pattern.permute.xlu0 16
      %1739 = vperm.xlu0 %1738, %v267
      %v1740 = vpop.permute.xlu0 %1739
      %v1742 = vmul.f32 %v1696, %v471
      %v1743 = vmul.f32 %v1700, %v471
      %v1744 = vmul.f32 %v1704, %v471
      %v1745 = vmul.f32 %v1708, %v471
      %v1746 = vmul.f32 %v1712, %v471
      %v1747 = vmul.f32 %v1716, %v471
      %v1748 = vmul.f32 %v1720, %v471
      %v1749 = vmul.f32 %v1724, %v471
      %v1750 = vmul.f32 %v1728, %v471
      %v1751 = vmul.f32 %v1732, %v471
      %v1752 = vmul.f32 %v1736, %v471
      %v1753 = vmul.f32 %v1740, %v471
      %v1754 = vadd.f32 %v1682, %v1742
      %v1755 = vadd.f32 %v1683, %v1743
      %v1756 = vadd.f32 %v1684, %v1744
      %v1757 = vadd.f32 %v1685, %v1745
      %v1758 = vadd.f32 %v1686, %v1746
      %v1759 = vadd.f32 %v1687, %v1747
      %v1760 = vadd.f32 %v1688, %v1748
      %v1761 = vadd.f32 %v1689, %v1749
      %v1762 = vadd.f32 %v1690, %v1750
      %v1763 = vadd.f32 %v1691, %v1751
      %v1764 = vadd.f32 %v1692, %v1752
      %v1765 = vadd.f32 %v1693, %v1753
      %1766 = vset.pattern.permute.xlu0 17
      %1767 = vperm.xlu0 %1766, %v256
      %v1768 = vpop.permute.xlu0 %1767
      %1770 = vset.pattern.permute.xlu0 17
      %1771 = vperm.xlu0 %1770, %v257
      %v1772 = vpop.permute.xlu0 %1771
      %1774 = vset.pattern.permute.xlu0 17
      %1775 = vperm.xlu0 %1774, %v258
      %v1776 = vpop.permute.xlu0 %1775
      %1778 = vset.pattern.permute.xlu0 17
      %1779 = vperm.xlu0 %1778, %v259
      %v1780 = vpop.permute.xlu0 %1779
      %1782 = vset.pattern.permute.xlu0 17
      %1783 = vperm.xlu0 %1782, %v260
      %v1784 = vpop.permute.xlu0 %1783
      %1786 = vset.pattern.permute.xlu0 17
      %1787 = vperm.xlu0 %1786, %v261
      %v1788 = vpop.permute.xlu0 %1787
      %1790 = vset.pattern.permute.xlu0 17
      %1791 = vperm.xlu0 %1790, %v262
      %v1792 = vpop.permute.xlu0 %1791
      %1794 = vset.pattern.permute.xlu0 17
      %1795 = vperm.xlu0 %1794, %v263
      %v1796 = vpop.permute.xlu0 %1795
      %1798 = vset.pattern.permute.xlu0 17
      %1799 = vperm.xlu0 %1798, %v264
      %v1800 = vpop.permute.xlu0 %1799
      %1802 = vset.pattern.permute.xlu0 17
      %1803 = vperm.xlu0 %1802, %v265
      %v1804 = vpop.permute.xlu0 %1803
      %1806 = vset.pattern.permute.xlu0 17
      %1807 = vperm.xlu0 %1806, %v266
      %v1808 = vpop.permute.xlu0 %1807
      %1810 = vset.pattern.permute.xlu0 17
      %1811 = vperm.xlu0 %1810, %v267
      %v1812 = vpop.permute.xlu0 %1811
      %v1814 = vmul.f32 %v1768, %v547
      %v1815 = vmul.f32 %v1772, %v547
      %v1816 = vmul.f32 %v1776, %v547
      %v1817 = vmul.f32 %v1780, %v547
      %v1818 = vmul.f32 %v1784, %v547
      %v1819 = vmul.f32 %v1788, %v547
      %v1820 = vmul.f32 %v1792, %v547
      %v1821 = vmul.f32 %v1796, %v547
      %v1822 = vmul.f32 %v1800, %v547
      %v1823 = vmul.f32 %v1804, %v547
      %v1824 = vmul.f32 %v1808, %v547
      %v1825 = vmul.f32 %v1812, %v547
      %v1826 = vadd.f32 %v1754, %v1814
      %v1827 = vadd.f32 %v1755, %v1815
      %v1828 = vadd.f32 %v1756, %v1816
      %v1829 = vadd.f32 %v1757, %v1817
      %v1830 = vadd.f32 %v1758, %v1818
      %v1831 = vadd.f32 %v1759, %v1819
      %v1832 = vadd.f32 %v1760, %v1820
      %v1833 = vadd.f32 %v1761, %v1821
      %v1834 = vadd.f32 %v1762, %v1822
      %v1835 = vadd.f32 %v1763, %v1823
      %v1836 = vadd.f32 %v1764, %v1824
      %v1837 = vadd.f32 %v1765, %v1825
      %1838 = vset.pattern.permute.xlu0 18
      %1839 = vperm.xlu0 %1838, %v256
      %v1840 = vpop.permute.xlu0 %1839
      %1842 = vset.pattern.permute.xlu0 18
      %1843 = vperm.xlu0 %1842, %v257
      %v1844 = vpop.permute.xlu0 %1843
      %1846 = vset.pattern.permute.xlu0 18
      %1847 = vperm.xlu0 %1846, %v258
      %v1848 = vpop.permute.xlu0 %1847
      %1850 = vset.pattern.permute.xlu0 18
      %1851 = vperm.xlu0 %1850, %v259
      %v1852 = vpop.permute.xlu0 %1851
      %1854 = vset.pattern.permute.xlu0 18
      %1855 = vperm.xlu0 %1854, %v260
      %v1856 = vpop.permute.xlu0 %1855
      %1858 = vset.pattern.permute.xlu0 18
      %1859 = vperm.xlu0 %1858, %v261
      %v1860 = vpop.permute.xlu0 %1859
      %1862 = vset.pattern.permute.xlu0 18
      %1863 = vperm.xlu0 %1862, %v262
      %v1864 = vpop.permute.xlu0 %1863
      %1866 = vset.pattern.permute.xlu0 18
      %1867 = vperm.xlu0 %1866, %v263
      %v1868 = vpop.permute.xlu0 %1867
      %1870 = vset.pattern.permute.xlu0 18
      %1871 = vperm.xlu0 %1870, %v264
      %v1872 = vpop.permute.xlu0 %1871
      %1874 = vset.pattern.permute.xlu0 18
      %1875 = vperm.xlu0 %1874, %v265
      %v1876 = vpop.permute.xlu0 %1875
      %1878 = vset.pattern.permute.xlu0 18
      %1879 = vperm.xlu0 %1878, %v266
      %v1880 = vpop.permute.xlu0 %1879
      %1882 = vset.pattern.permute.xlu0 18
      %1883 = vperm.xlu0 %1882, %v267
      %v1884 = vpop.permute.xlu0 %1883
      %v1886 = vmul.f32 %v1840, %v623
      %v1887 = vmul.f32 %v1844, %v623
      %v1888 = vmul.f32 %v1848, %v623
      %v1889 = vmul.f32 %v1852, %v623
      %v1890 = vmul.f32 %v1856, %v623
      %v1891 = vmul.f32 %v1860, %v623
      %v1892 = vmul.f32 %v1864, %v623
      %v1893 = vmul.f32 %v1868, %v623
      %v1894 = vmul.f32 %v1872, %v623
      %v1895 = vmul.f32 %v1876, %v623
      %v1896 = vmul.f32 %v1880, %v623
      %v1897 = vmul.f32 %v1884, %v623
      %v1898 = vadd.f32 %v1826, %v1886
      %v1899 = vadd.f32 %v1827, %v1887
      %v1900 = vadd.f32 %v1828, %v1888
      %v1901 = vadd.f32 %v1829, %v1889
      %v1902 = vadd.f32 %v1830, %v1890
      %v1903 = vadd.f32 %v1831, %v1891
      %v1904 = vadd.f32 %v1832, %v1892
      %v1905 = vadd.f32 %v1833, %v1893
      %v1906 = vadd.f32 %v1834, %v1894
      %v1907 = vadd.f32 %v1835, %v1895
      %v1908 = vadd.f32 %v1836, %v1896
      %v1909 = vadd.f32 %v1837, %v1897
      %v1910 = vmax.f32 %v1898, 0.0
      %v1911 = vmax.f32 %v1899, 0.0
      %v1912 = vmax.f32 %v1900, 0.0
      %v1913 = vmax.f32 %v1901, 0.0
      %v1914 = vmax.f32 %v1902, 0.0
      %v1915 = vmax.f32 %v1903, 0.0
      %v1916 = vmax.f32 %v1904, 0.0
      %v1917 = vmax.f32 %v1905, 0.0
      %v1918 = vmax.f32 %v1906, 0.0
      %v1919 = vmax.f32 %v1907, 0.0
      %v1920 = vmax.f32 %v1908, 0.0
      %v1921 = vmax.f32 %v1909, 0.0
      %v1922 = vpack.c.bf16 %v1911, %v1910
      %v1923 = vpack.c.bf16 %v1913, %v1912
      %v1924 = vpack.c.bf16 %v1915, %v1914
      %v1925 = vpack.c.bf16 %v1917, %v1916
      %v1926 = vpack.c.bf16 %v1919, %v1918
      %v1927 = vpack.c.bf16 %v1921, %v1920
      %v1934 = vunpack.c.l.b16 %v1922
      %v1935 = vunpack.c.h.b16 %v1922
      %v1936 = vunpack.c.l.b16 %v1923
      %v1937 = vunpack.c.h.b16 %v1923
      %v1938 = vunpack.c.l.b16 %v1924
      %v1939 = vunpack.c.h.b16 %v1924
      %v1940 = vunpack.c.l.b16 %v1925
      %v1941 = vunpack.c.h.b16 %v1925
      %v1942 = vunpack.c.l.b16 %v1926
      %v1943 = vunpack.c.h.b16 %v1926
      %v1944 = vunpack.c.l.b16 %v1927
      %v1945 = vunpack.c.h.b16 %v1927
      %v1946 = vpack.c.b16 %v1934, %v1934
      %v1947 = vpack.c.b16 %v1935, %v1935
      %v1948 = vpack.c.b16 %v1936, %v1936
      %v1949 = vpack.c.b16 %v1937, %v1937
      %v1950 = vpack.c.b16 %v1938, %v1938
      %v1951 = vpack.c.b16 %v1939, %v1939
      %v1952 = vpack.c.b16 %v1940, %v1940
      %v1953 = vpack.c.b16 %v1941, %v1941
      %v1954 = vpack.c.b16 %v1942, %v1942
      %v1955 = vpack.c.b16 %v1943, %v1943
      %v1956 = vpack.c.b16 %v1944, %v1944
      %v1957 = vpack.c.b16 %v1945, %v1945
      %s1970 = scalar_lea.vmem [#allocation2], 168
      %1971 = vst [vmem:[%s1970] sm:$0xf] %v1946
      %1972 = vst [vmem:[%s1970 + $0x4] sm:$0xf] %v1947
      %1973 = vst [vmem:[%s1970 + $0x8] sm:$0xf] %v1948
      %1974 = vst [vmem:[%s1970 + $0xc] sm:$0xf] %v1949
      %1975 = vst [vmem:[%s1970 + $0x10] sm:$0xf] %v1950
      %1976 = vst [vmem:[%s1970 + $0x14] sm:$0xf] %v1951
      %1977 = vst [vmem:[%s1970 + $0x18] sm:$0xf] %v1952
      %1978 = vst [vmem:[%s1970 + $0x1c] sm:$0xf] %v1953
      %1979 = vst [vmem:[%s1970 + $0x20] sm:$0xf] %v1954
      %1980 = vst [vmem:[%s1970 + $0x24] sm:$0xf] %v1955
      %1981 = vst [vmem:[%s1970 + $0x28] sm:$0xf] %v1956
      %1982 = vst [vmem:[%s1970 + $0x2c] sm:$0xf] %v1957
      %1983 = vst [vmem:[#allocation2 + $0x30] sm:$0xf] 0
      %1984 = vst [vmem:[#allocation2 + $0x34] sm:$0xf] 0
      %1985 = vst [vmem:[%s1128 + $0x30] sm:$0xf] 0
      %1986 = vst [vmem:[%s1128 + $0x34] sm:$0xf] 0
      %1987 = vst [vmem:[%s1549 + $0x30] sm:$0xf] 0
      %1988 = vst [vmem:[%s1549 + $0x34] sm:$0xf] 0
      %1989 = vst [vmem:[%s1970 + $0x30] sm:$0xf] 0
      %1990 = vst [vmem:[%s1970 + $0x34] sm:$0xf] 0
      %v1991 = vld [vmem:[#allocation2] sm:$0xf]
      %v1992 = vld [vmem:[#allocation2 + $0x4] sm:$0xf]
      %v1993 = vld [vmem:[#allocation2 + $0x8] sm:$0xf]
      %v1994 = vld [vmem:[#allocation2 + $0xc] sm:$0xf]
      %v1995 = vld [vmem:[#allocation2 + $0x10] sm:$0xf]
      %v1996 = vld [vmem:[#allocation2 + $0x14] sm:$0xf]
      %v1997 = vld [vmem:[#allocation2 + $0x18] sm:$0xf]
      %v1998 = vld [vmem:[#allocation2 + $0x1c] sm:$0xf]
      %v1999 = vld [vmem:[#allocation2 + $0x20] sm:$0xf]
      %v2000 = vld [vmem:[#allocation2 + $0x24] sm:$0xf]
      %v2001 = vld [vmem:[#allocation2 + $0x28] sm:$0xf]
      %v2002 = vld [vmem:[#allocation2 + $0x2c] sm:$0xf]
      %v2003 = vld [vmem:[%s2] sm:$0xf]
      %v2004 = vld [vmem:[%s2 + $0x4] sm:$0xf]
      %v2005 = vld [vmem:[%s2 + $0x8] sm:$0xf]
      %v2006 = vld [vmem:[%s2 + $0xc] sm:$0xf]
      %v2007 = vld [vmem:[%s2 + $0x10] sm:$0xf]
      %v2008 = vld [vmem:[%s2 + $0x14] sm:$0xf]
      %v2009 = vld [vmem:[%s2 + $0x18] sm:$0xf]
      %v2010 = vld [vmem:[%s2 + $0x1c] sm:$0xf]
      %v2011 = vld [vmem:[%s2 + $0x20] sm:$0xf]
      %v2012 = vld [vmem:[%s2 + $0x24] sm:$0xf]
      %v2013 = vld [vmem:[%s2 + $0x28] sm:$0xf]
      %v2014 = vld [vmem:[%s2 + $0x2c] sm:$0xf]
      %v2015 = vld [vmem:[%s2 + $0x30] sm:$0xf]
      %v2016 = vld [vmem:[%s2 + $0x34] sm:$0xf]
      %v2017 = vld [vmem:[%s2 + $0x38] sm:$0xf]
      %v2018 = vld [vmem:[%s2 + $0x3c] sm:$0xf]
      %v2019 = vld [vmem:[%s1128] sm:$0xf]
      %v2020 = vld [vmem:[%s1128 + $0x4] sm:$0xf]
      %v2021 = vld [vmem:[%s1128 + $0x8] sm:$0xf]
      %v2022 = vld [vmem:[%s1128 + $0xc] sm:$0xf]
      %v2023 = vld [vmem:[%s1128 + $0x10] sm:$0xf]
      %v2024 = vld [vmem:[%s1128 + $0x14] sm:$0xf]
      %v2025 = vld [vmem:[%s1128 + $0x18] sm:$0xf]
      %v2026 = vld [vmem:[%s1128 + $0x1c] sm:$0xf]
      %v2027 = vld [vmem:[%s1128 + $0x20] sm:$0xf]
      %v2028 = vld [vmem:[%s1128 + $0x24] sm:$0xf]
      %v2029 = vld [vmem:[%s1128 + $0x28] sm:$0xf]
      %v2030 = vld [vmem:[%s1128 + $0x2c] sm:$0xf]
      %s2031 = scalar_lea.vmem %s2, 64
      %v2032 = vld [vmem:[%s2031] sm:$0xf]
      %v2033 = vld [vmem:[%s2031 + $0x4] sm:$0xf]
      %v2034 = vld [vmem:[%s2031 + $0x8] sm:$0xf]
      %v2035 = vld [vmem:[%s2031 + $0xc] sm:$0xf]
      %v2036 = vld [vmem:[%s2031 + $0x10] sm:$0xf]
      %v2037 = vld [vmem:[%s2031 + $0x14] sm:$0xf]
      %v2038 = vld [vmem:[%s2031 + $0x18] sm:$0xf]
      %v2039 = vld [vmem:[%s2031 + $0x1c] sm:$0xf]
      %v2040 = vld [vmem:[%s2031 + $0x20] sm:$0xf]
      %v2041 = vld [vmem:[%s2031 + $0x24] sm:$0xf]
      %v2042 = vld [vmem:[%s2031 + $0x28] sm:$0xf]
      %v2043 = vld [vmem:[%s2031 + $0x2c] sm:$0xf]
      %v2044 = vld [vmem:[%s2031 + $0x30] sm:$0xf]
      %v2045 = vld [vmem:[%s2031 + $0x34] sm:$0xf]
      %v2046 = vld [vmem:[%s2031 + $0x38] sm:$0xf]
      %v2047 = vld [vmem:[%s2031 + $0x3c] sm:$0xf]
      %v2060 = vunpack.c.l.b16 %v2019
      %v2061 = vunpack.c.l.b16 %v2020
      %v2062 = vunpack.c.l.b16 %v2021
      %v2063 = vunpack.c.l.b16 %v2022
      %v2064 = vunpack.c.l.b16 %v2023
      %v2065 = vunpack.c.l.b16 %v2024
      %v2066 = vunpack.c.l.b16 %v2025
      %v2067 = vunpack.c.l.b16 %v2026
      %v2068 = vunpack.c.l.b16 %v2027
      %v2069 = vunpack.c.l.b16 %v2028
      %v2070 = vunpack.c.l.b16 %v2029
      %v2071 = vunpack.c.l.b16 %v2030
      %v2072 = vpack.c.b16 %v2061, %v2060
      %v2073 = vpack.c.b16 %v2063, %v2062
      %v2074 = vpack.c.b16 %v2065, %v2064
      %v2075 = vpack.c.b16 %v2067, %v2066
      %v2076 = vpack.c.b16 %v2069, %v2068
      %v2077 = vpack.c.b16 %v2071, %v2070
      %v2100 = vunpack.c.l.b16 %v2032
      %v2101 = vunpack.c.l.b16 %v2033
      %v2102 = vunpack.c.l.b16 %v2034
      %v2103 = vunpack.c.l.b16 %v2035
      %v2104 = vunpack.c.l.b16 %v2036
      %v2105 = vunpack.c.l.b16 %v2037
      %v2106 = vunpack.c.l.b16 %v2038
      %v2107 = vunpack.c.l.b16 %v2039
      %v2108 = vunpack.c.l.b16 %v2040
      %v2109 = vunpack.c.l.b16 %v2041
      %v2110 = vunpack.c.l.b16 %v2042
      %v2111 = vunpack.c.l.b16 %v2043
      %v2112 = vunpack.c.l.b16 %v2044
      %v2113 = vunpack.c.l.b16 %v2045
      %v2114 = vunpack.c.l.b16 %v2046
      %v2115 = vunpack.c.l.b16 %v2047
      %v2116 = vpack.c.b16 %v2101, %v2100
      %v2117 = vpack.c.b16 %v2103, %v2102
      %v2118 = vpack.c.b16 %v2105, %v2104
      %v2119 = vpack.c.b16 %v2107, %v2106
      %v2120 = vpack.c.b16 %v2109, %v2108
      %v2121 = vpack.c.b16 %v2111, %v2110
      %v2122 = vpack.c.b16 %v2113, %v2112
      %v2123 = vpack.c.b16 %v2115, %v2114
      %2132 = vmatprep.subr.bf16.mxu0 0
      %2133 = vmatpush1.bf16.msra.mxu0 %v2123
      %2134 = vmatprep.subr.bf16.mxu0 0
      %2135 = vmatpush1.bf16.msra.mxu0 %v2122
      %2136 = vmatprep.subr.bf16.mxu0 0
      %2137 = vmatpush1.bf16.msra.mxu0 %v2121
      %2138 = vmatprep.subr.bf16.mxu0 0
      %2139 = vmatpush1.bf16.msra.mxu0 %v2120
      %2140 = vmatprep.subr.bf16.mxu0 0
      %2141 = vmatpush1.bf16.msra.mxu0 %v2119
      %2142 = vmatprep.subr.bf16.mxu0 0
      %2143 = vmatpush1.bf16.msra.mxu0 %v2118
      %2144 = vmatprep.subr.bf16.mxu0 0
      %2145 = vmatpush1.bf16.msra.mxu0 %v2117
      %2146 = vmatprep.subr.bf16.mxu0 0
      %2147 = vmatpush1.bf16.msra.mxu0 %v2116
      %2148 = vmatprep.subr.bf16.mxu0 0
      %2149 = vmatpush2.bf16.msra.mxu0 0
      %2150 = vmatprep.subr.bf16.mxu0 0
      %2151 = vmatpush2.bf16.msra.mxu0 0
      %2152 = vmatprep.subr.bf16.mxu0 0
      %2153 = vmatpush2.bf16.msra.mxu0 0
      %2154 = vmatprep.subr.bf16.mxu0 0
      %2155 = vmatpush2.bf16.msra.mxu0 0
      %2156 = vmatprep.subr.bf16.mxu0 0
      %2157 = vmatpush2.bf16.msra.mxu0 0
      %2158 = vmatprep.subr.bf16.mxu0 0
      %2159 = vmatpush2.bf16.msra.mxu0 0
      %2160 = vmatprep.subr.bf16.mxu0 0
      %2161 = vmatpush2.bf16.msra.mxu0 0
      %2162 = vmatprep.subr.bf16.mxu0 0
      %2163 = vmatpush2.bf16.msra.mxu0 0
      %2164 = vmatprep.mubr.bf16.mxu0 0
      %2165 = vmatmul.mubr.bf16.gmra.mxu0 %v2072
      %v2166 = vpop.f32.mrf.mxu0
      %v2167 = vadd.f32 0.0, %v2166
      %v2168 = vpop.f32.mrf.mxu0
      %v2169 = vpop.f32.mrf.mxu0
      %v2170 = vadd.f32 0.0, %v2169
      %v2171 = vpop.f32.mrf.mxu0
      %2172 = vmatprep.mubr.bf16.mxu0 0
      %2173 = vmatmul.mubr.bf16.gmra.mxu0 %v2073
      %v2174 = vpop.f32.mrf.mxu0
      %v2175 = vadd.f32 0.0, %v2174
      %v2176 = vpop.f32.mrf.mxu0
      %v2177 = vpop.f32.mrf.mxu0
      %v2178 = vadd.f32 0.0, %v2177
      %v2179 = vpop.f32.mrf.mxu0
      %2180 = vmatprep.mubr.bf16.mxu0 0
      %2181 = vmatmul.mubr.bf16.gmra.mxu0 %v2074
      %v2182 = vpop.f32.mrf.mxu0
      %v2183 = vadd.f32 0.0, %v2182
      %v2184 = vpop.f32.mrf.mxu0
      %v2185 = vpop.f32.mrf.mxu0
      %v2186 = vadd.f32 0.0, %v2185
      %v2187 = vpop.f32.mrf.mxu0
      %2188 = vmatprep.mubr.bf16.mxu0 0
      %2189 = vmatmul.mubr.bf16.gmra.mxu0 %v2075
      %v2190 = vpop.f32.mrf.mxu0
      %v2191 = vadd.f32 0.0, %v2190
      %v2192 = vpop.f32.mrf.mxu0
      %v2193 = vpop.f32.mrf.mxu0
      %v2194 = vadd.f32 0.0, %v2193
      %v2195 = vpop.f32.mrf.mxu0
      %2196 = vmatprep.mubr.bf16.mxu0 0
      %2197 = vmatmul.mubr.bf16.gmra.mxu0 %v2076
      %v2198 = vpop.f32.mrf.mxu0
      %v2199 = vadd.f32 0.0, %v2198
      %v2200 = vpop.f32.mrf.mxu0
      %v2201 = vpop.f32.mrf.mxu0
      %v2202 = vadd.f32 0.0, %v2201
      %v2203 = vpop.f32.mrf.mxu0
      %2204 = vmatprep.mubr.bf16.mxu0 0
      %2205 = vmatmul.mubr.bf16.gmra.mxu0 %v2077
      %v2206 = vpop.f32.mrf.mxu0
      %v2207 = vadd.f32 0.0, %v2206
      %v2208 = vpop.f32.mrf.mxu0
      %v2209 = vpop.f32.mrf.mxu0
      %v2210 = vadd.f32 0.0, %v2209
      %v2211 = vpop.f32.mrf.mxu0
      %2212 = vdwg.mxu0
      %v2225 = vunpack.c.l.b16 %v1991
      %v2226 = vunpack.c.l.b16 %v1992
      %v2227 = vunpack.c.l.b16 %v1993
      %v2228 = vunpack.c.l.b16 %v1994
      %v2229 = vunpack.c.l.b16 %v1995
      %v2230 = vunpack.c.l.b16 %v1996
      %v2231 = vunpack.c.l.b16 %v1997
      %v2232 = vunpack.c.l.b16 %v1998
      %v2233 = vunpack.c.l.b16 %v1999
      %v2234 = vunpack.c.l.b16 %v2000
      %v2235 = vunpack.c.l.b16 %v2001
      %v2236 = vunpack.c.l.b16 %v2002
      %v2237 = vpack.c.b16 %v2226, %v2225
      %v2238 = vpack.c.b16 %v2228, %v2227
      %v2239 = vpack.c.b16 %v2230, %v2229
      %v2240 = vpack.c.b16 %v2232, %v2231
      %v2241 = vpack.c.b16 %v2234, %v2233
      %v2242 = vpack.c.b16 %v2236, %v2235
      %v2265 = vunpack.c.l.b16 %v2003
      %v2266 = vunpack.c.l.b16 %v2004
      %v2267 = vunpack.c.l.b16 %v2005
      %v2268 = vunpack.c.l.b16 %v2006
      %v2269 = vunpack.c.l.b16 %v2007
      %v2270 = vunpack.c.l.b16 %v2008
      %v2271 = vunpack.c.l.b16 %v2009
      %v2272 = vunpack.c.l.b16 %v2010
      %v2273 = vunpack.c.l.b16 %v2011
      %v2274 = vunpack.c.l.b16 %v2012
      %v2275 = vunpack.c.l.b16 %v2013
      %v2276 = vunpack.c.l.b16 %v2014
      %v2277 = vunpack.c.l.b16 %v2015
      %v2278 = vunpack.c.l.b16 %v2016
      %v2279 = vunpack.c.l.b16 %v2017
      %v2280 = vunpack.c.l.b16 %v2018
      %v2281 = vpack.c.b16 %v2266, %v2265
      %v2282 = vpack.c.b16 %v2268, %v2267
      %v2283 = vpack.c.b16 %v2270, %v2269
      %v2284 = vpack.c.b16 %v2272, %v2271
      %v2285 = vpack.c.b16 %v2274, %v2273
      %v2286 = vpack.c.b16 %v2276, %v2275
      %v2287 = vpack.c.b16 %v2278, %v2277
      %v2288 = vpack.c.b16 %v2280, %v2279
      %2297 = vmatprep.subr.bf16.mxu0 0
      %2298 = vmatpush1.bf16.msra.mxu0 %v2288
      %2299 = vmatprep.subr.bf16.mxu0 0
      %2300 = vmatpush1.bf16.msra.mxu0 %v2287
      %2301 = vmatprep.subr.bf16.mxu0 0
      %2302 = vmatpush1.bf16.msra.mxu0 %v2286
      %2303 = vmatprep.subr.bf16.mxu0 0
      %2304 = vmatpush1.bf16.msra.mxu0 %v2285
      %2305 = vmatprep.subr.bf16.mxu0 0
      %2306 = vmatpush1.bf16.msra.mxu0 %v2284
      %2307 = vmatprep.subr.bf16.mxu0 0
      %2308 = vmatpush1.bf16.msra.mxu0 %v2283
      %2309 = vmatprep.subr.bf16.mxu0 0
      %2310 = vmatpush1.bf16.msra.mxu0 %v2282
      %2311 = vmatprep.subr.bf16.mxu0 0
      %2312 = vmatpush1.bf16.msra.mxu0 %v2281
      %2313 = vmatprep.subr.bf16.mxu0 0
      %2314 = vmatpush2.bf16.msra.mxu0 0
      %2315 = vmatprep.subr.bf16.mxu0 0
      %2316 = vmatpush2.bf16.msra.mxu0 0
      %2317 = vmatprep.subr.bf16.mxu0 0
      %2318 = vmatpush2.bf16.msra.mxu0 0
      %2319 = vmatprep.subr.bf16.mxu0 0
      %2320 = vmatpush2.bf16.msra.mxu0 0
      %2321 = vmatprep.subr.bf16.mxu0 0
      %2322 = vmatpush2.bf16.msra.mxu0 0
      %2323 = vmatprep.subr.bf16.mxu0 0
      %2324 = vmatpush2.bf16.msra.mxu0 0
      %2325 = vmatprep.subr.bf16.mxu0 0
      %2326 = vmatpush2.bf16.msra.mxu0 0
      %2327 = vmatprep.subr.bf16.mxu0 0
      %2328 = vmatpush2.bf16.msra.mxu0 0
      %2329 = vmatprep.mubr.bf16.mxu0 0
      %2330 = vmatmul.mubr.bf16.gmra.mxu0 %v2237
      %v2331 = vpop.f32.mrf.mxu0
      %v2332 = vadd.f32 %v2167, %v2331
      %v2333 = vpop.f32.mrf.mxu0
      %v2334 = vpop.f32.mrf.mxu0
      %v2335 = vadd.f32 %v2170, %v2334
      %v2336 = vpop.f32.mrf.mxu0
      %2337 = vmatprep.mubr.bf16.mxu0 0
      %2338 = vmatmul.mubr.bf16.gmra.mxu0 %v2238
      %v2339 = vpop.f32.mrf.mxu0
      %v2340 = vadd.f32 %v2175, %v2339
      %v2341 = vpop.f32.mrf.mxu0
      %v2342 = vpop.f32.mrf.mxu0
      %v2343 = vadd.f32 %v2178, %v2342
      %v2344 = vpop.f32.mrf.mxu0
      %2345 = vmatprep.mubr.bf16.mxu0 0
      %2346 = vmatmul.mubr.bf16.gmra.mxu0 %v2239
      %v2347 = vpop.f32.mrf.mxu0
      %v2348 = vadd.f32 %v2183, %v2347
      %v2349 = vpop.f32.mrf.mxu0
      %v2350 = vpop.f32.mrf.mxu0
      %v2351 = vadd.f32 %v2186, %v2350
      %v2352 = vpop.f32.mrf.mxu0
      %2353 = vmatprep.mubr.bf16.mxu0 0
      %2354 = vmatmul.mubr.bf16.gmra.mxu0 %v2240
      %v2355 = vpop.f32.mrf.mxu0
      %v2356 = vadd.f32 %v2191, %v2355
      %v2357 = vpop.f32.mrf.mxu0
      %v2358 = vpop.f32.mrf.mxu0
      %v2359 = vadd.f32 %v2194, %v2358
      %v2360 = vpop.f32.mrf.mxu0
      %2361 = vmatprep.mubr.bf16.mxu0 0
      %2362 = vmatmul.mubr.bf16.gmra.mxu0 %v2241
      %v2363 = vpop.f32.mrf.mxu0
      %v2364 = vadd.f32 %v2199, %v2363
      %v2365 = vpop.f32.mrf.mxu0
      %v2366 = vpop.f32.mrf.mxu0
      %v2367 = vadd.f32 %v2202, %v2366
      %v2368 = vpop.f32.mrf.mxu0
      %2369 = vmatprep.mubr.bf16.mxu0 0
      %2370 = vmatmul.mubr.bf16.gmra.mxu0 %v2242
      %v2371 = vpop.f32.mrf.mxu0
      %v2372 = vadd.f32 %v2207, %v2371
      %v2373 = vpop.f32.mrf.mxu0
      %v2374 = vpop.f32.mrf.mxu0
      %v2375 = vadd.f32 %v2210, %v2374
      %v2376 = vpop.f32.mrf.mxu0
      %2377 = vdwg.mxu0
      %v2378 = vld [vmem:[#allocation2] sm:$0xf]
      %v2379 = vld [vmem:[#allocation2 + $0x4] sm:$0xf]
      %v2380 = vld [vmem:[#allocation2 + $0x8] sm:$0xf]
      %v2381 = vld [vmem:[#allocation2 + $0xc] sm:$0xf]
      %v2382 = vld [vmem:[#allocation2 + $0x10] sm:$0xf]
      %v2383 = vld [vmem:[#allocation2 + $0x14] sm:$0xf]
      %v2384 = vld [vmem:[#allocation2 + $0x18] sm:$0xf]
      %v2385 = vld [vmem:[#allocation2 + $0x1c] sm:$0xf]
      %v2386 = vld [vmem:[#allocation2 + $0x20] sm:$0xf]
      %v2387 = vld [vmem:[#allocation2 + $0x24] sm:$0xf]
      %v2388 = vld [vmem:[#allocation2 + $0x28] sm:$0xf]
      %v2389 = vld [vmem:[#allocation2 + $0x2c] sm:$0xf]
      %v2390 = vld [vmem:[#allocation2 + $0x30] sm:$0x1]
      %s2391 = scalar_lea.vmem %s2, 128
      %v2392 = vld [vmem:[%s2391] sm:$0xf]
      %v2393 = vld [vmem:[%s2391 + $0x4] sm:$0xf]
      %v2394 = vld [vmem:[%s2391 + $0x8] sm:$0xf]
      %v2395 = vld [vmem:[%s2391 + $0xc] sm:$0xf]
      %v2396 = vld [vmem:[%s2391 + $0x10] sm:$0xf]
      %v2397 = vld [vmem:[%s2391 + $0x14] sm:$0xf]
      %v2398 = vld [vmem:[%s2391 + $0x18] sm:$0xf]
      %v2399 = vld [vmem:[%s2391 + $0x1c] sm:$0xf]
      %v2400 = vld [vmem:[%s2391 + $0x20] sm:$0xf]
      %v2401 = vld [vmem:[%s2391 + $0x24] sm:$0xf]
      %v2402 = vld [vmem:[%s2391 + $0x28] sm:$0xf]
      %v2403 = vld [vmem:[%s2391 + $0x2c] sm:$0xf]
      %v2404 = vld [vmem:[%s2391 + $0x30] sm:$0xf]
      %v2405 = vld [vmem:[%s2391 + $0x34] sm:$0xf]
      %v2406 = vld [vmem:[%s2391 + $0x38] sm:$0xf]
      %v2407 = vld [vmem:[%s2391 + $0x3c] sm:$0xf]
      %v2421 = vunpack.c.l.b16 %v2378
      %v2422 = vunpack.c.l.b16 %v2379
      %v2423 = vunpack.c.l.b16 %v2380
      %v2424 = vunpack.c.l.b16 %v2381
      %v2425 = vunpack.c.l.b16 %v2382
      %v2426 = vunpack.c.l.b16 %v2383
      %v2427 = vunpack.c.l.b16 %v2384
      %v2428 = vunpack.c.l.b16 %v2385
      %v2429 = vunpack.c.l.b16 %v2386
      %v2430 = vunpack.c.l.b16 %v2387
      %v2431 = vunpack.c.l.b16 %v2388
      %v2432 = vunpack.c.l.b16 %v2389
      %v2433 = vunpack.c.l.b16 %v2390
      %v2434 = vpack.c.b16 %v2422, %v2421
      %v2435 = vpack.c.b16 %v2424, %v2423
      %v2436 = vpack.c.b16 %v2426, %v2425
      %v2437 = vpack.c.b16 %v2428, %v2427
      %v2438 = vpack.c.b16 %v2430, %v2429
      %v2439 = vpack.c.b16 %v2432, %v2431
      %v2440 = vpack.c.b16 %v2433, %v2433
      %vm2441 = vsmask.f32 7424
      %v2443 = vshrl.u32 %v2434, 16
      %v2445 = vshll.u32 %v2434, 16
      %v2447 = vrot.slane %v2445, 1
      %v2448 = vor.u32 %v2443, %v2447
      %v2450 = vshll.u32 %v2435, 16
      %v2452 = vrot.slane %v2450, 1
      %v2453 = vsel %vm2441, %v2448, %v2452
      %v2454 = vshrl.u32 %v2435, 16
      %v2456 = vor.u32 %v2454, %v2452
      %v2458 = vshll.u32 %v2436, 16
      %v2460 = vrot.slane %v2458, 1
      %v2461 = vsel %vm2441, %v2456, %v2460
      %v2462 = vshrl.u32 %v2436, 16
      %v2464 = vor.u32 %v2462, %v2460
      %v2466 = vshll.u32 %v2437, 16
      %v2468 = vrot.slane %v2466, 1
      %v2469 = vsel %vm2441, %v2464, %v2468
      %v2470 = vshrl.u32 %v2437, 16
      %v2472 = vor.u32 %v2470, %v2468
      %v2474 = vshll.u32 %v2438, 16
      %v2476 = vrot.slane %v2474, 1
      %v2477 = vsel %vm2441, %v2472, %v2476
      %v2478 = vshrl.u32 %v2438, 16
      %v2480 = vor.u32 %v2478, %v2476
      %v2482 = vshll.u32 %v2439, 16
      %v2484 = vrot.slane %v2482, 1
      %v2485 = vsel %vm2441, %v2480, %v2484
      %v2486 = vshrl.u32 %v2439, 16
      %v2488 = vor.u32 %v2486, %v2484
      %v2490 = vshll.u32 %v2440, 16
      %v2492 = vrot.slane %v2490, 1
      %v2493 = vsel %vm2441, %v2488, %v2492
      %v2516 = vunpack.c.l.b16 %v2392
      %v2517 = vunpack.c.l.b16 %v2393
      %v2518 = vunpack.c.l.b16 %v2394
      %v2519 = vunpack.c.l.b16 %v2395
      %v2520 = vunpack.c.l.b16 %v2396
      %v2521 = vunpack.c.l.b16 %v2397
      %v2522 = vunpack.c.l.b16 %v2398
      %v2523 = vunpack.c.l.b16 %v2399
      %v2524 = vunpack.c.l.b16 %v2400
      %v2525 = vunpack.c.l.b16 %v2401
      %v2526 = vunpack.c.l.b16 %v2402
      %v2527 = vunpack.c.l.b16 %v2403
      %v2528 = vunpack.c.l.b16 %v2404
      %v2529 = vunpack.c.l.b16 %v2405
      %v2530 = vunpack.c.l.b16 %v2406
      %v2531 = vunpack.c.l.b16 %v2407
      %v2532 = vpack.c.b16 %v2517, %v2516
      %v2533 = vpack.c.b16 %v2519, %v2518
      %v2534 = vpack.c.b16 %v2521, %v2520
      %v2535 = vpack.c.b16 %v2523, %v2522
      %v2536 = vpack.c.b16 %v2525, %v2524
      %v2537 = vpack.c.b16 %v2527, %v2526
      %v2538 = vpack.c.b16 %v2529, %v2528
      %v2539 = vpack.c.b16 %v2531, %v2530
      %2548 = vmatprep.subr.bf16.mxu0 0
      %2549 = vmatpush1.bf16.msra.mxu0 %v2539
      %2550 = vmatprep.subr.bf16.mxu0 0
      %2551 = vmatpush1.bf16.msra.mxu0 %v2538
      %2552 = vmatprep.subr.bf16.mxu0 0
      %2553 = vmatpush1.bf16.msra.mxu0 %v2537
      %2554 = vmatprep.subr.bf16.mxu0 0
      %2555 = vmatpush1.bf16.msra.mxu0 %v2536
      %2556 = vmatprep.subr.bf16.mxu0 0
      %2557 = vmatpush1.bf16.msra.mxu0 %v2535
      %2558 = vmatprep.subr.bf16.mxu0 0
      %2559 = vmatpush1.bf16.msra.mxu0 %v2534
      %2560 = vmatprep.subr.bf16.mxu0 0
      %2561 = vmatpush1.bf16.msra.mxu0 %v2533
      %2562 = vmatprep.subr.bf16.mxu0 0
      %2563 = vmatpush1.bf16.msra.mxu0 %v2532
      %2564 = vmatprep.subr.bf16.mxu0 0
      %2565 = vmatpush2.bf16.msra.mxu0 0
      %2566 = vmatprep.subr.bf16.mxu0 0
      %2567 = vmatpush2.bf16.msra.mxu0 0
      %2568 = vmatprep.subr.bf16.mxu0 0
      %2569 = vmatpush2.bf16.msra.mxu0 0
      %2570 = vmatprep.subr.bf16.mxu0 0
      %2571 = vmatpush2.bf16.msra.mxu0 0
      %2572 = vmatprep.subr.bf16.mxu0 0
      %2573 = vmatpush2.bf16.msra.mxu0 0
      %2574 = vmatprep.subr.bf16.mxu0 0
      %2575 = vmatpush2.bf16.msra.mxu0 0
      %2576 = vmatprep.subr.bf16.mxu0 0
      %2577 = vmatpush2.bf16.msra.mxu0 0
      %2578 = vmatprep.subr.bf16.mxu0 0
      %2579 = vmatpush2.bf16.msra.mxu0 0
      %2580 = vmatprep.mubr.bf16.mxu0 0
      %2581 = vmatmul.mubr.bf16.gmra.mxu0 %v2453
      %v2582 = vpop.f32.mrf.mxu0
      %v2583 = vadd.f32 0.0, %v2582
      %v2584 = vpop.f32.mrf.mxu0
      %v2585 = vpop.f32.mrf.mxu0
      %v2586 = vadd.f32 0.0, %v2585
      %v2587 = vpop.f32.mrf.mxu0
      %2588 = vmatprep.mubr.bf16.mxu0 0
      %2589 = vmatmul.mubr.bf16.gmra.mxu0 %v2461
      %v2590 = vpop.f32.mrf.mxu0
      %v2591 = vadd.f32 0.0, %v2590
      %v2592 = vpop.f32.mrf.mxu0
      %v2593 = vpop.f32.mrf.mxu0
      %v2594 = vadd.f32 0.0, %v2593
      %v2595 = vpop.f32.mrf.mxu0
      %2596 = vmatprep.mubr.bf16.mxu0 0
      %2597 = vmatmul.mubr.bf16.gmra.mxu0 %v2469
      %v2598 = vpop.f32.mrf.mxu0
      %v2599 = vadd.f32 0.0, %v2598
      %v2600 = vpop.f32.mrf.mxu0
      %v2601 = vpop.f32.mrf.mxu0
      %v2602 = vadd.f32 0.0, %v2601
      %v2603 = vpop.f32.mrf.mxu0
      %2604 = vmatprep.mubr.bf16.mxu0 0
      %2605 = vmatmul.mubr.bf16.gmra.mxu0 %v2477
      %v2606 = vpop.f32.mrf.mxu0
      %v2607 = vadd.f32 0.0, %v2606
      %v2608 = vpop.f32.mrf.mxu0
      %v2609 = vpop.f32.mrf.mxu0
      %v2610 = vadd.f32 0.0, %v2609
      %v2611 = vpop.f32.mrf.mxu0
      %2612 = vmatprep.mubr.bf16.mxu0 0
      %2613 = vmatmul.mubr.bf16.gmra.mxu0 %v2485
      %v2614 = vpop.f32.mrf.mxu0
      %v2615 = vadd.f32 0.0, %v2614
      %v2616 = vpop.f32.mrf.mxu0
      %v2617 = vpop.f32.mrf.mxu0
      %v2618 = vadd.f32 0.0, %v2617
      %v2619 = vpop.f32.mrf.mxu0
      %2620 = vmatprep.mubr.bf16.mxu0 0
      %2621 = vmatmul.mubr.bf16.gmra.mxu0 %v2493
      %v2622 = vpop.f32.mrf.mxu0
      %v2623 = vadd.f32 0.0, %v2622
      %v2624 = vpop.f32.mrf.mxu0
      %v2625 = vpop.f32.mrf.mxu0
      %v2626 = vadd.f32 0.0, %v2625
      %v2627 = vpop.f32.mrf.mxu0
      %2628 = vdwg.mxu0
      %v2629 = vadd.f32 %v2332, %v2583
      %v2630 = vadd.f32 %v2335, %v2586
      %v2631 = vadd.f32 %v2340, %v2591
      %v2632 = vadd.f32 %v2343, %v2594
      %v2633 = vadd.f32 %v2348, %v2599
      %v2634 = vadd.f32 %v2351, %v2602
      %v2635 = vadd.f32 %v2356, %v2607
      %v2636 = vadd.f32 %v2359, %v2610
      %v2637 = vadd.f32 %v2364, %v2615
      %v2638 = vadd.f32 %v2367, %v2618
      %v2639 = vadd.f32 %v2372, %v2623
      %v2640 = vadd.f32 %v2375, %v2626
      %v2641 = vld [vmem:[%s1549] sm:$0xf]
      %v2642 = vld [vmem:[%s1549 + $0x4] sm:$0xf]
      %v2643 = vld [vmem:[%s1549 + $0x8] sm:$0xf]
      %v2644 = vld [vmem:[%s1549 + $0xc] sm:$0xf]
      %v2645 = vld [vmem:[%s1549 + $0x10] sm:$0xf]
      %v2646 = vld [vmem:[%s1549 + $0x14] sm:$0xf]
      %v2647 = vld [vmem:[%s1549 + $0x18] sm:$0xf]
      %v2648 = vld [vmem:[%s1549 + $0x1c] sm:$0xf]
      %v2649 = vld [vmem:[%s1549 + $0x20] sm:$0xf]
      %v2650 = vld [vmem:[%s1549 + $0x24] sm:$0xf]
      %v2651 = vld [vmem:[%s1549 + $0x28] sm:$0xf]
      %v2652 = vld [vmem:[%s1549 + $0x2c] sm:$0xf]
      %s2653 = scalar_lea.vmem %s2, 192
      %v2654 = vld [vmem:[%s2653] sm:$0xf]
      %v2655 = vld [vmem:[%s2653 + $0x4] sm:$0xf]
      %v2656 = vld [vmem:[%s2653 + $0x8] sm:$0xf]
      %v2657 = vld [vmem:[%s2653 + $0xc] sm:$0xf]
      %v2658 = vld [vmem:[%s2653 + $0x10] sm:$0xf]
      %v2659 = vld [vmem:[%s2653 + $0x14] sm:$0xf]
      %v2660 = vld [vmem:[%s2653 + $0x18] sm:$0xf]
      %v2661 = vld [vmem:[%s2653 + $0x1c] sm:$0xf]
      %v2662 = vld [vmem:[%s2653 + $0x20] sm:$0xf]
      %v2663 = vld [vmem:[%s2653 + $0x24] sm:$0xf]
      %v2664 = vld [vmem:[%s2653 + $0x28] sm:$0xf]
      %v2665 = vld [vmem:[%s2653 + $0x2c] sm:$0xf]
      %v2666 = vld [vmem:[%s2653 + $0x30] sm:$0xf]
      %v2667 = vld [vmem:[%s2653 + $0x34] sm:$0xf]
      %v2668 = vld [vmem:[%s2653 + $0x38] sm:$0xf]
      %v2669 = vld [vmem:[%s2653 + $0x3c] sm:$0xf]
      %v2682 = vunpack.c.l.b16 %v2641
      %v2683 = vunpack.c.l.b16 %v2642
      %v2684 = vunpack.c.l.b16 %v2643
      %v2685 = vunpack.c.l.b16 %v2644
      %v2686 = vunpack.c.l.b16 %v2645
      %v2687 = vunpack.c.l.b16 %v2646
      %v2688 = vunpack.c.l.b16 %v2647
      %v2689 = vunpack.c.l.b16 %v2648
      %v2690 = vunpack.c.l.b16 %v2649
      %v2691 = vunpack.c.l.b16 %v2650
      %v2692 = vunpack.c.l.b16 %v2651
      %v2693 = vunpack.c.l.b16 %v2652
      %v2694 = vpack.c.b16 %v2683, %v2682
      %v2695 = vpack.c.b16 %v2685, %v2684
      %v2696 = vpack.c.b16 %v2687, %v2686
      %v2697 = vpack.c.b16 %v2689, %v2688
      %v2698 = vpack.c.b16 %v2691, %v2690
      %v2699 = vpack.c.b16 %v2693, %v2692
      %v2722 = vunpack.c.l.b16 %v2654
      %v2723 = vunpack.c.l.b16 %v2655
      %v2724 = vunpack.c.l.b16 %v2656
      %v2725 = vunpack.c.l.b16 %v2657
      %v2726 = vunpack.c.l.b16 %v2658
      %v2727 = vunpack.c.l.b16 %v2659
      %v2728 = vunpack.c.l.b16 %v2660
      %v2729 = vunpack.c.l.b16 %v2661
      %v2730 = vunpack.c.l.b16 %v2662
      %v2731 = vunpack.c.l.b16 %v2663
      %v2732 = vunpack.c.l.b16 %v2664
      %v2733 = vunpack.c.l.b16 %v2665
      %v2734 = vunpack.c.l.b16 %v2666
      %v2735 = vunpack.c.l.b16 %v2667
      %v2736 = vunpack.c.l.b16 %v2668
      %v2737 = vunpack.c.l.b16 %v2669
      %v2738 = vpack.c.b16 %v2723, %v2722
      %v2739 = vpack.c.b16 %v2725, %v2724
      %v2740 = vpack.c.b16 %v2727, %v2726
      %v2741 = vpack.c.b16 %v2729, %v2728
      %v2742 = vpack.c.b16 %v2731, %v2730
      %v2743 = vpack.c.b16 %v2733, %v2732
      %v2744 = vpack.c.b16 %v2735, %v2734
      %v2745 = vpack.c.b16 %v2737, %v2736
      %2754 = vmatprep.subr.bf16.mxu0 0
      %2755 = vmatpush1.bf16.msra.mxu0 %v2745
      %2756 = vmatprep.subr.bf16.mxu0 0
      %2757 = vmatpush1.bf16.msra.mxu0 %v2744
      %2758 = vmatprep.subr.bf16.mxu0 0
      %2759 = vmatpush1.bf16.msra.mxu0 %v2743
      %2760 = vmatprep.subr.bf16.mxu0 0
      %2761 = vmatpush1.bf16.msra.mxu0 %v2742
      %2762 = vmatprep.subr.bf16.mxu0 0
      %2763 = vmatpush1.bf16.msra.mxu0 %v2741
      %2764 = vmatprep.subr.bf16.mxu0 0
      %2765 = vmatpush1.bf16.msra.mxu0 %v2740
      %2766 = vmatprep.subr.bf16.mxu0 0
      %2767 = vmatpush1.bf16.msra.mxu0 %v2739
      %2768 = vmatprep.subr.bf16.mxu0 0
      %2769 = vmatpush1.bf16.msra.mxu0 %v2738
      %2770 = vmatprep.subr.bf16.mxu0 0
      %2771 = vmatpush2.bf16.msra.mxu0 0
      %2772 = vmatprep.subr.bf16.mxu0 0
      %2773 = vmatpush2.bf16.msra.mxu0 0
      %2774 = vmatprep.subr.bf16.mxu0 0
      %2775 = vmatpush2.bf16.msra.mxu0 0
      %2776 = vmatprep.subr.bf16.mxu0 0
      %2777 = vmatpush2.bf16.msra.mxu0 0
      %2778 = vmatprep.subr.bf16.mxu0 0
      %2779 = vmatpush2.bf16.msra.mxu0 0
      %2780 = vmatprep.subr.bf16.mxu0 0
      %2781 = vmatpush2.bf16.msra.mxu0 0
      %2782 = vmatprep.subr.bf16.mxu0 0
      %2783 = vmatpush2.bf16.msra.mxu0 0
      %2784 = vmatprep.subr.bf16.mxu0 0
      %2785 = vmatpush2.bf16.msra.mxu0 0
      %2786 = vmatprep.mubr.bf16.mxu0 0
      %2787 = vmatmul.mubr.bf16.gmra.mxu0 %v2694
      %v2788 = vpop.f32.mrf.mxu0
      %v2789 = vadd.f32 0.0, %v2788
      %v2790 = vpop.f32.mrf.mxu0
      %v2791 = vpop.f32.mrf.mxu0
      %v2792 = vadd.f32 0.0, %v2791
      %v2793 = vpop.f32.mrf.mxu0
      %2794 = vmatprep.mubr.bf16.mxu0 0
      %2795 = vmatmul.mubr.bf16.gmra.mxu0 %v2695
      %v2796 = vpop.f32.mrf.mxu0
      %v2797 = vadd.f32 0.0, %v2796
      %v2798 = vpop.f32.mrf.mxu0
      %v2799 = vpop.f32.mrf.mxu0
      %v2800 = vadd.f32 0.0, %v2799
      %v2801 = vpop.f32.mrf.mxu0
      %2802 = vmatprep.mubr.bf16.mxu0 0
      %2803 = vmatmul.mubr.bf16.gmra.mxu0 %v2696
      %v2804 = vpop.f32.mrf.mxu0
      %v2805 = vadd.f32 0.0, %v2804
      %v2806 = vpop.f32.mrf.mxu0
      %v2807 = vpop.f32.mrf.mxu0
      %v2808 = vadd.f32 0.0, %v2807
      %v2809 = vpop.f32.mrf.mxu0
      %2810 = vmatprep.mubr.bf16.mxu0 0
      %2811 = vmatmul.mubr.bf16.gmra.mxu0 %v2697
      %v2812 = vpop.f32.mrf.mxu0
      %v2813 = vadd.f32 0.0, %v2812
      %v2814 = vpop.f32.mrf.mxu0
      %v2815 = vpop.f32.mrf.mxu0
      %v2816 = vadd.f32 0.0, %v2815
      %v2817 = vpop.f32.mrf.mxu0
      %2818 = vmatprep.mubr.bf16.mxu0 0
      %2819 = vmatmul.mubr.bf16.gmra.mxu0 %v2698
      %v2820 = vpop.f32.mrf.mxu0
      %v2821 = vadd.f32 0.0, %v2820
      %v2822 = vpop.f32.mrf.mxu0
      %v2823 = vpop.f32.mrf.mxu0
      %v2824 = vadd.f32 0.0, %v2823
      %v2825 = vpop.f32.mrf.mxu0
      %2826 = vmatprep.mubr.bf16.mxu0 0
      %2827 = vmatmul.mubr.bf16.gmra.mxu0 %v2699
      %v2828 = vpop.f32.mrf.mxu0
      %v2829 = vadd.f32 0.0, %v2828
      %v2830 = vpop.f32.mrf.mxu0
      %v2831 = vpop.f32.mrf.mxu0
      %v2832 = vadd.f32 0.0, %v2831
      %v2833 = vpop.f32.mrf.mxu0
      %2834 = vdwg.mxu0
      %v2835 = vadd.f32 %v2629, %v2789
      %v2836 = vadd.f32 %v2630, %v2792
      %v2837 = vadd.f32 %v2631, %v2797
      %v2838 = vadd.f32 %v2632, %v2800
      %v2839 = vadd.f32 %v2633, %v2805
      %v2840 = vadd.f32 %v2634, %v2808
      %v2841 = vadd.f32 %v2635, %v2813
      %v2842 = vadd.f32 %v2636, %v2816
      %v2843 = vadd.f32 %v2637, %v2821
      %v2844 = vadd.f32 %v2638, %v2824
      %v2845 = vadd.f32 %v2639, %v2829
      %v2846 = vadd.f32 %v2640, %v2832
      %v2847 = vld [vmem:[%s1970] sm:$0xf]
      %v2848 = vld [vmem:[%s1970 + $0x4] sm:$0xf]
      %v2849 = vld [vmem:[%s1970 + $0x8] sm:$0xf]
      %v2850 = vld [vmem:[%s1970 + $0xc] sm:$0xf]
      %v2851 = vld [vmem:[%s1970 + $0x10] sm:$0xf]
      %v2852 = vld [vmem:[%s1970 + $0x14] sm:$0xf]
      %v2853 = vld [vmem:[%s1970 + $0x18] sm:$0xf]
      %v2854 = vld [vmem:[%s1970 + $0x1c] sm:$0xf]
      %v2855 = vld [vmem:[%s1970 + $0x20] sm:$0xf]
      %v2856 = vld [vmem:[%s1970 + $0x24] sm:$0xf]
      %v2857 = vld [vmem:[%s1970 + $0x28] sm:$0xf]
      %v2858 = vld [vmem:[%s1970 + $0x2c] sm:$0xf]
      %s2859 = scalar_lea.vmem %s2, 256
      %v2860 = vld [vmem:[%s2859] sm:$0xf]
      %v2861 = vld [vmem:[%s2859 + $0x4] sm:$0xf]
      %v2862 = vld [vmem:[%s2859 + $0x8] sm:$0xf]
      %v2863 = vld [vmem:[%s2859 + $0xc] sm:$0xf]
      %v2864 = vld [vmem:[%s2859 + $0x10] sm:$0xf]
      %v2865 = vld [vmem:[%s2859 + $0x14] sm:$0xf]
      %v2866 = vld [vmem:[%s2859 + $0x18] sm:$0xf]
      %v2867 = vld [vmem:[%s2859 + $0x1c] sm:$0xf]
      %v2868 = vld [vmem:[%s2859 + $0x20] sm:$0xf]
      %v2869 = vld [vmem:[%s2859 + $0x24] sm:$0xf]
      %v2870 = vld [vmem:[%s2859 + $0x28] sm:$0xf]
      %v2871 = vld [vmem:[%s2859 + $0x2c] sm:$0xf]
      %v2872 = vld [vmem:[%s2859 + $0x30] sm:$0xf]
      %v2873 = vld [vmem:[%s2859 + $0x34] sm:$0xf]
      %v2874 = vld [vmem:[%s2859 + $0x38] sm:$0xf]
      %v2875 = vld [vmem:[%s2859 + $0x3c] sm:$0xf]
      %v2888 = vunpack.c.l.b16 %v2847
      %v2889 = vunpack.c.l.b16 %v2848
      %v2890 = vunpack.c.l.b16 %v2849
      %v2891 = vunpack.c.l.b16 %v2850
      %v2892 = vunpack.c.l.b16 %v2851
      %v2893 = vunpack.c.l.b16 %v2852
      %v2894 = vunpack.c.l.b16 %v2853
      %v2895 = vunpack.c.l.b16 %v2854
      %v2896 = vunpack.c.l.b16 %v2855
      %v2897 = vunpack.c.l.b16 %v2856
      %v2898 = vunpack.c.l.b16 %v2857
      %v2899 = vunpack.c.l.b16 %v2858
      %v2900 = vpack.c.b16 %v2889, %v2888
      %v2901 = vpack.c.b16 %v2891, %v2890
      %v2902 = vpack.c.b16 %v2893, %v2892
      %v2903 = vpack.c.b16 %v2895, %v2894
      %v2904 = vpack.c.b16 %v2897, %v2896
      %v2905 = vpack.c.b16 %v2899, %v2898
      %v2928 = vunpack.c.l.b16 %v2860
      %v2929 = vunpack.c.l.b16 %v2861
      %v2930 = vunpack.c.l.b16 %v2862
      %v2931 = vunpack.c.l.b16 %v2863
      %v2932 = vunpack.c.l.b16 %v2864
      %v2933 = vunpack.c.l.b16 %v2865
      %v2934 = vunpack.c.l.b16 %v2866
      %v2935 = vunpack.c.l.b16 %v2867
      %v2936 = vunpack.c.l.b16 %v2868
      %v2937 = vunpack.c.l.b16 %v2869
      %v2938 = vunpack.c.l.b16 %v2870
      %v2939 = vunpack.c.l.b16 %v2871
      %v2940 = vunpack.c.l.b16 %v2872
      %v2941 = vunpack.c.l.b16 %v2873
      %v2942 = vunpack.c.l.b16 %v2874
      %v2943 = vunpack.c.l.b16 %v2875
      %v2944 = vpack.c.b16 %v2929, %v2928
      %v2945 = vpack.c.b16 %v2931, %v2930
      %v2946 = vpack.c.b16 %v2933, %v2932
      %v2947 = vpack.c.b16 %v2935, %v2934
      %v2948 = vpack.c.b16 %v2937, %v2936
      %v2949 = vpack.c.b16 %v2939, %v2938
      %v2950 = vpack.c.b16 %v2941, %v2940
      %v2951 = vpack.c.b16 %v2943, %v2942
      %2960 = vmatprep.subr.bf16.mxu0 0
      %2961 = vmatpush1.bf16.msra.mxu0 %v2951
      %2962 = vmatprep.subr.bf16.mxu0 0
      %2963 = vmatpush1.bf16.msra.mxu0 %v2950
      %2964 = vmatprep.subr.bf16.mxu0 0
      %2965 = vmatpush1.bf16.msra.mxu0 %v2949
      %2966 = vmatprep.subr.bf16.mxu0 0
      %2967 = vmatpush1.bf16.msra.mxu0 %v2948
      %2968 = vmatprep.subr.bf16.mxu0 0
      %2969 = vmatpush1.bf16.msra.mxu0 %v2947
      %2970 = vmatprep.subr.bf16.mxu0 0
      %2971 = vmatpush1.bf16.msra.mxu0 %v2946
      %2972 = vmatprep.subr.bf16.mxu0 0
      %2973 = vmatpush1.bf16.msra.mxu0 %v2945
      %2974 = vmatprep.subr.bf16.mxu0 0
      %2975 = vmatpush1.bf16.msra.mxu0 %v2944
      %2976 = vmatprep.subr.bf16.mxu0 0
      %2977 = vmatpush2.bf16.msra.mxu0 0
      %2978 = vmatprep.subr.bf16.mxu0 0
      %2979 = vmatpush2.bf16.msra.mxu0 0
      %2980 = vmatprep.subr.bf16.mxu0 0
      %2981 = vmatpush2.bf16.msra.mxu0 0
      %2982 = vmatprep.subr.bf16.mxu0 0
      %2983 = vmatpush2.bf16.msra.mxu0 0
      %2984 = vmatprep.subr.bf16.mxu0 0
      %2985 = vmatpush2.bf16.msra.mxu0 0
      %2986 = vmatprep.subr.bf16.mxu0 0
      %2987 = vmatpush2.bf16.msra.mxu0 0
      %2988 = vmatprep.subr.bf16.mxu0 0
      %2989 = vmatpush2.bf16.msra.mxu0 0
      %2990 = vmatprep.subr.bf16.mxu0 0
      %2991 = vmatpush2.bf16.msra.mxu0 0
      %2992 = vmatprep.mubr.bf16.mxu0 0
      %2993 = vmatmul.mubr.bf16.gmra.mxu0 %v2900
      %v2994 = vpop.f32.mrf.mxu0
      %v2995 = vadd.f32 0.0, %v2994
      %v2996 = vpop.f32.mrf.mxu0
      %v2997 = vpop.f32.mrf.mxu0
      %v2998 = vadd.f32 0.0, %v2997
      %v2999 = vpop.f32.mrf.mxu0
      %3000 = vmatprep.mubr.bf16.mxu0 0
      %3001 = vmatmul.mubr.bf16.gmra.mxu0 %v2901
      %v3002 = vpop.f32.mrf.mxu0
      %v3003 = vadd.f32 0.0, %v3002
      %v3004 = vpop.f32.mrf.mxu0
      %v3005 = vpop.f32.mrf.mxu0
      %v3006 = vadd.f32 0.0, %v3005
      %v3007 = vpop.f32.mrf.mxu0
      %3008 = vmatprep.mubr.bf16.mxu0 0
      %3009 = vmatmul.mubr.bf16.gmra.mxu0 %v2902
      %v3010 = vpop.f32.mrf.mxu0
      %v3011 = vadd.f32 0.0, %v3010
      %v3012 = vpop.f32.mrf.mxu0
      %v3013 = vpop.f32.mrf.mxu0
      %v3014 = vadd.f32 0.0, %v3013
      %v3015 = vpop.f32.mrf.mxu0
      %3016 = vmatprep.mubr.bf16.mxu0 0
      %3017 = vmatmul.mubr.bf16.gmra.mxu0 %v2903
      %v3018 = vpop.f32.mrf.mxu0
      %v3019 = vadd.f32 0.0, %v3018
      %v3020 = vpop.f32.mrf.mxu0
      %v3021 = vpop.f32.mrf.mxu0
      %v3022 = vadd.f32 0.0, %v3021
      %v3023 = vpop.f32.mrf.mxu0
      %3024 = vmatprep.mubr.bf16.mxu0 0
      %3025 = vmatmul.mubr.bf16.gmra.mxu0 %v2904
      %v3026 = vpop.f32.mrf.mxu0
      %v3027 = vadd.f32 0.0, %v3026
      %v3028 = vpop.f32.mrf.mxu0
      %v3029 = vpop.f32.mrf.mxu0
      %v3030 = vadd.f32 0.0, %v3029
      %v3031 = vpop.f32.mrf.mxu0
      %3032 = vmatprep.mubr.bf16.mxu0 0
      %3033 = vmatmul.mubr.bf16.gmra.mxu0 %v2905
      %v3034 = vpop.f32.mrf.mxu0
      %v3035 = vadd.f32 0.0, %v3034
      %v3036 = vpop.f32.mrf.mxu0
      %v3037 = vpop.f32.mrf.mxu0
      %v3038 = vadd.f32 0.0, %v3037
      %v3039 = vpop.f32.mrf.mxu0
      %3040 = vdwg.mxu0
      %v3041 = vadd.f32 %v2835, %v2995
      %v3042 = vadd.f32 %v2836, %v2998
      %v3043 = vadd.f32 %v2837, %v3003
      %v3044 = vadd.f32 %v2838, %v3006
      %v3045 = vadd.f32 %v2839, %v3011
      %v3046 = vadd.f32 %v2840, %v3014
      %v3047 = vadd.f32 %v2841, %v3019
      %v3048 = vadd.f32 %v2842, %v3022
      %v3049 = vadd.f32 %v2843, %v3027
      %v3050 = vadd.f32 %v2844, %v3030
      %v3051 = vadd.f32 %v2845, %v3035
      %v3052 = vadd.f32 %v2846, %v3038
      %v3053 = vld [vmem:[%s1549] sm:$0xf]
      %v3054 = vld [vmem:[%s1549 + $0x4] sm:$0xf]
      %v3055 = vld [vmem:[%s1549 + $0x8] sm:$0xf]
      %v3056 = vld [vmem:[%s1549 + $0xc] sm:$0xf]
      %v3057 = vld [vmem:[%s1549 + $0x10] sm:$0xf]
      %v3058 = vld [vmem:[%s1549 + $0x14] sm:$0xf]
      %v3059 = vld [vmem:[%s1549 + $0x18] sm:$0xf]
      %v3060 = vld [vmem:[%s1549 + $0x1c] sm:$0xf]
      %v3061 = vld [vmem:[%s1549 + $0x20] sm:$0xf]
      %v3062 = vld [vmem:[%s1549 + $0x24] sm:$0xf]
      %v3063 = vld [vmem:[%s1549 + $0x28] sm:$0xf]
      %v3064 = vld [vmem:[%s1549 + $0x2c] sm:$0xf]
      %v3065 = vld [vmem:[%s1549 + $0x30] sm:$0x1]
      %s3066 = scalar_lea.vmem %s2, 320
      %v3067 = vld [vmem:[%s3066] sm:$0xf]
      %v3068 = vld [vmem:[%s3066 + $0x4] sm:$0xf]
      %v3069 = vld [vmem:[%s3066 + $0x8] sm:$0xf]
      %v3070 = vld [vmem:[%s3066 + $0xc] sm:$0xf]
      %v3071 = vld [vmem:[%s3066 + $0x10] sm:$0xf]
      %v3072 = vld [vmem:[%s3066 + $0x14] sm:$0xf]
      %v3073 = vld [vmem:[%s3066 + $0x18] sm:$0xf]
      %v3074 = vld [vmem:[%s3066 + $0x1c] sm:$0xf]
      %v3075 = vld [vmem:[%s3066 + $0x20] sm:$0xf]
      %v3076 = vld [vmem:[%s3066 + $0x24] sm:$0xf]
      %v3077 = vld [vmem:[%s3066 + $0x28] sm:$0xf]
      %v3078 = vld [vmem:[%s3066 + $0x2c] sm:$0xf]
      %v3079 = vld [vmem:[%s3066 + $0x30] sm:$0xf]
      %v3080 = vld [vmem:[%s3066 + $0x34] sm:$0xf]
      %v3081 = vld [vmem:[%s3066 + $0x38] sm:$0xf]
      %v3082 = vld [vmem:[%s3066 + $0x3c] sm:$0xf]
      %v3096 = vunpack.c.l.b16 %v3053
      %v3097 = vunpack.c.l.b16 %v3054
      %v3098 = vunpack.c.l.b16 %v3055
      %v3099 = vunpack.c.l.b16 %v3056
      %v3100 = vunpack.c.l.b16 %v3057
      %v3101 = vunpack.c.l.b16 %v3058
      %v3102 = vunpack.c.l.b16 %v3059
      %v3103 = vunpack.c.l.b16 %v3060
      %v3104 = vunpack.c.l.b16 %v3061
      %v3105 = vunpack.c.l.b16 %v3062
      %v3106 = vunpack.c.l.b16 %v3063
      %v3107 = vunpack.c.l.b16 %v3064
      %v3108 = vunpack.c.l.b16 %v3065
      %v3109 = vpack.c.b16 %v3097, %v3096
      %v3110 = vpack.c.b16 %v3099, %v3098
      %v3111 = vpack.c.b16 %v3101, %v3100
      %v3112 = vpack.c.b16 %v3103, %v3102
      %v3113 = vpack.c.b16 %v3105, %v3104
      %v3114 = vpack.c.b16 %v3107, %v3106
      %v3115 = vpack.c.b16 %v3108, %v3108
      %v3117 = vshrl.u32 %v3109, 16
      %v3119 = vshll.u32 %v3109, 16
      %v3121 = vrot.slane %v3119, 1
      %v3122 = vor.u32 %v3117, %v3121
      %v3124 = vshll.u32 %v3110, 16
      %v3126 = vrot.slane %v3124, 1
      %v3127 = vsel %vm2441, %v3122, %v3126
      %v3128 = vshrl.u32 %v3110, 16
      %v3130 = vor.u32 %v3128, %v3126
      %v3132 = vshll.u32 %v3111, 16
      %v3134 = vrot.slane %v3132, 1
      %v3135 = vsel %vm2441, %v3130, %v3134
      %v3136 = vshrl.u32 %v3111, 16
      %v3138 = vor.u32 %v3136, %v3134
      %v3140 = vshll.u32 %v3112, 16
      %v3142 = vrot.slane %v3140, 1
      %v3143 = vsel %vm2441, %v3138, %v3142
      %v3144 = vshrl.u32 %v3112, 16
      %v3146 = vor.u32 %v3144, %v3142
      %v3148 = vshll.u32 %v3113, 16
      %v3150 = vrot.slane %v3148, 1
      %v3151 = vsel %vm2441, %v3146, %v3150
      %v3152 = vshrl.u32 %v3113, 16
      %v3154 = vor.u32 %v3152, %v3150
      %v3156 = vshll.u32 %v3114, 16
      %v3158 = vrot.slane %v3156, 1
      %v3159 = vsel %vm2441, %v3154, %v3158
      %v3160 = vshrl.u32 %v3114, 16
      %v3162 = vor.u32 %v3160, %v3158
      %v3164 = vshll.u32 %v3115, 16
      %v3166 = vrot.slane %v3164, 1
      %v3167 = vsel %vm2441, %v3162, %v3166
      %v3190 = vunpack.c.l.b16 %v3067
      %v3191 = vunpack.c.l.b16 %v3068
      %v3192 = vunpack.c.l.b16 %v3069
      %v3193 = vunpack.c.l.b16 %v3070
      %v3194 = vunpack.c.l.b16 %v3071
      %v3195 = vunpack.c.l.b16 %v3072
      %v3196 = vunpack.c.l.b16 %v3073
      %v3197 = vunpack.c.l.b16 %v3074
      %v3198 = vunpack.c.l.b16 %v3075
      %v3199 = vunpack.c.l.b16 %v3076
      %v3200 = vunpack.c.l.b16 %v3077
      %v3201 = vunpack.c.l.b16 %v3078
      %v3202 = vunpack.c.l.b16 %v3079
      %v3203 = vunpack.c.l.b16 %v3080
      %v3204 = vunpack.c.l.b16 %v3081
      %v3205 = vunpack.c.l.b16 %v3082
      %v3206 = vpack.c.b16 %v3191, %v3190
      %v3207 = vpack.c.b16 %v3193, %v3192
      %v3208 = vpack.c.b16 %v3195, %v3194
      %v3209 = vpack.c.b16 %v3197, %v3196
      %v3210 = vpack.c.b16 %v3199, %v3198
      %v3211 = vpack.c.b16 %v3201, %v3200
      %v3212 = vpack.c.b16 %v3203, %v3202
      %v3213 = vpack.c.b16 %v3205, %v3204
      %3222 = vmatprep.subr.bf16.mxu0 0
      %3223 = vmatpush1.bf16.msra.mxu0 %v3213
      %3224 = vmatprep.subr.bf16.mxu0 0
      %3225 = vmatpush1.bf16.msra.mxu0 %v3212
      %3226 = vmatprep.subr.bf16.mxu0 0
      %3227 = vmatpush1.bf16.msra.mxu0 %v3211
      %3228 = vmatprep.subr.bf16.mxu0 0
      %3229 = vmatpush1.bf16.msra.mxu0 %v3210
      %3230 = vmatprep.subr.bf16.mxu0 0
      %3231 = vmatpush1.bf16.msra.mxu0 %v3209
      %3232 = vmatprep.subr.bf16.mxu0 0
      %3233 = vmatpush1.bf16.msra.mxu0 %v3208
      %3234 = vmatprep.subr.bf16.mxu0 0
      %3235 = vmatpush1.bf16.msra.mxu0 %v3207
      %3236 = vmatprep.subr.bf16.mxu0 0
      %3237 = vmatpush1.bf16.msra.mxu0 %v3206
      %3238 = vmatprep.subr.bf16.mxu0 0
      %3239 = vmatpush2.bf16.msra.mxu0 0
      %3240 = vmatprep.subr.bf16.mxu0 0
      %3241 = vmatpush2.bf16.msra.mxu0 0
      %3242 = vmatprep.subr.bf16.mxu0 0
      %3243 = vmatpush2.bf16.msra.mxu0 0
      %3244 = vmatprep.subr.bf16.mxu0 0
      %3245 = vmatpush2.bf16.msra.mxu0 0
      %3246 = vmatprep.subr.bf16.mxu0 0
      %3247 = vmatpush2.bf16.msra.mxu0 0
      %3248 = vmatprep.subr.bf16.mxu0 0
      %3249 = vmatpush2.bf16.msra.mxu0 0
      %3250 = vmatprep.subr.bf16.mxu0 0
      %3251 = vmatpush2.bf16.msra.mxu0 0
      %3252 = vmatprep.subr.bf16.mxu0 0
      %3253 = vmatpush2.bf16.msra.mxu0 0
      %3254 = vmatprep.mubr.bf16.mxu0 0
      %3255 = vmatmul.mubr.bf16.gmra.mxu0 %v3127
      %v3256 = vpop.f32.mrf.mxu0
      %v3257 = vadd.f32 0.0, %v3256
      %v3258 = vpop.f32.mrf.mxu0
      %v3259 = vpop.f32.mrf.mxu0
      %v3260 = vadd.f32 0.0, %v3259
      %v3261 = vpop.f32.mrf.mxu0
      %3262 = vmatprep.mubr.bf16.mxu0 0
      %3263 = vmatmul.mubr.bf16.gmra.mxu0 %v3135
      %v3264 = vpop.f32.mrf.mxu0
      %v3265 = vadd.f32 0.0, %v3264
      %v3266 = vpop.f32.mrf.mxu0
      %v3267 = vpop.f32.mrf.mxu0
      %v3268 = vadd.f32 0.0, %v3267
      %v3269 = vpop.f32.mrf.mxu0
      %3270 = vmatprep.mubr.bf16.mxu0 0
      %3271 = vmatmul.mubr.bf16.gmra.mxu0 %v3143
      %v3272 = vpop.f32.mrf.mxu0
      %v3273 = vadd.f32 0.0, %v3272
      %v3274 = vpop.f32.mrf.mxu0
      %v3275 = vpop.f32.mrf.mxu0
      %v3276 = vadd.f32 0.0, %v3275
      %v3277 = vpop.f32.mrf.mxu0
      %3278 = vmatprep.mubr.bf16.mxu0 0
      %3279 = vmatmul.mubr.bf16.gmra.mxu0 %v3151
      %v3280 = vpop.f32.mrf.mxu0
      %v3281 = vadd.f32 0.0, %v3280
      %v3282 = vpop.f32.mrf.mxu0
      %v3283 = vpop.f32.mrf.mxu0
      %v3284 = vadd.f32 0.0, %v3283
      %v3285 = vpop.f32.mrf.mxu0
      %3286 = vmatprep.mubr.bf16.mxu0 0
      %3287 = vmatmul.mubr.bf16.gmra.mxu0 %v3159
      %v3288 = vpop.f32.mrf.mxu0
      %v3289 = vadd.f32 0.0, %v3288
      %v3290 = vpop.f32.mrf.mxu0
      %v3291 = vpop.f32.mrf.mxu0
      %v3292 = vadd.f32 0.0, %v3291
      %v3293 = vpop.f32.mrf.mxu0
      %3294 = vmatprep.mubr.bf16.mxu0 0
      %3295 = vmatmul.mubr.bf16.gmra.mxu0 %v3167
      %v3296 = vpop.f32.mrf.mxu0
      %v3297 = vadd.f32 0.0, %v3296
      %v3298 = vpop.f32.mrf.mxu0
      %v3299 = vpop.f32.mrf.mxu0
      %v3300 = vadd.f32 0.0, %v3299
      %v3301 = vpop.f32.mrf.mxu0
      %3302 = vdwg.mxu0
      %v3303 = vadd.f32 %v3041, %v3257
      %v3304 = vadd.f32 %v3042, %v3260
      %v3305 = vadd.f32 %v3043, %v3265
      %v3306 = vadd.f32 %v3044, %v3268
      %v3307 = vadd.f32 %v3045, %v3273
      %v3308 = vadd.f32 %v3046, %v3276
      %v3309 = vadd.f32 %v3047, %v3281
      %v3310 = vadd.f32 %v3048, %v3284
      %v3311 = vadd.f32 %v3049, %v3289
      %v3312 = vadd.f32 %v3050, %v3292
      %v3313 = vadd.f32 %v3051, %v3297
      %v3314 = vadd.f32 %v3052, %v3300
      %v3315 = vld [vmem:[#allocation2 + $0x4] sm:$0xf]
      %v3316 = vld [vmem:[#allocation2 + $0x8] sm:$0xf]
      %v3317 = vld [vmem:[#allocation2 + $0xc] sm:$0xf]
      %v3318 = vld [vmem:[#allocation2 + $0x10] sm:$0xf]
      %v3319 = vld [vmem:[#allocation2 + $0x14] sm:$0xf]
      %v3320 = vld [vmem:[#allocation2 + $0x18] sm:$0xf]
      %v3321 = vld [vmem:[#allocation2 + $0x1c] sm:$0xf]
      %v3322 = vld [vmem:[#allocation2 + $0x20] sm:$0xf]
      %v3323 = vld [vmem:[#allocation2 + $0x24] sm:$0xf]
      %v3324 = vld [vmem:[#allocation2 + $0x28] sm:$0xf]
      %v3325 = vld [vmem:[#allocation2 + $0x2c] sm:$0xf]
      %v3326 = vld [vmem:[#allocation2 + $0x30] sm:$0xf]
      %v3327 = vld [vmem:[#allocation2 + $0x34] sm:$0x1]
      %s3328 = scalar_lea.vmem %s2, 384
      %v3329 = vld [vmem:[%s3328] sm:$0xf]
      %v3330 = vld [vmem:[%s3328 + $0x4] sm:$0xf]
      %v3331 = vld [vmem:[%s3328 + $0x8] sm:$0xf]
      %v3332 = vld [vmem:[%s3328 + $0xc] sm:$0xf]
      %v3333 = vld [vmem:[%s3328 + $0x10] sm:$0xf]
      %v3334 = vld [vmem:[%s3328 + $0x14] sm:$0xf]
      %v3335 = vld [vmem:[%s3328 + $0x18] sm:$0xf]
      %v3336 = vld [vmem:[%s3328 + $0x1c] sm:$0xf]
      %v3337 = vld [vmem:[%s3328 + $0x20] sm:$0xf]
      %v3338 = vld [vmem:[%s3328 + $0x24] sm:$0xf]
      %v3339 = vld [vmem:[%s3328 + $0x28] sm:$0xf]
      %v3340 = vld [vmem:[%s3328 + $0x2c] sm:$0xf]
      %v3341 = vld [vmem:[%s3328 + $0x30] sm:$0xf]
      %v3342 = vld [vmem:[%s3328 + $0x34] sm:$0xf]
      %v3343 = vld [vmem:[%s3328 + $0x38] sm:$0xf]
      %v3344 = vld [vmem:[%s3328 + $0x3c] sm:$0xf]
      %v3358 = vunpack.c.l.b16 %v3315
      %v3359 = vunpack.c.l.b16 %v3316
      %v3360 = vunpack.c.l.b16 %v3317
      %v3361 = vunpack.c.l.b16 %v3318
      %v3362 = vunpack.c.l.b16 %v3319
      %v3363 = vunpack.c.l.b16 %v3320
      %v3364 = vunpack.c.l.b16 %v3321
      %v3365 = vunpack.c.l.b16 %v3322
      %v3366 = vunpack.c.l.b16 %v3323
      %v3367 = vunpack.c.l.b16 %v3324
      %v3368 = vunpack.c.l.b16 %v3325
      %v3369 = vunpack.c.l.b16 %v3326
      %v3370 = vunpack.c.l.b16 %v3327
      %v3371 = vpack.c.b16 %v3359, %v3358
      %v3372 = vpack.c.b16 %v3361, %v3360
      %v3373 = vpack.c.b16 %v3363, %v3362
      %v3374 = vpack.c.b16 %v3365, %v3364
      %v3375 = vpack.c.b16 %v3367, %v3366
      %v3376 = vpack.c.b16 %v3369, %v3368
      %v3377 = vpack.c.b16 %v3370, %v3370
      %v3379 = vshrl.u32 %v3371, 16
      %v3381 = vshll.u32 %v3371, 16
      %v3383 = vrot.slane %v3381, 1
      %v3384 = vor.u32 %v3379, %v3383
      %v3386 = vshll.u32 %v3372, 16
      %v3388 = vrot.slane %v3386, 1
      %v3389 = vsel %vm2441, %v3384, %v3388
      %v3390 = vshrl.u32 %v3372, 16
      %v3392 = vor.u32 %v3390, %v3388
      %v3394 = vshll.u32 %v3373, 16
      %v3396 = vrot.slane %v3394, 1
      %v3397 = vsel %vm2441, %v3392, %v3396
      %v3398 = vshrl.u32 %v3373, 16
      %v3400 = vor.u32 %v3398, %v3396
      %v3402 = vshll.u32 %v3374, 16
      %v3404 = vrot.slane %v3402, 1
      %v3405 = vsel %vm2441, %v3400, %v3404
      %v3406 = vshrl.u32 %v3374, 16
      %v3408 = vor.u32 %v3406, %v3404
      %v3410 = vshll.u32 %v3375, 16
      %v3412 = vrot.slane %v3410, 1
      %v3413 = vsel %vm2441, %v3408, %v3412
      %v3414 = vshrl.u32 %v3375, 16
      %v3416 = vor.u32 %v3414, %v3412
      %v3418 = vshll.u32 %v3376, 16
      %v3420 = vrot.slane %v3418, 1
      %v3421 = vsel %vm2441, %v3416, %v3420
      %v3422 = vshrl.u32 %v3376, 16
      %v3424 = vor.u32 %v3422, %v3420
      %v3426 = vshll.u32 %v3377, 16
      %v3428 = vrot.slane %v3426, 1
      %v3429 = vsel %vm2441, %v3424, %v3428
      %v3452 = vunpack.c.l.b16 %v3329
      %v3453 = vunpack.c.l.b16 %v3330
      %v3454 = vunpack.c.l.b16 %v3331
      %v3455 = vunpack.c.l.b16 %v3332
      %v3456 = vunpack.c.l.b16 %v3333
      %v3457 = vunpack.c.l.b16 %v3334
      %v3458 = vunpack.c.l.b16 %v3335
      %v3459 = vunpack.c.l.b16 %v3336
      %v3460 = vunpack.c.l.b16 %v3337
      %v3461 = vunpack.c.l.b16 %v3338
      %v3462 = vunpack.c.l.b16 %v3339
      %v3463 = vunpack.c.l.b16 %v3340
      %v3464 = vunpack.c.l.b16 %v3341
      %v3465 = vunpack.c.l.b16 %v3342
      %v3466 = vunpack.c.l.b16 %v3343
      %v3467 = vunpack.c.l.b16 %v3344
      %v3468 = vpack.c.b16 %v3453, %v3452
      %v3469 = vpack.c.b16 %v3455, %v3454
      %v3470 = vpack.c.b16 %v3457, %v3456
      %v3471 = vpack.c.b16 %v3459, %v3458
      %v3472 = vpack.c.b16 %v3461, %v3460
      %v3473 = vpack.c.b16 %v3463, %v3462
      %v3474 = vpack.c.b16 %v3465, %v3464
      %v3475 = vpack.c.b16 %v3467, %v3466
      %3484 = vmatprep.subr.bf16.mxu0 0
      %3485 = vmatpush1.bf16.msra.mxu0 %v3475
      %3486 = vmatprep.subr.bf16.mxu0 0
      %3487 = vmatpush1.bf16.msra.mxu0 %v3474
      %3488 = vmatprep.subr.bf16.mxu0 0
      %3489 = vmatpush1.bf16.msra.mxu0 %v3473
      %3490 = vmatprep.subr.bf16.mxu0 0
      %3491 = vmatpush1.bf16.msra.mxu0 %v3472
      %3492 = vmatprep.subr.bf16.mxu0 0
      %3493 = vmatpush1.bf16.msra.mxu0 %v3471
      %3494 = vmatprep.subr.bf16.mxu0 0
      %3495 = vmatpush1.bf16.msra.mxu0 %v3470
      %3496 = vmatprep.subr.bf16.mxu0 0
      %3497 = vmatpush1.bf16.msra.mxu0 %v3469
      %3498 = vmatprep.subr.bf16.mxu0 0
      %3499 = vmatpush1.bf16.msra.mxu0 %v3468
      %3500 = vmatprep.subr.bf16.mxu0 0
      %3501 = vmatpush2.bf16.msra.mxu0 0
      %3502 = vmatprep.subr.bf16.mxu0 0
      %3503 = vmatpush2.bf16.msra.mxu0 0
      %3504 = vmatprep.subr.bf16.mxu0 0
      %3505 = vmatpush2.bf16.msra.mxu0 0
      %3506 = vmatprep.subr.bf16.mxu0 0
      %3507 = vmatpush2.bf16.msra.mxu0 0
      %3508 = vmatprep.subr.bf16.mxu0 0
      %3509 = vmatpush2.bf16.msra.mxu0 0
      %3510 = vmatprep.subr.bf16.mxu0 0
      %3511 = vmatpush2.bf16.msra.mxu0 0
      %3512 = vmatprep.subr.bf16.mxu0 0
      %3513 = vmatpush2.bf16.msra.mxu0 0
      %3514 = vmatprep.subr.bf16.mxu0 0
      %3515 = vmatpush2.bf16.msra.mxu0 0
      %3516 = vmatprep.mubr.bf16.mxu0 0
      %3517 = vmatmul.mubr.bf16.gmra.mxu0 %v3389
      %v3518 = vpop.f32.mrf.mxu0
      %v3519 = vadd.f32 0.0, %v3518
      %v3520 = vpop.f32.mrf.mxu0
      %v3521 = vpop.f32.mrf.mxu0
      %v3522 = vadd.f32 0.0, %v3521
      %v3523 = vpop.f32.mrf.mxu0
      %3524 = vmatprep.mubr.bf16.mxu0 0
      %3525 = vmatmul.mubr.bf16.gmra.mxu0 %v3397
      %v3526 = vpop.f32.mrf.mxu0
      %v3527 = vadd.f32 0.0, %v3526
      %v3528 = vpop.f32.mrf.mxu0
      %v3529 = vpop.f32.mrf.mxu0
      %v3530 = vadd.f32 0.0, %v3529
      %v3531 = vpop.f32.mrf.mxu0
      %3532 = vmatprep.mubr.bf16.mxu0 0
      %3533 = vmatmul.mubr.bf16.gmra.mxu0 %v3405
      %v3534 = vpop.f32.mrf.mxu0
      %v3535 = vadd.f32 0.0, %v3534
      %v3536 = vpop.f32.mrf.mxu0
      %v3537 = vpop.f32.mrf.mxu0
      %v3538 = vadd.f32 0.0, %v3537
      %v3539 = vpop.f32.mrf.mxu0
      %3540 = vmatprep.mubr.bf16.mxu0 0
      %3541 = vmatmul.mubr.bf16.gmra.mxu0 %v3413
      %v3542 = vpop.f32.mrf.mxu0
      %v3543 = vadd.f32 0.0, %v3542
      %v3544 = vpop.f32.mrf.mxu0
      %v3545 = vpop.f32.mrf.mxu0
      %v3546 = vadd.f32 0.0, %v3545
      %v3547 = vpop.f32.mrf.mxu0
      %3548 = vmatprep.mubr.bf16.mxu0 0
      %3549 = vmatmul.mubr.bf16.gmra.mxu0 %v3421
      %v3550 = vpop.f32.mrf.mxu0
      %v3551 = vadd.f32 0.0, %v3550
      %v3552 = vpop.f32.mrf.mxu0
      %v3553 = vpop.f32.mrf.mxu0
      %v3554 = vadd.f32 0.0, %v3553
      %v3555 = vpop.f32.mrf.mxu0
      %3556 = vmatprep.mubr.bf16.mxu0 0
      %3557 = vmatmul.mubr.bf16.gmra.mxu0 %v3429
      %v3558 = vpop.f32.mrf.mxu0
      %v3559 = vadd.f32 0.0, %v3558
      %v3560 = vpop.f32.mrf.mxu0
      %v3561 = vpop.f32.mrf.mxu0
      %v3562 = vadd.f32 0.0, %v3561
      %v3563 = vpop.f32.mrf.mxu0
      %3564 = vdwg.mxu0
      %v3565 = vadd.f32 %v3303, %v3519
      %v3566 = vadd.f32 %v3304, %v3522
      %v3567 = vadd.f32 %v3305, %v3527
      %v3568 = vadd.f32 %v3306, %v3530
      %v3569 = vadd.f32 %v3307, %v3535
      %v3570 = vadd.f32 %v3308, %v3538
      %v3571 = vadd.f32 %v3309, %v3543
      %v3572 = vadd.f32 %v3310, %v3546
      %v3573 = vadd.f32 %v3311, %v3551
      %v3574 = vadd.f32 %v3312, %v3554
      %v3575 = vadd.f32 %v3313, %v3559
      %v3576 = vadd.f32 %v3314, %v3562
      %v3577 = vld [vmem:[%s1128 + $0x4] sm:$0xf]
      %v3578 = vld [vmem:[%s1128 + $0x8] sm:$0xf]
      %v3579 = vld [vmem:[%s1128 + $0xc] sm:$0xf]
      %v3580 = vld [vmem:[%s1128 + $0x10] sm:$0xf]
      %v3581 = vld [vmem:[%s1128 + $0x14] sm:$0xf]
      %v3582 = vld [vmem:[%s1128 + $0x18] sm:$0xf]
      %v3583 = vld [vmem:[%s1128 + $0x1c] sm:$0xf]
      %v3584 = vld [vmem:[%s1128 + $0x20] sm:$0xf]
      %v3585 = vld [vmem:[%s1128 + $0x24] sm:$0xf]
      %v3586 = vld [vmem:[%s1128 + $0x28] sm:$0xf]
      %v3587 = vld [vmem:[%s1128 + $0x2c] sm:$0xf]
      %v3588 = vld [vmem:[%s1128 + $0x30] sm:$0xf]
      %v3589 = vld [vmem:[%s1128 + $0x34] sm:$0x1]
      %s3590 = scalar_lea.vmem %s2, 448
      %v3591 = vld [vmem:[%s3590] sm:$0xf]
      %v3592 = vld [vmem:[%s3590 + $0x4] sm:$0xf]
      %v3593 = vld [vmem:[%s3590 + $0x8] sm:$0xf]
      %v3594 = vld [vmem:[%s3590 + $0xc] sm:$0xf]
      %v3595 = vld [vmem:[%s3590 + $0x10] sm:$0xf]
      %v3596 = vld [vmem:[%s3590 + $0x14] sm:$0xf]
      %v3597 = vld [vmem:[%s3590 + $0x18] sm:$0xf]
      %v3598 = vld [vmem:[%s3590 + $0x1c] sm:$0xf]
      %v3599 = vld [vmem:[%s3590 + $0x20] sm:$0xf]
      %v3600 = vld [vmem:[%s3590 + $0x24] sm:$0xf]
      %v3601 = vld [vmem:[%s3590 + $0x28] sm:$0xf]
      %v3602 = vld [vmem:[%s3590 + $0x2c] sm:$0xf]
      %v3603 = vld [vmem:[%s3590 + $0x30] sm:$0xf]
      %v3604 = vld [vmem:[%s3590 + $0x34] sm:$0xf]
      %v3605 = vld [vmem:[%s3590 + $0x38] sm:$0xf]
      %v3606 = vld [vmem:[%s3590 + $0x3c] sm:$0xf]
      %v3620 = vunpack.c.l.b16 %v3577
      %v3621 = vunpack.c.l.b16 %v3578
      %v3622 = vunpack.c.l.b16 %v3579
      %v3623 = vunpack.c.l.b16 %v3580
      %v3624 = vunpack.c.l.b16 %v3581
      %v3625 = vunpack.c.l.b16 %v3582
      %v3626 = vunpack.c.l.b16 %v3583
      %v3627 = vunpack.c.l.b16 %v3584
      %v3628 = vunpack.c.l.b16 %v3585
      %v3629 = vunpack.c.l.b16 %v3586
      %v3630 = vunpack.c.l.b16 %v3587
      %v3631 = vunpack.c.l.b16 %v3588
      %v3632 = vunpack.c.l.b16 %v3589
      %v3633 = vpack.c.b16 %v3621, %v3620
      %v3634 = vpack.c.b16 %v3623, %v3622
      %v3635 = vpack.c.b16 %v3625, %v3624
      %v3636 = vpack.c.b16 %v3627, %v3626
      %v3637 = vpack.c.b16 %v3629, %v3628
      %v3638 = vpack.c.b16 %v3631, %v3630
      %v3639 = vpack.c.b16 %v3632, %v3632
      %v3641 = vshrl.u32 %v3633, 16
      %v3643 = vshll.u32 %v3633, 16
      %v3645 = vrot.slane %v3643, 1
      %v3646 = vor.u32 %v3641, %v3645
      %v3648 = vshll.u32 %v3634, 16
      %v3650 = vrot.slane %v3648, 1
      %v3651 = vsel %vm2441, %v3646, %v3650
      %v3652 = vshrl.u32 %v3634, 16
      %v3654 = vor.u32 %v3652, %v3650
      %v3656 = vshll.u32 %v3635, 16
      %v3658 = vrot.slane %v3656, 1
      %v3659 = vsel %vm2441, %v3654, %v3658
      %v3660 = vshrl.u32 %v3635, 16
      %v3662 = vor.u32 %v3660, %v3658
      %v3664 = vshll.u32 %v3636, 16
      %v3666 = vrot.slane %v3664, 1
      %v3667 = vsel %vm2441, %v3662, %v3666
      %v3668 = vshrl.u32 %v3636, 16
      %v3670 = vor.u32 %v3668, %v3666
      %v3672 = vshll.u32 %v3637, 16
      %v3674 = vrot.slane %v3672, 1
      %v3675 = vsel %vm2441, %v3670, %v3674
      %v3676 = vshrl.u32 %v3637, 16
      %v3678 = vor.u32 %v3676, %v3674
      %v3680 = vshll.u32 %v3638, 16
      %v3682 = vrot.slane %v3680, 1
      %v3683 = vsel %vm2441, %v3678, %v3682
      %v3684 = vshrl.u32 %v3638, 16
      %v3686 = vor.u32 %v3684, %v3682
      %v3688 = vshll.u32 %v3639, 16
      %v3690 = vrot.slane %v3688, 1
      %v3691 = vsel %vm2441, %v3686, %v3690
      %v3714 = vunpack.c.l.b16 %v3591
      %v3715 = vunpack.c.l.b16 %v3592
      %v3716 = vunpack.c.l.b16 %v3593
      %v3717 = vunpack.c.l.b16 %v3594
      %v3718 = vunpack.c.l.b16 %v3595
      %v3719 = vunpack.c.l.b16 %v3596
      %v3720 = vunpack.c.l.b16 %v3597
      %v3721 = vunpack.c.l.b16 %v3598
      %v3722 = vunpack.c.l.b16 %v3599
      %v3723 = vunpack.c.l.b16 %v3600
      %v3724 = vunpack.c.l.b16 %v3601
      %v3725 = vunpack.c.l.b16 %v3602
      %v3726 = vunpack.c.l.b16 %v3603
      %v3727 = vunpack.c.l.b16 %v3604
      %v3728 = vunpack.c.l.b16 %v3605
      %v3729 = vunpack.c.l.b16 %v3606
      %v3730 = vpack.c.b16 %v3715, %v3714
      %v3731 = vpack.c.b16 %v3717, %v3716
      %v3732 = vpack.c.b16 %v3719, %v3718
      %v3733 = vpack.c.b16 %v3721, %v3720
      %v3734 = vpack.c.b16 %v3723, %v3722
      %v3735 = vpack.c.b16 %v3725, %v3724
      %v3736 = vpack.c.b16 %v3727, %v3726
      %v3737 = vpack.c.b16 %v3729, %v3728
      %3746 = vmatprep.subr.bf16.mxu0 0
      %3747 = vmatpush1.bf16.msra.mxu0 %v3737
      %3748 = vmatprep.subr.bf16.mxu0 0
      %3749 = vmatpush1.bf16.msra.mxu0 %v3736
      %3750 = vmatprep.subr.bf16.mxu0 0
      %3751 = vmatpush1.bf16.msra.mxu0 %v3735
      %3752 = vmatprep.subr.bf16.mxu0 0
      %3753 = vmatpush1.bf16.msra.mxu0 %v3734
      %3754 = vmatprep.subr.bf16.mxu0 0
      %3755 = vmatpush1.bf16.msra.mxu0 %v3733
      %3756 = vmatprep.subr.bf16.mxu0 0
      %3757 = vmatpush1.bf16.msra.mxu0 %v3732
      %3758 = vmatprep.subr.bf16.mxu0 0
      %3759 = vmatpush1.bf16.msra.mxu0 %v3731
      %3760 = vmatprep.subr.bf16.mxu0 0
      %3761 = vmatpush1.bf16.msra.mxu0 %v3730
      %3762 = vmatprep.subr.bf16.mxu0 0
      %3763 = vmatpush2.bf16.msra.mxu0 0
      %3764 = vmatprep.subr.bf16.mxu0 0
      %3765 = vmatpush2.bf16.msra.mxu0 0
      %3766 = vmatprep.subr.bf16.mxu0 0
      %3767 = vmatpush2.bf16.msra.mxu0 0
      %3768 = vmatprep.subr.bf16.mxu0 0
      %3769 = vmatpush2.bf16.msra.mxu0 0
      %3770 = vmatprep.subr.bf16.mxu0 0
      %3771 = vmatpush2.bf16.msra.mxu0 0
      %3772 = vmatprep.subr.bf16.mxu0 0
      %3773 = vmatpush2.bf16.msra.mxu0 0
      %3774 = vmatprep.subr.bf16.mxu0 0
      %3775 = vmatpush2.bf16.msra.mxu0 0
      %3776 = vmatprep.subr.bf16.mxu0 0
      %3777 = vmatpush2.bf16.msra.mxu0 0
      %3778 = vmatprep.mubr.bf16.mxu0 0
      %3779 = vmatmul.mubr.bf16.gmra.mxu0 %v3651
      %v3780 = vpop.f32.mrf.mxu0
      %v3781 = vadd.f32 0.0, %v3780
      %v3782 = vpop.f32.mrf.mxu0
      %v3783 = vpop.f32.mrf.mxu0
      %v3784 = vadd.f32 0.0, %v3783
      %v3785 = vpop.f32.mrf.mxu0
      %3786 = vmatprep.mubr.bf16.mxu0 0
      %3787 = vmatmul.mubr.bf16.gmra.mxu0 %v3659
      %v3788 = vpop.f32.mrf.mxu0
      %v3789 = vadd.f32 0.0, %v3788
      %v3790 = vpop.f32.mrf.mxu0
      %v3791 = vpop.f32.mrf.mxu0
      %v3792 = vadd.f32 0.0, %v3791
      %v3793 = vpop.f32.mrf.mxu0
      %3794 = vmatprep.mubr.bf16.mxu0 0
      %3795 = vmatmul.mubr.bf16.gmra.mxu0 %v3667
      %v3796 = vpop.f32.mrf.mxu0
      %v3797 = vadd.f32 0.0, %v3796
      %v3798 = vpop.f32.mrf.mxu0
      %v3799 = vpop.f32.mrf.mxu0
      %v3800 = vadd.f32 0.0, %v3799
      %v3801 = vpop.f32.mrf.mxu0
      %3802 = vmatprep.mubr.bf16.mxu0 0
      %3803 = vmatmul.mubr.bf16.gmra.mxu0 %v3675
      %v3804 = vpop.f32.mrf.mxu0
      %v3805 = vadd.f32 0.0, %v3804
      %v3806 = vpop.f32.mrf.mxu0
      %v3807 = vpop.f32.mrf.mxu0
      %v3808 = vadd.f32 0.0, %v3807
      %v3809 = vpop.f32.mrf.mxu0
      %3810 = vmatprep.mubr.bf16.mxu0 0
      %3811 = vmatmul.mubr.bf16.gmra.mxu0 %v3683
      %v3812 = vpop.f32.mrf.mxu0
      %v3813 = vadd.f32 0.0, %v3812
      %v3814 = vpop.f32.mrf.mxu0
      %v3815 = vpop.f32.mrf.mxu0
      %v3816 = vadd.f32 0.0, %v3815
      %v3817 = vpop.f32.mrf.mxu0
      %3818 = vmatprep.mubr.bf16.mxu0 0
      %3819 = vmatmul.mubr.bf16.gmra.mxu0 %v3691
      %v3820 = vpop.f32.mrf.mxu0
      %v3821 = vadd.f32 0.0, %v3820
      %v3822 = vpop.f32.mrf.mxu0
      %v3823 = vpop.f32.mrf.mxu0
      %v3824 = vadd.f32 0.0, %v3823
      %v3825 = vpop.f32.mrf.mxu0
      %3826 = vdwg.mxu0
      %v3827 = vadd.f32 %v3565, %v3781
      %v3828 = vadd.f32 %v3566, %v3784
      %v3829 = vadd.f32 %v3567, %v3789
      %v3830 = vadd.f32 %v3568, %v3792
      %v3831 = vadd.f32 %v3569, %v3797
      %v3832 = vadd.f32 %v3570, %v3800
      %v3833 = vadd.f32 %v3571, %v3805
      %v3834 = vadd.f32 %v3572, %v3808
      %v3835 = vadd.f32 %v3573, %v3813
      %v3836 = vadd.f32 %v3574, %v3816
      %v3837 = vadd.f32 %v3575, %v3821
      %v3838 = vadd.f32 %v3576, %v3824
      %v3839 = vld [vmem:[#allocation2 + $0x4] sm:$0xe]
      %s3840 = scalar_lea.vmem %s2, 512
      %v3841 = vld [vmem:[%s3840] sm:$0xf]
      %v3842 = vld [vmem:[%s3840 + $0x4] sm:$0xf]
      %v3843 = vld [vmem:[%s3840 + $0x8] sm:$0xf]
      %v3844 = vld [vmem:[%s3840 + $0xc] sm:$0xf]
      %v3845 = vld [vmem:[%s3840 + $0x10] sm:$0xf]
      %v3846 = vld [vmem:[%s3840 + $0x14] sm:$0xf]
      %v3847 = vld [vmem:[%s3840 + $0x18] sm:$0xf]
      %v3848 = vld [vmem:[%s3840 + $0x1c] sm:$0xf]
      %v3849 = vld [vmem:[%s3840 + $0x20] sm:$0xf]
      %v3850 = vld [vmem:[%s3840 + $0x24] sm:$0xf]
      %v3851 = vld [vmem:[%s3840 + $0x28] sm:$0xf]
      %v3852 = vld [vmem:[%s3840 + $0x2c] sm:$0xf]
      %v3853 = vld [vmem:[%s3840 + $0x30] sm:$0xf]
      %v3854 = vld [vmem:[%s3840 + $0x34] sm:$0xf]
      %v3855 = vld [vmem:[%s3840 + $0x38] sm:$0xf]
      %v3856 = vld [vmem:[%s3840 + $0x3c] sm:$0xf]
      %v3858 = vunpack.c.l.b16 %v3839
      %v3859 = vpack.c.b16 %v3359, %v3858
      %vm3860 = vcmask 1046528
      %v3861 = vrot.slane %v3859, 1
      %v3862 = vrot.slane %v3372, 1
      %v3863 = vsel %vm3860, %v3861, %v3862
      %v3864 = vrot.slane %v3373, 1
      %v3865 = vsel %vm3860, %v3862, %v3864
      %v3866 = vrot.slane %v3374, 1
      %v3867 = vsel %vm3860, %v3864, %v3866
      %v3868 = vrot.slane %v3375, 1
      %v3869 = vsel %vm3860, %v3866, %v3868
      %v3870 = vrot.slane %v3376, 1
      %v3871 = vsel %vm3860, %v3868, %v3870
      %v3872 = vrot.slane %v3377, 1
      %v3873 = vsel %vm3860, %v3870, %v3872
      %v3896 = vunpack.c.l.b16 %v3841
      %v3897 = vunpack.c.l.b16 %v3842
      %v3898 = vunpack.c.l.b16 %v3843
      %v3899 = vunpack.c.l.b16 %v3844
      %v3900 = vunpack.c.l.b16 %v3845
      %v3901 = vunpack.c.l.b16 %v3846
      %v3902 = vunpack.c.l.b16 %v3847
      %v3903 = vunpack.c.l.b16 %v3848
      %v3904 = vunpack.c.l.b16 %v3849
      %v3905 = vunpack.c.l.b16 %v3850
      %v3906 = vunpack.c.l.b16 %v3851
      %v3907 = vunpack.c.l.b16 %v3852
      %v3908 = vunpack.c.l.b16 %v3853
      %v3909 = vunpack.c.l.b16 %v3854
      %v3910 = vunpack.c.l.b16 %v3855
      %v3911 = vunpack.c.l.b16 %v3856
      %v3912 = vpack.c.b16 %v3897, %v3896
      %v3913 = vpack.c.b16 %v3899, %v3898
      %v3914 = vpack.c.b16 %v3901, %v3900
      %v3915 = vpack.c.b16 %v3903, %v3902
      %v3916 = vpack.c.b16 %v3905, %v3904
      %v3917 = vpack.c.b16 %v3907, %v3906
      %v3918 = vpack.c.b16 %v3909, %v3908
      %v3919 = vpack.c.b16 %v3911, %v3910
      %3928 = vmatprep.subr.bf16.mxu0 0
      %3929 = vmatpush1.bf16.msra.mxu0 %v3919
      %3930 = vmatprep.subr.bf16.mxu0 0
      %3931 = vmatpush1.bf16.msra.mxu0 %v3918
      %3932 = vmatprep.subr.bf16.mxu0 0
      %3933 = vmatpush1.bf16.msra.mxu0 %v3917
      %3934 = vmatprep.subr.bf16.mxu0 0
      %3935 = vmatpush1.bf16.msra.mxu0 %v3916
      %3936 = vmatprep.subr.bf16.mxu0 0
      %3937 = vmatpush1.bf16.msra.mxu0 %v3915
      %3938 = vmatprep.subr.bf16.mxu0 0
      %3939 = vmatpush1.bf16.msra.mxu0 %v3914
      %3940 = vmatprep.subr.bf16.mxu0 0
      %3941 = vmatpush1.bf16.msra.mxu0 %v3913
      %3942 = vmatprep.subr.bf16.mxu0 0
      %3943 = vmatpush1.bf16.msra.mxu0 %v3912
      %3944 = vmatprep.subr.bf16.mxu0 0
      %3945 = vmatpush2.bf16.msra.mxu0 0
      %3946 = vmatprep.subr.bf16.mxu0 0
      %3947 = vmatpush2.bf16.msra.mxu0 0
      %3948 = vmatprep.subr.bf16.mxu0 0
      %3949 = vmatpush2.bf16.msra.mxu0 0
      %3950 = vmatprep.subr.bf16.mxu0 0
      %3951 = vmatpush2.bf16.msra.mxu0 0
      %3952 = vmatprep.subr.bf16.mxu0 0
      %3953 = vmatpush2.bf16.msra.mxu0 0
      %3954 = vmatprep.subr.bf16.mxu0 0
      %3955 = vmatpush2.bf16.msra.mxu0 0
      %3956 = vmatprep.subr.bf16.mxu0 0
      %3957 = vmatpush2.bf16.msra.mxu0 0
      %3958 = vmatprep.subr.bf16.mxu0 0
      %3959 = vmatpush2.bf16.msra.mxu0 0
      %3960 = vmatprep.mubr.bf16.mxu0 0
      %3961 = vmatmul.mubr.bf16.gmra.mxu0 %v3863
      %v3962 = vpop.f32.mrf.mxu0
      %v3963 = vadd.f32 0.0, %v3962
      %v3964 = vpop.f32.mrf.mxu0
      %v3965 = vpop.f32.mrf.mxu0
      %v3966 = vadd.f32 0.0, %v3965
      %v3967 = vpop.f32.mrf.mxu0
      %3968 = vmatprep.mubr.bf16.mxu0 0
      %3969 = vmatmul.mubr.bf16.gmra.mxu0 %v3865
      %v3970 = vpop.f32.mrf.mxu0
      %v3971 = vadd.f32 0.0, %v3970
      %v3972 = vpop.f32.mrf.mxu0
      %v3973 = vpop.f32.mrf.mxu0
      %v3974 = vadd.f32 0.0, %v3973
      %v3975 = vpop.f32.mrf.mxu0
      %3976 = vmatprep.mubr.bf16.mxu0 0
      %3977 = vmatmul.mubr.bf16.gmra.mxu0 %v3867
      %v3978 = vpop.f32.mrf.mxu0
      %v3979 = vadd.f32 0.0, %v3978
      %v3980 = vpop.f32.mrf.mxu0
      %v3981 = vpop.f32.mrf.mxu0
      %v3982 = vadd.f32 0.0, %v3981
      %v3983 = vpop.f32.mrf.mxu0
      %3984 = vmatprep.mubr.bf16.mxu0 0
      %3985 = vmatmul.mubr.bf16.gmra.mxu0 %v3869
      %v3986 = vpop.f32.mrf.mxu0
      %v3987 = vadd.f32 0.0, %v3986
      %v3988 = vpop.f32.mrf.mxu0
      %v3989 = vpop.f32.mrf.mxu0
      %v3990 = vadd.f32 0.0, %v3989
      %v3991 = vpop.f32.mrf.mxu0
      %3992 = vmatprep.mubr.bf16.mxu0 0
      %3993 = vmatmul.mubr.bf16.gmra.mxu0 %v3871
      %v3994 = vpop.f32.mrf.mxu0
      %v3995 = vadd.f32 0.0, %v3994
      %v3996 = vpop.f32.mrf.mxu0
      %v3997 = vpop.f32.mrf.mxu0
      %v3998 = vadd.f32 0.0, %v3997
      %v3999 = vpop.f32.mrf.mxu0
      %4000 = vmatprep.mubr.bf16.mxu0 0
      %4001 = vmatmul.mubr.bf16.gmra.mxu0 %v3873
      %v4002 = vpop.f32.mrf.mxu0
      %v4003 = vadd.f32 0.0, %v4002
      %v4004 = vpop.f32.mrf.mxu0
      %v4005 = vpop.f32.mrf.mxu0
      %v4006 = vadd.f32 0.0, %v4005
      %v4007 = vpop.f32.mrf.mxu0
      %4008 = vdwg.mxu0
      %v4009 = vadd.f32 %v3827, %v3963
      %v4010 = vadd.f32 %v3828, %v3966
      %v4011 = vadd.f32 %v3829, %v3971
      %v4012 = vadd.f32 %v3830, %v3974
      %v4013 = vadd.f32 %v3831, %v3979
      %v4014 = vadd.f32 %v3832, %v3982
      %v4015 = vadd.f32 %v3833, %v3987
      %v4016 = vadd.f32 %v3834, %v3990
      %v4017 = vadd.f32 %v3835, %v3995
      %v4018 = vadd.f32 %v3836, %v3998
      %v4019 = vadd.f32 %v3837, %v4003
      %v4020 = vadd.f32 %v3838, %v4006
      %v4022 = vlaneseq
      %v4023 = vshrl.u32 %v4022, 7
      %v4024 = vsub.s32 0, %v4023
      %v4025 = vrot.slane %v254, %v4024
      %v4027 = vadd.f32 %v4009, %v4025
      %v4028 = vadd.f32 %v4010, %v4025
      %v4029 = vadd.f32 %v4011, %v4025
      %v4030 = vadd.f32 %v4012, %v4025
      %v4031 = vadd.f32 %v4013, %v4025
      %v4032 = vadd.f32 %v4014, %v4025
      %v4033 = vadd.f32 %v4015, %v4025
      %v4034 = vadd.f32 %v4016, %v4025
      %v4035 = vadd.f32 %v4017, %v4025
      %v4036 = vadd.f32 %v4018, %v4025
      %v4037 = vadd.f32 %v4019, %v4025
      %v4038 = vadd.f32 %v4020, %v4025
      %v4039 = vmax.f32 %v4027, 0.0
      %v4040 = vmax.f32 %v4028, 0.0
      %v4041 = vmax.f32 %v4029, 0.0
      %v4042 = vmax.f32 %v4030, 0.0
      %v4043 = vmax.f32 %v4031, 0.0
      %v4044 = vmax.f32 %v4032, 0.0
      %v4045 = vmax.f32 %v4033, 0.0
      %v4046 = vmax.f32 %v4034, 0.0
      %v4047 = vmax.f32 %v4035, 0.0
      %v4048 = vmax.f32 %v4036, 0.0
      %v4049 = vmax.f32 %v4037, 0.0
      %v4050 = vmax.f32 %v4038, 0.0
      %v4051 = vpack.c.bf16 %v4040, %v4039
      %v4052 = vpack.c.bf16 %v4042, %v4041
      %v4053 = vpack.c.bf16 %v4044, %v4043
      %v4054 = vpack.c.bf16 %v4046, %v4045
      %v4055 = vpack.c.bf16 %v4048, %v4047
      %v4056 = vpack.c.bf16 %v4050, %v4049
      %v4057 = vld [vmem:[%s4] sm:$0xf]
      %v4058 = vld [vmem:[%s4 + $0x4] sm:$0xf]
      %v4059 = vld [vmem:[%s4 + $0x8] sm:$0xf]
      %v4060 = vld [vmem:[%s4 + $0xc] sm:$0xf]
      %v4061 = vld [vmem:[%s4 + $0x10] sm:$0xf]
      %v4062 = vld [vmem:[%s4 + $0x14] sm:$0xf]
      %v4063 = vld [vmem:[%s4 + $0x18] sm:$0xf]
      %v4064 = vld [vmem:[%s4 + $0x1c] sm:$0xf]
      %v4065 = vld [vmem:[%s4 + $0x20] sm:$0xf]
      %v4066 = vld [vmem:[%s4 + $0x24] sm:$0xf]
      %v4067 = vld [vmem:[%s4 + $0x28] sm:$0xf]
      %v4068 = vld [vmem:[%s4 + $0x2c] sm:$0xf]
      %v4069 = vld [vmem:[%s4 + $0x30] sm:$0xf]
      %v4070 = vld [vmem:[%s4 + $0x34] sm:$0xf]
      %v4071 = vld [vmem:[%s4 + $0x38] sm:$0xf]
      %v4072 = vld [vmem:[%s4 + $0x3c] sm:$0xf]
      %v4074 = vlaneseq
      %v4075 = vshrl.u32 %v4074, 7
      %v4076 = vsub.s32 0, %v4075
      %v4077 = vrot.slane %v255, %v4076
      %v4095 = vunpack.c.l.b16 %v4057
      %v4096 = vunpack.c.l.b16 %v4058
      %v4097 = vunpack.c.l.b16 %v4059
      %v4098 = vunpack.c.l.b16 %v4060
      %v4099 = vunpack.c.l.b16 %v4061
      %v4100 = vunpack.c.l.b16 %v4062
      %v4101 = vunpack.c.l.b16 %v4063
      %v4102 = vunpack.c.l.b16 %v4064
      %v4103 = vunpack.c.l.b16 %v4065
      %v4104 = vunpack.c.l.b16 %v4066
      %v4105 = vunpack.c.l.b16 %v4067
      %v4106 = vunpack.c.l.b16 %v4068
      %v4107 = vunpack.c.l.b16 %v4069
      %v4108 = vunpack.c.l.b16 %v4070
      %v4109 = vunpack.c.l.b16 %v4071
      %v4110 = vunpack.c.l.b16 %v4072
      %v4111 = vpack.c.b16 %v4096, %v4095
      %v4112 = vpack.c.b16 %v4098, %v4097
      %v4113 = vpack.c.b16 %v4100, %v4099
      %v4114 = vpack.c.b16 %v4102, %v4101
      %v4115 = vpack.c.b16 %v4104, %v4103
      %v4116 = vpack.c.b16 %v4106, %v4105
      %v4117 = vpack.c.b16 %v4108, %v4107
      %v4118 = vpack.c.b16 %v4110, %v4109
      %4127 = vmatprep.subr.bf16.mxu0 0
      %4128 = vmatpush1.bf16.msra.mxu0 %v4118
      %4129 = vmatprep.subr.bf16.mxu0 0
      %4130 = vmatpush1.bf16.msra.mxu0 %v4117
      %4131 = vmatprep.subr.bf16.mxu0 0
      %4132 = vmatpush1.bf16.msra.mxu0 %v4116
      %4133 = vmatprep.subr.bf16.mxu0 0
      %4134 = vmatpush1.bf16.msra.mxu0 %v4115
      %4135 = vmatprep.subr.bf16.mxu0 0
      %4136 = vmatpush1.bf16.msra.mxu0 %v4114
      %4137 = vmatprep.subr.bf16.mxu0 0
      %4138 = vmatpush1.bf16.msra.mxu0 %v4113
      %4139 = vmatprep.subr.bf16.mxu0 0
      %4140 = vmatpush1.bf16.msra.mxu0 %v4112
      %4141 = vmatprep.subr.bf16.mxu0 0
      %4142 = vmatpush1.bf16.msra.mxu0 %v4111
      %4143 = vmatprep.subr.bf16.mxu0 0
      %4144 = vmatpush2.bf16.msra.mxu0 0
      %4145 = vmatprep.subr.bf16.mxu0 0
      %4146 = vmatpush2.bf16.msra.mxu0 0
      %4147 = vmatprep.subr.bf16.mxu0 0
      %4148 = vmatpush2.bf16.msra.mxu0 0
      %4149 = vmatprep.subr.bf16.mxu0 0
      %4150 = vmatpush2.bf16.msra.mxu0 0
      %4151 = vmatprep.subr.bf16.mxu0 0
      %4152 = vmatpush2.bf16.msra.mxu0 0
      %4153 = vmatprep.subr.bf16.mxu0 0
      %4154 = vmatpush2.bf16.msra.mxu0 0
      %4155 = vmatprep.subr.bf16.mxu0 0
      %4156 = vmatpush2.bf16.msra.mxu0 0
      %4157 = vmatprep.subr.bf16.mxu0 0
      %4158 = vmatpush2.bf16.msra.mxu0 0
      %4159 = vmatprep.mubr.bf16.mxu0 0
      %4160 = vmatmul.mubr.bf16.gmra.mxu0 %v4051
      %v4161 = vpop.f32.mrf.mxu0
      %v4162 = vadd.f32 %v4077, %v4161
      %v4163 = vpop.f32.mrf.mxu0
      %v4164 = vpop.f32.mrf.mxu0
      %v4165 = vadd.f32 %v4077, %v4164
      %v4166 = vpop.f32.mrf.mxu0
      %4167 = vmatprep.mubr.bf16.mxu0 0
      %4168 = vmatmul.mubr.bf16.gmra.mxu0 %v4052
      %v4169 = vpop.f32.mrf.mxu0
      %v4170 = vadd.f32 %v4077, %v4169
      %v4171 = vpop.f32.mrf.mxu0
      %v4172 = vpop.f32.mrf.mxu0
      %v4173 = vadd.f32 %v4077, %v4172
      %v4174 = vpop.f32.mrf.mxu0
      %4175 = vmatprep.mubr.bf16.mxu0 0
      %4176 = vmatmul.mubr.bf16.gmra.mxu0 %v4053
      %v4177 = vpop.f32.mrf.mxu0
      %v4178 = vadd.f32 %v4077, %v4177
      %v4179 = vpop.f32.mrf.mxu0
      %v4180 = vpop.f32.mrf.mxu0
      %v4181 = vadd.f32 %v4077, %v4180
      %v4182 = vpop.f32.mrf.mxu0
      %4183 = vmatprep.mubr.bf16.mxu0 0
      %4184 = vmatmul.mubr.bf16.gmra.mxu0 %v4054
      %v4185 = vpop.f32.mrf.mxu0
      %v4186 = vadd.f32 %v4077, %v4185
      %v4187 = vpop.f32.mrf.mxu0
      %v4188 = vpop.f32.mrf.mxu0
      %v4189 = vadd.f32 %v4077, %v4188
      %v4190 = vpop.f32.mrf.mxu0
      %4191 = vmatprep.mubr.bf16.mxu0 0
      %4192 = vmatmul.mubr.bf16.gmra.mxu0 %v4055
      %v4193 = vpop.f32.mrf.mxu0
      %v4194 = vadd.f32 %v4077, %v4193
      %v4195 = vpop.f32.mrf.mxu0
      %v4196 = vpop.f32.mrf.mxu0
      %v4197 = vadd.f32 %v4077, %v4196
      %v4198 = vpop.f32.mrf.mxu0
      %4199 = vmatprep.mubr.bf16.mxu0 0
      %4200 = vmatmul.mubr.bf16.gmra.mxu0 %v4056
      %v4201 = vpop.f32.mrf.mxu0
      %v4202 = vadd.f32 %v4077, %v4201
      %v4203 = vpop.f32.mrf.mxu0
      %v4204 = vpop.f32.mrf.mxu0
      %v4205 = vadd.f32 %v4077, %v4204
      %v4206 = vpop.f32.mrf.mxu0
      %4207 = vdwg.mxu0
      %v4208 = vmax.f32 %v4162, 0.0
      %v4209 = vmax.f32 %v4165, 0.0
      %v4210 = vmax.f32 %v4170, 0.0
      %v4211 = vmax.f32 %v4173, 0.0
      %v4212 = vmax.f32 %v4178, 0.0
      %v4213 = vmax.f32 %v4181, 0.0
      %v4214 = vmax.f32 %v4186, 0.0
      %v4215 = vmax.f32 %v4189, 0.0
      %v4216 = vmax.f32 %v4194, 0.0
      %v4217 = vmax.f32 %v4197, 0.0
      %v4218 = vmax.f32 %v4202, 0.0
      %v4219 = vmax.f32 %v4205, 0.0
      %4220 = vst [vmem:[%s251] sm:$0xff] %v4208
      %4221 = vst [vmem:[%s251 + $0x8] sm:$0xff] %v4209
      %4222 = vst [vmem:[%s251 + $0x10] sm:$0xff] %v4210
      %4223 = vst [vmem:[%s251 + $0x18] sm:$0xff] %v4211
      %4224 = vst [vmem:[%s251 + $0x20] sm:$0xff] %v4212
      %4225 = vst [vmem:[%s251 + $0x28] sm:$0xff] %v4213
      %4226 = vst [vmem:[%s251 + $0x30] sm:$0xff] %v4214
      %4227 = vst [vmem:[%s251 + $0x38] sm:$0xff] %v4215
      %4228 = vst [vmem:[%s251 + $0x40] sm:$0xff] %v4216
      %4229 = vst [vmem:[%s251 + $0x48] sm:$0xff] %v4217
      %4230 = vst [vmem:[%s251 + $0x50] sm:$0xff] %v4218
      %4231 = vst [vmem:[%s251 + $0x58] sm:$0xff] %v4219
      %p4232 = scmp.lt.s32.totalorder %s17, 1
      %s4233 = scalar_select %p4232, %s17, 1
      %s4234 = smul.addr %s4233, 12
      %s4235 = smul.addr %s4234, 8
      %s4236 = scalar_lea.vmem %s6, %s4235
      // Predicated region
      $region45: #{downsample_bottleneck_forward.1} parent=43 // pred_check
        %p4237 = pneg %p166
      $region46: #{downsample_bottleneck_forward.1} parent=43 // pred_check_branch
        %4239 = sbr.rel (%p4237) target = $region48
      $region47: #{downsample_bottleneck_forward.1} parent=43 // pred_region
        _
      $region48: #{downsample_bottleneck_forward.1} parent=43 // pred_fallthru
        _
    $region44: #{downsample_bottleneck_forward.1} parent=5 // pred_fallthru
      _
    %p4240 = scmp.le.s32.totalorder 2, %s12
    // Predicated region
    $region49: #{downsample_bottleneck_forward.1} parent=5 // pred_check
      %p4241 = pneg %p4240
    $region50: #{downsample_bottleneck_forward.1} parent=5 // pred_check_branch
      %4243 = sbr.rel (%p4241) target = $region52
    $region51: #{downsample_bottleneck_forward.1} parent=5 // pred_region
      %s4244 = ssub.s32 %s12, 2
      // Predicated region
      $region53: #{downsample_bottleneck_forward.1} parent=51 // pred_check
        %p4245 = pneg %p172
      $region54: #{downsample_bottleneck_forward.1} parent=51 // pred_check_branch
        %4247 = sbr.rel (%p4245) target = $region56
      $region55: #{downsample_bottleneck_forward.1} parent=51 // pred_region
        %p4248 = scmp.lt.s32.totalorder %s18, 1
        %s4249 = scalar_select %p4248, %s18, 1
        %s4250 = smul.addr %s4249, 12
        %s4251 = smul.addr %s4250, 8
        %s4252 = scalar_lea.vmem %s6, %s4251
      $region56: #{downsample_bottleneck_forward.1} parent=51 // pred_fallthru
        _
    $region52: #{downsample_bottleneck_forward.1} parent=5 // pred_fallthru
      _
  $region6: #{downsample_bottleneck_forward.1} parent=0 // loop_footer
    %s16 = sadd.s32 1, %s12
  $region7: #{downsample_bottleneck_forward.1} parent=0 // loop_footer_branch
    %11 = sbr.rel target = $region3
  $region8: #{downsample_bottleneck_forward.1} parent=0 // loop_exit
    _

</llo_original>
